<compile_context>
chip_gen: v6e
topology: v6e:2x2x1
jax: 0.10.0
libtpu: 0.0.40
codegen_flags: <defaults>
</compile_context>

<pallas_src>
import functools

import jax
import jax.numpy as jnp
import numpy as np
from jax import lax
from jax.experimental import pallas as pl
from jax.experimental.pallas import tpu as pltpu


def _causal_conv2d_kernel(x_ref, w_ref, b_ref, o_ref, xpad_ref, *,
                          c_in, c_out, kh, kw, sh, sw, dh, dw,
                          pad_h, pad_w, h_in, w_in, h_out, w_out):
    """One batch element per grid step; NCHW layout (H on sublanes, W on lanes).

    x_ref    : VMEM (1, c_in, h_in, w_in)      unpadded input for this batch
    w_ref    : SMEM (c_out*c_in*kh*kw,)        flattened conv weight (f32)
    b_ref    : SMEM (c_out,)                   bias (f32)
    o_ref    : VMEM (1, c_out, h_out, w_out)   compact output block
    xpad_ref : VMEM (c_in, h_pad, w_pad)       scratch: causally padded image
    """
    # ---- Fused causal pad: zero the scratch, copy the image into its interior.
    if pad_h > 0 or pad_w > 0:
        xpad_ref[...] = jnp.zeros_like(xpad_ref)
        xpad_ref[:, pl.ds(pad_h, h_in), pl.ds(pad_w, w_in)] = x_ref[0]
    else:
        xpad_ref[...] = x_ref[0]

    # ---- Accumulators start from the broadcast bias (no final bias add pass).
    accs = [jnp.full((h_out, w_out), b_ref[co], dtype=jnp.float32)
            for co in range(c_out)]

    # ---- Pure-VPU broadcast-FMA over the (small, static) taps and channels.
    # Each patch is extracted once per (ci, tap) and reused for all C_out.
    for ci in range(c_in):
        xc = xpad_ref[ci]                                    # (h_pad, w_pad)
        for i in range(kh):
            for j in range(kw):
                patch = lax.slice(
                    xc,
                    (i * dh, j * dw),
                    (i * dh + (h_out - 1) * sh + 1,
                     j * dw + (w_out - 1) * sw + 1),
                    (sh, sw)).astype(jnp.float32)            # (h_out, w_out)
                base = (ci * kh + i) * kw + j
                for co in range(c_out):
                    wv = w_ref[co * (c_in * kh * kw) + base]  # SMEM scalar
                    accs[co] = accs[co] + wv * patch

    # ---- Compact store (HBM output is exactly (n, c_out, h_out, w_out)).
    for co in range(c_out):
        o_ref[0, co] = accs[co].astype(o_ref.dtype)


def causal_conv2d(x_nchw, weight_oihw, bias=None,
                  stride=(1, 1), dilation=(1, 1)):
    """Forward pass matching the PyTorch CausalConv2d module (groups=1)."""
    n, c_in, h, w = x_nchw.shape
    c_out, c_in_w, kh, kw = weight_oihw.shape
    assert c_in_w == c_in, "groups > 1 not supported"
    sh, sw = stride
    dh, dw = dilation
    if bias is None:
        bias = jnp.zeros((c_out,), dtype=jnp.float32)

    pad_h = (kh - 1) * dh
    pad_w = ((kw - 1) * dw) // 2          # floor — matches the PyTorch module
    h_pad = h + pad_h
    w_pad = w + 2 * pad_w
    h_out = (h_pad - (kh - 1) * dh - 1) // sh + 1
    w_out = (w_pad - (kw - 1) * dw - 1) // sw + 1

    # Flat f32 weights / bias for SMEM (read as scalars inside the kernel).
    n_w = c_out * c_in * kh * kw
    w_flat = weight_oihw.reshape(n_w).astype(jnp.float32)
    b_flat = bias.reshape(c_out).astype(jnp.float32)

    kernel = functools.partial(
        _causal_conv2d_kernel,
        c_in=c_in, c_out=c_out, kh=kh, kw=kw, sh=sh, sw=sw, dh=dh, dw=dw,
        pad_h=pad_h, pad_w=pad_w, h_in=h, w_in=w, h_out=h_out, w_out=w_out)

    # VMEM budget from real (post-layout, (8,128)-padded) block sizes; cap per
    # generation so the same tiling stays valid on v7x's 64 MiB VMEM while
    # allowing more headroom on v5e/v6e's 128 MiB.
    _r = lambda v, m: -(-v // m) * m
    isz = jnp.dtype(x_nchw.dtype).itemsize
    in_blk = c_in * _r(h, 8) * _r(w, 128) * isz
    out_blk = c_out * _r(h_out, 8) * _r(w_out, 128) * isz
    pad_blk = c_in * _r(h_pad, 8) * _r(w_pad, 128) * isz
    est = 2 * (in_blk + out_blk) + pad_blk          # blocks double-buffered
    phys_vmem = 64 * 1024 * 1024
    try:
        phys_vmem = int(getattr(pltpu.get_tpu_info(), "vmem_capacity_bytes",
                                phys_vmem))
    except Exception:
        pass
    vmem_limit = int(min(max(4 * est, 32 * 1024 * 1024), (phys_vmem * 5) // 8))

    # Advisory cost estimate with the TRUE c_out (no padding anywhere).
    flops = 2 * n * h_out * w_out * kh * kw * c_in * c_out
    bytes_accessed = int((x_nchw.size + n_w + c_out
                          + n * c_out * h_out * w_out) * isz)

    out = pl.pallas_call(
        kernel,
        out_shape=jax.ShapeDtypeStruct((n, c_out, h_out, w_out), x_nchw.dtype),
        grid=(n,),
        in_specs=[
            # Unpadded NCHW image for this batch (pad is fused in-kernel).
            pl.BlockSpec((1, c_in, h, w), lambda b: (b, 0, 0, 0)),
            # Weights / bias: resident SMEM scalars (no per-step DMA, no
            # double-buffering).
            pl.BlockSpec(memory_space=pltpu.MemorySpace.SMEM),
            pl.BlockSpec(memory_space=pltpu.MemorySpace.SMEM),
        ],
        out_specs=pl.BlockSpec((1, c_out, h_out, w_out),
                               lambda b: (b, 0, 0, 0)),
        scratch_shapes=[pltpu.VMEM((c_in, h_pad, w_pad), x_nchw.dtype)],
        compiler_params=pltpu.CompilerParams(
            # Batch axis is independent -> v7x dual-TC can shard it; the
            # setting is a no-op on single-TC v5e/v6e.
            dimension_semantics=("parallel",),
            vmem_limit_bytes=vmem_limit),
        cost_estimate=pl.CostEstimate(flops=flops, transcendentals=0,
                                      bytes_accessed=bytes_accessed),
    )(x_nchw, w_flat, b_flat)
    return out


def _reference(x_nchw, weight_oihw, bias, stride, dilation):
    kh, kw = weight_oihw.shape[2], weight_oihw.shape[3]
    dh, dw = dilation
    pad_h = (kh - 1) * dh
    pad_w = ((kw - 1) * dw) // 2
    out = lax.conv_general_dilated(
        x_nchw, weight_oihw,
        window_strides=stride,
        padding=((pad_h, 0), (pad_w, pad_w)),
        rhs_dilation=dilation,
        dimension_numbers=("NCHW", "OIHW", "NCHW"),
    )
    return out + bias.reshape(1, -1, 1, 1)


def _run_case(key, n, c_in, c_out, hw, kernel_size, stride, dilation):
    kx, kw_, kb = jax.random.split(key, 3)
    x = jax.random.normal(kx, (n, c_in, hw, hw), dtype=jnp.float32)
    weight = jax.random.normal(
        kw_, (c_out, c_in, kernel_size[0], kernel_size[1]),
        dtype=jnp.float32) * 0.1
    bias = jax.random.normal(kb, (c_out,), dtype=jnp.float32) * 0.1

    out = causal_conv2d(x, weight, bias, stride=stride, dilation=dilation)
    out = jax.block_until_ready(out)

    ref = _reference(x, weight, bias, stride, dilation)
    np.testing.assert_allclose(np.asarray(out), np.asarray(ref),
                               rtol=1e-4, atol=1e-4)


if __name__ == "__main__":
    key = jax.random.PRNGKey(0)
    k1, k2 = jax.random.split(key, 2)

    # Module default-style config: 4 -> 8 channels, 3x3, stride 1, dilation 1.
    _run_case(k1, n=2, c_in=4, c_out=8, hw=16,
              kernel_size=(3, 3), stride=(1, 1), dilation=(1, 1))

    # Even kernel widths (exercise the floor pad_w / causal-H behavior).
    _run_case(k2, n=2, c_in=4, c_out=8, hw=16,
              kernel_size=(2, 4), stride=(1, 1), dilation=(1, 1))

    print("KERNEL_OK")
</pallas_src>

<mosaic_0001>
module attributes {stable_mosaic.version = 11 : i64} {
  func.func @_causal_conv2d_kernel(%arg0: i32, %arg1: memref<1x4x16x16xf32, #tpu.memory_space<vmem>>, %arg2: memref<288xf32, #tpu.memory_space<smem>>, %arg3: memref<8xf32, #tpu.memory_space<smem>>, %arg4: memref<1x8x16x16xf32, #tpu.memory_space<vmem>>, %arg5: memref<4x18x18xf32, #tpu.memory_space<vmem>>) attributes {dimension_semantics = [#tpu.dimension_semantics<parallel>], iteration_bounds = array<i64: 2>, scalar_prefetch = 0 : i64, scratch_operands = 1 : i64, tpu.core_type = #tpu.core_type<tc>, window_params = [{transform_indices = @transform_0, window_bounds = array<i64: 1, 4, 16, 16>}, {transform_indices = @transform_1, window_bounds = array<i64: 288>}, {transform_indices = @transform_2, window_bounds = array<i64: 8>}, {transform_indices = @transform_3, window_bounds = array<i64: 1, 8, 16, 16>}]} {
    %cst = arith.constant 0.000000e+00 : f32
    %0 = vector.broadcast %cst : f32 to vector<4x18x18xf32>
    %c0 = arith.constant 0 : index
    %c0_0 = arith.constant 0 : index
    %c0_1 = arith.constant 0 : index
    %1 = vector.load %arg5[%c0, %c0_0, %c0_1] : memref<4x18x18xf32, #tpu.memory_space<vmem>>, vector<4x18x18xf32>
    tpu.vector_store %arg5[%c0, %c0_0, %c0_1], %0 {strides = array<i32>} : memref<4x18x18xf32, #tpu.memory_space<vmem>>, vector<4x18x18xf32>,
    %c0_2 = arith.constant 0 : index
    %c0_3 = arith.constant 0 : index
    %c0_4 = arith.constant 0 : index
    %c0_5 = arith.constant 0 : index
    %2 = vector.load %arg1[%c0_2, %c0_3, %c0_4, %c0_5] : memref<1x4x16x16xf32, #tpu.memory_space<vmem>>, vector<1x4x16x16xf32>
    %3 = vector.shape_cast %2 : vector<1x4x16x16xf32> to vector<4x16x16xf32>
    %c0_6 = arith.constant 0 : index
    %c2 = arith.constant 2 : index
    %c1 = arith.constant 1 : index
    %4 = vector.load %arg5[%c0_6, %c2, %c1] : memref<4x18x18xf32, #tpu.memory_space<vmem>>, vector<4x16x16xf32>
    tpu.vector_store %arg5[%c0_6, %c2, %c1], %3 {strides = array<i32>} : memref<4x18x18xf32, #tpu.memory_space<vmem>>, vector<4x16x16xf32>,
    %c0_7 = arith.constant 0 : index
    %5 = memref.load %arg3[%c0_7] : memref<8xf32, #tpu.memory_space<smem>>
    %6 = vector.broadcast %5 : f32 to vector<16x16xf32>
    %c1_8 = arith.constant 1 : index
    %7 = memref.load %arg3[%c1_8] : memref<8xf32, #tpu.memory_space<smem>>
    %8 = vector.broadcast %7 : f32 to vector<16x16xf32>
    %c2_9 = arith.constant 2 : index
    %9 = memref.load %arg3[%c2_9] : memref<8xf32, #tpu.memory_space<smem>>
    %10 = vector.broadcast %9 : f32 to vector<16x16xf32>
    %c3 = arith.constant 3 : index
    %11 = memref.load %arg3[%c3] : memref<8xf32, #tpu.memory_space<smem>>
    %12 = vector.broadcast %11 : f32 to vector<16x16xf32>
    %c4 = arith.constant 4 : index
    %13 = memref.load %arg3[%c4] : memref<8xf32, #tpu.memory_space<smem>>
    %14 = vector.broadcast %13 : f32 to vector<16x16xf32>
    %c5 = arith.constant 5 : index
    %15 = memref.load %arg3[%c5] : memref<8xf32, #tpu.memory_space<smem>>
    %16 = vector.broadcast %15 : f32 to vector<16x16xf32>
    %c6 = arith.constant 6 : index
    %17 = memref.load %arg3[%c6] : memref<8xf32, #tpu.memory_space<smem>>
    %18 = vector.broadcast %17 : f32 to vector<16x16xf32>
    %c7 = arith.constant 7 : index
    %19 = memref.load %arg3[%c7] : memref<8xf32, #tpu.memory_space<smem>>
    %20 = vector.broadcast %19 : f32 to vector<16x16xf32>
    %c0_10 = arith.constant 0 : index
    %c0_11 = arith.constant 0 : index
    %c0_12 = arith.constant 0 : index
    %21 = vector.load %arg5[%c0_10, %c0_11, %c0_12] : memref<4x18x18xf32, #tpu.memory_space<vmem>>, vector<1x18x18xf32>
    %22 = vector.shape_cast %21 : vector<1x18x18xf32> to vector<18x18xf32>
    %23 = vector.extract_strided_slice %22 {offsets = [0, 0], sizes = [16, 16], strides = [1, 1]} : vector<18x18xf32> to vector<16x16xf32>
    %c0_13 = arith.constant 0 : index
    %24 = memref.load %arg2[%c0_13] : memref<288xf32, #tpu.memory_space<smem>>
    %25 = vector.broadcast %24 : f32 to vector<16x16xf32>
    %26 = arith.mulf %25, %23 : vector<16x16xf32>
    %27 = arith.addf %6, %26 : vector<16x16xf32>
    %c36 = arith.constant 36 : index
    %28 = memref.load %arg2[%c36] : memref<288xf32, #tpu.memory_space<smem>>
    %29 = vector.broadcast %28 : f32 to vector<16x16xf32>
    %30 = arith.mulf %29, %23 : vector<16x16xf32>
    %31 = arith.addf %8, %30 : vector<16x16xf32>
    %c72 = arith.constant 72 : index
    %32 = memref.load %arg2[%c72] : memref<288xf32, #tpu.memory_space<smem>>
    %33 = vector.broadcast %32 : f32 to vector<16x16xf32>
    %34 = arith.mulf %33, %23 : vector<16x16xf32>
    %35 = arith.addf %10, %34 : vector<16x16xf32>
    %c108 = arith.constant 108 : index
    %36 = memref.load %arg2[%c108] : memref<288xf32, #tpu.memory_space<smem>>
    %37 = vector.broadcast %36 : f32 to vector<16x16xf32>
    %38 = arith.mulf %37, %23 : vector<16x16xf32>
    %39 = arith.addf %12, %38 : vector<16x16xf32>
    %c144 = arith.constant 144 : index
    %40 = memref.load %arg2[%c144] : memref<288xf32, #tpu.memory_space<smem>>
    %41 = vector.broadcast %40 : f32 to vector<16x16xf32>
    %42 = arith.mulf %41, %23 : vector<16x16xf32>
    %43 = arith.addf %14, %42 : vector<16x16xf32>
    %c180 = arith.constant 180 : index
    %44 = memref.load %arg2[%c180] : memref<288xf32, #tpu.memory_space<smem>>
    %45 = vector.broadcast %44 : f32 to vector<16x16xf32>
    %46 = arith.mulf %45, %23 : vector<16x16xf32>
    %47 = arith.addf %16, %46 : vector<16x16xf32>
    %c216 = arith.constant 216 : index
    %48 = memref.load %arg2[%c216] : memref<288xf32, #tpu.memory_space<smem>>
    %49 = vector.broadcast %48 : f32 to vector<16x16xf32>
    %50 = arith.mulf %49, %23 : vector<16x16xf32>
    %51 = arith.addf %18, %50 : vector<16x16xf32>
    %c252 = arith.constant 252 : index
    %52 = memref.load %arg2[%c252] : memref<288xf32, #tpu.memory_space<smem>>
    %53 = vector.broadcast %52 : f32 to vector<16x16xf32>
    %54 = arith.mulf %53, %23 : vector<16x16xf32>
    %55 = arith.addf %20, %54 : vector<16x16xf32>
    %56 = vector.extract_strided_slice %22 {offsets = [0, 1], sizes = [16, 16], strides = [1, 1]} : vector<18x18xf32> to vector<16x16xf32>
    %c1_14 = arith.constant 1 : index
    %57 = memref.load %arg2[%c1_14] : memref<288xf32, #tpu.memory_space<smem>>
    %58 = vector.broadcast %57 : f32 to vector<16x16xf32>
    %59 = arith.mulf %58, %56 : vector<16x16xf32>
    %60 = arith.addf %27, %59 : vector<16x16xf32>
    %c37 = arith.constant 37 : index
    %61 = memref.load %arg2[%c37] : memref<288xf32, #tpu.memory_space<smem>>
    %62 = vector.broadcast %61 : f32 to vector<16x16xf32>
    %63 = arith.mulf %62, %56 : vector<16x16xf32>
    %64 = arith.addf %31, %63 : vector<16x16xf32>
    %c73 = arith.constant 73 : index
    %65 = memref.load %arg2[%c73] : memref<288xf32, #tpu.memory_space<smem>>
    %66 = vector.broadcast %65 : f32 to vector<16x16xf32>
    %67 = arith.mulf %66, %56 : vector<16x16xf32>
    %68 = arith.addf %35, %67 : vector<16x16xf32>
    %c109 = arith.constant 109 : index
    %69 = memref.load %arg2[%c109] : memref<288xf32, #tpu.memory_space<smem>>
    %70 = vector.broadcast %69 : f32 to vector<16x16xf32>
    %71 = arith.mulf %70, %56 : vector<16x16xf32>
    %72 = arith.addf %39, %71 : vector<16x16xf32>
    %c145 = arith.constant 145 : index
    %73 = memref.load %arg2[%c145] : memref<288xf32, #tpu.memory_space<smem>>
    %74 = vector.broadcast %73 : f32 to vector<16x16xf32>
    %75 = arith.mulf %74, %56 : vector<16x16xf32>
    %76 = arith.addf %43, %75 : vector<16x16xf32>
    %c181 = arith.constant 181 : index
    %77 = memref.load %arg2[%c181] : memref<288xf32, #tpu.memory_space<smem>>
    %78 = vector.broadcast %77 : f32 to vector<16x16xf32>
    %79 = arith.mulf %78, %56 : vector<16x16xf32>
    %80 = arith.addf %47, %79 : vector<16x16xf32>
    %c217 = arith.constant 217 : index
    %81 = memref.load %arg2[%c217] : memref<288xf32, #tpu.memory_space<smem>>
    %82 = vector.broadcast %81 : f32 to vector<16x16xf32>
    %83 = arith.mulf %82, %56 : vector<16x16xf32>
    %84 = arith.addf %51, %83 : vector<16x16xf32>
    %c253 = arith.constant 253 : index
    %85 = memref.load %arg2[%c253] : memref<288xf32, #tpu.memory_space<smem>>
    %86 = vector.broadcast %85 : f32 to vector<16x16xf32>
    %87 = arith.mulf %86, %56 : vector<16x16xf32>
    %88 = arith.addf %55, %87 : vector<16x16xf32>
    %89 = vector.extract_strided_slice %22 {offsets = [0, 2], sizes = [16, 16], strides = [1, 1]} : vector<18x18xf32> to vector<16x16xf32>
    %c2_15 = arith.constant 2 : index
    %90 = memref.load %arg2[%c2_15] : memref<288xf32, #tpu.memory_space<smem>>
    %91 = vector.broadcast %90 : f32 to vector<16x16xf32>
    %92 = arith.mulf %91, %89 : vector<16x16xf32>
    %93 = arith.addf %60, %92 : vector<16x16xf32>
    %c38 = arith.constant 38 : index
    %94 = memref.load %arg2[%c38] : memref<288xf32, #tpu.memory_space<smem>>
    %95 = vector.broadcast %94 : f32 to vector<16x16xf32>
    %96 = arith.mulf %95, %89 : vector<16x16xf32>
    %97 = arith.addf %64, %96 : vector<16x16xf32>
    %c74 = arith.constant 74 : index
    %98 = memref.load %arg2[%c74] : memref<288xf32, #tpu.memory_space<smem>>
    %99 = vector.broadcast %98 : f32 to vector<16x16xf32>
    %100 = arith.mulf %99, %89 : vector<16x16xf32>
    %101 = arith.addf %68, %100 : vector<16x16xf32>
    %c110 = arith.constant 110 : index
    %102 = memref.load %arg2[%c110] : memref<288xf32, #tpu.memory_space<smem>>
    %103 = vector.broadcast %102 : f32 to vector<16x16xf32>
    %104 = arith.mulf %103, %89 : vector<16x16xf32>
    %105 = arith.addf %72, %104 : vector<16x16xf32>
    %c146 = arith.constant 146 : index
    %106 = memref.load %arg2[%c146] : memref<288xf32, #tpu.memory_space<smem>>
    %107 = vector.broadcast %106 : f32 to vector<16x16xf32>
    %108 = arith.mulf %107, %89 : vector<16x16xf32>
    %109 = arith.addf %76, %108 : vector<16x16xf32>
    %c182 = arith.constant 182 : index
    %110 = memref.load %arg2[%c182] : memref<288xf32, #tpu.memory_space<smem>>
    %111 = vector.broadcast %110 : f32 to vector<16x16xf32>
    %112 = arith.mulf %111, %89 : vector<16x16xf32>
    %113 = arith.addf %80, %112 : vector<16x16xf32>
    %c218 = arith.constant 218 : index
    %114 = memref.load %arg2[%c218] : memref<288xf32, #tpu.memory_space<smem>>
    %115 = vector.broadcast %114 : f32 to vector<16x16xf32>
    %116 = arith.mulf %115, %89 : vector<16x16xf32>
    %117 = arith.addf %84, %116 : vector<16x16xf32>
    %c254 = arith.constant 254 : index
    %118 = memref.load %arg2[%c254] : memref<288xf32, #tpu.memory_space<smem>>
    %119 = vector.broadcast %118 : f32 to vector<16x16xf32>
    %120 = arith.mulf %119, %89 : vector<16x16xf32>
    %121 = arith.addf %88, %120 : vector<16x16xf32>
    %122 = vector.extract_strided_slice %22 {offsets = [1, 0], sizes = [16, 16], strides = [1, 1]} : vector<18x18xf32> to vector<16x16xf32>
    %c3_16 = arith.constant 3 : index
    %123 = memref.load %arg2[%c3_16] : memref<288xf32, #tpu.memory_space<smem>>
    %124 = vector.broadcast %123 : f32 to vector<16x16xf32>
    %125 = arith.mulf %124, %122 : vector<16x16xf32>
    %126 = arith.addf %93, %125 : vector<16x16xf32>
    %c39 = arith.constant 39 : index
    %127 = memref.load %arg2[%c39] : memref<288xf32, #tpu.memory_space<smem>>
    %128 = vector.broadcast %127 : f32 to vector<16x16xf32>
    %129 = arith.mulf %128, %122 : vector<16x16xf32>
    %130 = arith.addf %97, %129 : vector<16x16xf32>
    %c75 = arith.constant 75 : index
    %131 = memref.load %arg2[%c75] : memref<288xf32, #tpu.memory_space<smem>>
    %132 = vector.broadcast %131 : f32 to vector<16x16xf32>
    %133 = arith.mulf %132, %122 : vector<16x16xf32>
    %134 = arith.addf %101, %133 : vector<16x16xf32>
    %c111 = arith.constant 111 : index
    %135 = memref.load %arg2[%c111] : memref<288xf32, #tpu.memory_space<smem>>
    %136 = vector.broadcast %135 : f32 to vector<16x16xf32>
    %137 = arith.mulf %136, %122 : vector<16x16xf32>
    %138 = arith.addf %105, %137 : vector<16x16xf32>
    %c147 = arith.constant 147 : index
    %139 = memref.load %arg2[%c147] : memref<288xf32, #tpu.memory_space<smem>>
    %140 = vector.broadcast %139 : f32 to vector<16x16xf32>
    %141 = arith.mulf %140, %122 : vector<16x16xf32>
    %142 = arith.addf %109, %141 : vector<16x16xf32>
    %c183 = arith.constant 183 : index
    %143 = memref.load %arg2[%c183] : memref<288xf32, #tpu.memory_space<smem>>
    %144 = vector.broadcast %143 : f32 to vector<16x16xf32>
    %145 = arith.mulf %144, %122 : vector<16x16xf32>
    %146 = arith.addf %113, %145 : vector<16x16xf32>
    %c219 = arith.constant 219 : index
    %147 = memref.load %arg2[%c219] : memref<288xf32, #tpu.memory_space<smem>>
    %148 = vector.broadcast %147 : f32 to vector<16x16xf32>
    %149 = arith.mulf %148, %122 : vector<16x16xf32>
    %150 = arith.addf %117, %149 : vector<16x16xf32>
    %c255 = arith.constant 255 : index
    %151 = memref.load %arg2[%c255] : memref<288xf32, #tpu.memory_space<smem>>
    %152 = vector.broadcast %151 : f32 to vector<16x16xf32>
    %153 = arith.mulf %152, %122 : vector<16x16xf32>
    %154 = arith.addf %121, %153 : vector<16x16xf32>
    %155 = vector.extract_strided_slice %22 {offsets = [1, 1], sizes = [16, 16], strides = [1, 1]} : vector<18x18xf32> to vector<16x16xf32>
    %c4_17 = arith.constant 4 : index
    %156 = memref.load %arg2[%c4_17] : memref<288xf32, #tpu.memory_space<smem>>
    %157 = vector.broadcast %156 : f32 to vector<16x16xf32>
    %158 = arith.mulf %157, %155 : vector<16x16xf32>
    %159 = arith.addf %126, %158 : vector<16x16xf32>
    %c40 = arith.constant 40 : index
    %160 = memref.load %arg2[%c40] : memref<288xf32, #tpu.memory_space<smem>>
    %161 = vector.broadcast %160 : f32 to vector<16x16xf32>
    %162 = arith.mulf %161, %155 : vector<16x16xf32>
    %163 = arith.addf %130, %162 : vector<16x16xf32>
    %c76 = arith.constant 76 : index
    %164 = memref.load %arg2[%c76] : memref<288xf32, #tpu.memory_space<smem>>
    %165 = vector.broadcast %164 : f32 to vector<16x16xf32>
    %166 = arith.mulf %165, %155 : vector<16x16xf32>
    %167 = arith.addf %134, %166 : vector<16x16xf32>
    %c112 = arith.constant 112 : index
    %168 = memref.load %arg2[%c112] : memref<288xf32, #tpu.memory_space<smem>>
    %169 = vector.broadcast %168 : f32 to vector<16x16xf32>
    %170 = arith.mulf %169, %155 : vector<16x16xf32>
    %171 = arith.addf %138, %170 : vector<16x16xf32>
    %c148 = arith.constant 148 : index
    %172 = memref.load %arg2[%c148] : memref<288xf32, #tpu.memory_space<smem>>
    %173 = vector.broadcast %172 : f32 to vector<16x16xf32>
    %174 = arith.mulf %173, %155 : vector<16x16xf32>
    %175 = arith.addf %142, %174 : vector<16x16xf32>
    %c184 = arith.constant 184 : index
    %176 = memref.load %arg2[%c184] : memref<288xf32, #tpu.memory_space<smem>>
    %177 = vector.broadcast %176 : f32 to vector<16x16xf32>
    %178 = arith.mulf %177, %155 : vector<16x16xf32>
    %179 = arith.addf %146, %178 : vector<16x16xf32>
    %c220 = arith.constant 220 : index
    %180 = memref.load %arg2[%c220] : memref<288xf32, #tpu.memory_space<smem>>
    %181 = vector.broadcast %180 : f32 to vector<16x16xf32>
    %182 = arith.mulf %181, %155 : vector<16x16xf32>
    %183 = arith.addf %150, %182 : vector<16x16xf32>
    %c256 = arith.constant 256 : index
    %184 = memref.load %arg2[%c256] : memref<288xf32, #tpu.memory_space<smem>>
    %185 = vector.broadcast %184 : f32 to vector<16x16xf32>
    %186 = arith.mulf %185, %155 : vector<16x16xf32>
    %187 = arith.addf %154, %186 : vector<16x16xf32>
    %188 = vector.extract_strided_slice %22 {offsets = [1, 2], sizes = [16, 16], strides = [1, 1]} : vector<18x18xf32> to vector<16x16xf32>
    %c5_18 = arith.constant 5 : index
    %189 = memref.load %arg2[%c5_18] : memref<288xf32, #tpu.memory_space<smem>>
    %190 = vector.broadcast %189 : f32 to vector<16x16xf32>
    %191 = arith.mulf %190, %188 : vector<16x16xf32>
    %192 = arith.addf %159, %191 : vector<16x16xf32>
    %c41 = arith.constant 41 : index
    %193 = memref.load %arg2[%c41] : memref<288xf32, #tpu.memory_space<smem>>
    %194 = vector.broadcast %193 : f32 to vector<16x16xf32>
    %195 = arith.mulf %194, %188 : vector<16x16xf32>
    %196 = arith.addf %163, %195 : vector<16x16xf32>
    %c77 = arith.constant 77 : index
    %197 = memref.load %arg2[%c77] : memref<288xf32, #tpu.memory_space<smem>>
    %198 = vector.broadcast %197 : f32 to vector<16x16xf32>
    %199 = arith.mulf %198, %188 : vector<16x16xf32>
    %200 = arith.addf %167, %199 : vector<16x16xf32>
    %c113 = arith.constant 113 : index
    %201 = memref.load %arg2[%c113] : memref<288xf32, #tpu.memory_space<smem>>
    %202 = vector.broadcast %201 : f32 to vector<16x16xf32>
    %203 = arith.mulf %202, %188 : vector<16x16xf32>
    %204 = arith.addf %171, %203 : vector<16x16xf32>
    %c149 = arith.constant 149 : index
    %205 = memref.load %arg2[%c149] : memref<288xf32, #tpu.memory_space<smem>>
    %206 = vector.broadcast %205 : f32 to vector<16x16xf32>
    %207 = arith.mulf %206, %188 : vector<16x16xf32>
    %208 = arith.addf %175, %207 : vector<16x16xf32>
    %c185 = arith.constant 185 : index
    %209 = memref.load %arg2[%c185] : memref<288xf32, #tpu.memory_space<smem>>
    %210 = vector.broadcast %209 : f32 to vector<16x16xf32>
    %211 = arith.mulf %210, %188 : vector<16x16xf32>
    %212 = arith.addf %179, %211 : vector<16x16xf32>
    %c221 = arith.constant 221 : index
    %213 = memref.load %arg2[%c221] : memref<288xf32, #tpu.memory_space<smem>>
    %214 = vector.broadcast %213 : f32 to vector<16x16xf32>
    %215 = arith.mulf %214, %188 : vector<16x16xf32>
    %216 = arith.addf %183, %215 : vector<16x16xf32>
    %c257 = arith.constant 257 : index
    %217 = memref.load %arg2[%c257] : memref<288xf32, #tpu.memory_space<smem>>
    %218 = vector.broadcast %217 : f32 to vector<16x16xf32>
    %219 = arith.mulf %218, %188 : vector<16x16xf32>
    %220 = arith.addf %187, %219 : vector<16x16xf32>
    %221 = vector.extract_strided_slice %22 {offsets = [2, 0], sizes = [16, 16], strides = [1, 1]} : vector<18x18xf32> to vector<16x16xf32>
    %c6_19 = arith.constant 6 : index
    %222 = memref.load %arg2[%c6_19] : memref<288xf32, #tpu.memory_space<smem>>
    %223 = vector.broadcast %222 : f32 to vector<16x16xf32>
    %224 = arith.mulf %223, %221 : vector<16x16xf32>
    %225 = arith.addf %192, %224 : vector<16x16xf32>
    %c42 = arith.constant 42 : index
    %226 = memref.load %arg2[%c42] : memref<288xf32, #tpu.memory_space<smem>>
    %227 = vector.broadcast %226 : f32 to vector<16x16xf32>
    %228 = arith.mulf %227, %221 : vector<16x16xf32>
    %229 = arith.addf %196, %228 : vector<16x16xf32>
    %c78 = arith.constant 78 : index
    %230 = memref.load %arg2[%c78] : memref<288xf32, #tpu.memory_space<smem>>
    %231 = vector.broadcast %230 : f32 to vector<16x16xf32>
    %232 = arith.mulf %231, %221 : vector<16x16xf32>
    %233 = arith.addf %200, %232 : vector<16x16xf32>
    %c114 = arith.constant 114 : index
    %234 = memref.load %arg2[%c114] : memref<288xf32, #tpu.memory_space<smem>>
    %235 = vector.broadcast %234 : f32 to vector<16x16xf32>
    %236 = arith.mulf %235, %221 : vector<16x16xf32>
    %237 = arith.addf %204, %236 : vector<16x16xf32>
    %c150 = arith.constant 150 : index
    %238 = memref.load %arg2[%c150] : memref<288xf32, #tpu.memory_space<smem>>
    %239 = vector.broadcast %238 : f32 to vector<16x16xf32>
    %240 = arith.mulf %239, %221 : vector<16x16xf32>
    %241 = arith.addf %208, %240 : vector<16x16xf32>
    %c186 = arith.constant 186 : index
    %242 = memref.load %arg2[%c186] : memref<288xf32, #tpu.memory_space<smem>>
    %243 = vector.broadcast %242 : f32 to vector<16x16xf32>
    %244 = arith.mulf %243, %221 : vector<16x16xf32>
    %245 = arith.addf %212, %244 : vector<16x16xf32>
    %c222 = arith.constant 222 : index
    %246 = memref.load %arg2[%c222] : memref<288xf32, #tpu.memory_space<smem>>
    %247 = vector.broadcast %246 : f32 to vector<16x16xf32>
    %248 = arith.mulf %247, %221 : vector<16x16xf32>
    %249 = arith.addf %216, %248 : vector<16x16xf32>
    %c258 = arith.constant 258 : index
    %250 = memref.load %arg2[%c258] : memref<288xf32, #tpu.memory_space<smem>>
    %251 = vector.broadcast %250 : f32 to vector<16x16xf32>
    %252 = arith.mulf %251, %221 : vector<16x16xf32>
    %253 = arith.addf %220, %252 : vector<16x16xf32>
    %254 = vector.extract_strided_slice %22 {offsets = [2, 1], sizes = [16, 16], strides = [1, 1]} : vector<18x18xf32> to vector<16x16xf32>
    %c7_20 = arith.constant 7 : index
    %255 = memref.load %arg2[%c7_20] : memref<288xf32, #tpu.memory_space<smem>>
    %256 = vector.broadcast %255 : f32 to vector<16x16xf32>
    %257 = arith.mulf %256, %254 : vector<16x16xf32>
    %258 = arith.addf %225, %257 : vector<16x16xf32>
    %c43 = arith.constant 43 : index
    %259 = memref.load %arg2[%c43] : memref<288xf32, #tpu.memory_space<smem>>
    %260 = vector.broadcast %259 : f32 to vector<16x16xf32>
    %261 = arith.mulf %260, %254 : vector<16x16xf32>
    %262 = arith.addf %229, %261 : vector<16x16xf32>
    %c79 = arith.constant 79 : index
    %263 = memref.load %arg2[%c79] : memref<288xf32, #tpu.memory_space<smem>>
    %264 = vector.broadcast %263 : f32 to vector<16x16xf32>
    %265 = arith.mulf %264, %254 : vector<16x16xf32>
    %266 = arith.addf %233, %265 : vector<16x16xf32>
    %c115 = arith.constant 115 : index
    %267 = memref.load %arg2[%c115] : memref<288xf32, #tpu.memory_space<smem>>
    %268 = vector.broadcast %267 : f32 to vector<16x16xf32>
    %269 = arith.mulf %268, %254 : vector<16x16xf32>
    %270 = arith.addf %237, %269 : vector<16x16xf32>
    %c151 = arith.constant 151 : index
    %271 = memref.load %arg2[%c151] : memref<288xf32, #tpu.memory_space<smem>>
    %272 = vector.broadcast %271 : f32 to vector<16x16xf32>
    %273 = arith.mulf %272, %254 : vector<16x16xf32>
    %274 = arith.addf %241, %273 : vector<16x16xf32>
    %c187 = arith.constant 187 : index
    %275 = memref.load %arg2[%c187] : memref<288xf32, #tpu.memory_space<smem>>
    %276 = vector.broadcast %275 : f32 to vector<16x16xf32>
    %277 = arith.mulf %276, %254 : vector<16x16xf32>
    %278 = arith.addf %245, %277 : vector<16x16xf32>
    %c223 = arith.constant 223 : index
    %279 = memref.load %arg2[%c223] : memref<288xf32, #tpu.memory_space<smem>>
    %280 = vector.broadcast %279 : f32 to vector<16x16xf32>
    %281 = arith.mulf %280, %254 : vector<16x16xf32>
    %282 = arith.addf %249, %281 : vector<16x16xf32>
    %c259 = arith.constant 259 : index
    %283 = memref.load %arg2[%c259] : memref<288xf32, #tpu.memory_space<smem>>
    %284 = vector.broadcast %283 : f32 to vector<16x16xf32>
    %285 = arith.mulf %284, %254 : vector<16x16xf32>
    %286 = arith.addf %253, %285 : vector<16x16xf32>
    %287 = vector.extract_strided_slice %22 {offsets = [2, 2], sizes = [16, 16], strides = [1, 1]} : vector<18x18xf32> to vector<16x16xf32>
    %c8 = arith.constant 8 : index
    %288 = memref.load %arg2[%c8] : memref<288xf32, #tpu.memory_space<smem>>
    %289 = vector.broadcast %288 : f32 to vector<16x16xf32>
    %290 = arith.mulf %289, %287 : vector<16x16xf32>
    %291 = arith.addf %258, %290 : vector<16x16xf32>
    %c44 = arith.constant 44 : index
    %292 = memref.load %arg2[%c44] : memref<288xf32, #tpu.memory_space<smem>>
    %293 = vector.broadcast %292 : f32 to vector<16x16xf32>
    %294 = arith.mulf %293, %287 : vector<16x16xf32>
    %295 = arith.addf %262, %294 : vector<16x16xf32>
    %c80 = arith.constant 80 : index
    %296 = memref.load %arg2[%c80] : memref<288xf32, #tpu.memory_space<smem>>
    %297 = vector.broadcast %296 : f32 to vector<16x16xf32>
    %298 = arith.mulf %297, %287 : vector<16x16xf32>
    %299 = arith.addf %266, %298 : vector<16x16xf32>
    %c116 = arith.constant 116 : index
    %300 = memref.load %arg2[%c116] : memref<288xf32, #tpu.memory_space<smem>>
    %301 = vector.broadcast %300 : f32 to vector<16x16xf32>
    %302 = arith.mulf %301, %287 : vector<16x16xf32>
    %303 = arith.addf %270, %302 : vector<16x16xf32>
    %c152 = arith.constant 152 : index
    %304 = memref.load %arg2[%c152] : memref<288xf32, #tpu.memory_space<smem>>
    %305 = vector.broadcast %304 : f32 to vector<16x16xf32>
    %306 = arith.mulf %305, %287 : vector<16x16xf32>
    %307 = arith.addf %274, %306 : vector<16x16xf32>
    %c188 = arith.constant 188 : index
    %308 = memref.load %arg2[%c188] : memref<288xf32, #tpu.memory_space<smem>>
    %309 = vector.broadcast %308 : f32 to vector<16x16xf32>
    %310 = arith.mulf %309, %287 : vector<16x16xf32>
    %311 = arith.addf %278, %310 : vector<16x16xf32>
    %c224 = arith.constant 224 : index
    %312 = memref.load %arg2[%c224] : memref<288xf32, #tpu.memory_space<smem>>
    %313 = vector.broadcast %312 : f32 to vector<16x16xf32>
    %314 = arith.mulf %313, %287 : vector<16x16xf32>
    %315 = arith.addf %282, %314 : vector<16x16xf32>
    %c260 = arith.constant 260 : index
    %316 = memref.load %arg2[%c260] : memref<288xf32, #tpu.memory_space<smem>>
    %317 = vector.broadcast %316 : f32 to vector<16x16xf32>
    %318 = arith.mulf %317, %287 : vector<16x16xf32>
    %319 = arith.addf %286, %318 : vector<16x16xf32>
    %c1_21 = arith.constant 1 : index
    %c0_22 = arith.constant 0 : index
    %c0_23 = arith.constant 0 : index
    %320 = vector.load %arg5[%c1_21, %c0_22, %c0_23] : memref<4x18x18xf32, #tpu.memory_space<vmem>>, vector<1x18x18xf32>
    %321 = vector.shape_cast %320 : vector<1x18x18xf32> to vector<18x18xf32>
    %322 = vector.extract_strided_slice %321 {offsets = [0, 0], sizes = [16, 16], strides = [1, 1]} : vector<18x18xf32> to vector<16x16xf32>
    %c9 = arith.constant 9 : index
    %323 = memref.load %arg2[%c9] : memref<288xf32, #tpu.memory_space<smem>>
    %324 = vector.broadcast %323 : f32 to vector<16x16xf32>
    %325 = arith.mulf %324, %322 : vector<16x16xf32>
    %326 = arith.addf %291, %325 : vector<16x16xf32>
    %c45 = arith.constant 45 : index
    %327 = memref.load %arg2[%c45] : memref<288xf32, #tpu.memory_space<smem>>
    %328 = vector.broadcast %327 : f32 to vector<16x16xf32>
    %329 = arith.mulf %328, %322 : vector<16x16xf32>
    %330 = arith.addf %295, %329 : vector<16x16xf32>
    %c81 = arith.constant 81 : index
    %331 = memref.load %arg2[%c81] : memref<288xf32, #tpu.memory_space<smem>>
    %332 = vector.broadcast %331 : f32 to vector<16x16xf32>
    %333 = arith.mulf %332, %322 : vector<16x16xf32>
    %334 = arith.addf %299, %333 : vector<16x16xf32>
    %c117 = arith.constant 117 : index
    %335 = memref.load %arg2[%c117] : memref<288xf32, #tpu.memory_space<smem>>
    %336 = vector.broadcast %335 : f32 to vector<16x16xf32>
    %337 = arith.mulf %336, %322 : vector<16x16xf32>
    %338 = arith.addf %303, %337 : vector<16x16xf32>
    %c153 = arith.constant 153 : index
    %339 = memref.load %arg2[%c153] : memref<288xf32, #tpu.memory_space<smem>>
    %340 = vector.broadcast %339 : f32 to vector<16x16xf32>
    %341 = arith.mulf %340, %322 : vector<16x16xf32>
    %342 = arith.addf %307, %341 : vector<16x16xf32>
    %c189 = arith.constant 189 : index
    %343 = memref.load %arg2[%c189] : memref<288xf32, #tpu.memory_space<smem>>
    %344 = vector.broadcast %343 : f32 to vector<16x16xf32>
    %345 = arith.mulf %344, %322 : vector<16x16xf32>
    %346 = arith.addf %311, %345 : vector<16x16xf32>
    %c225 = arith.constant 225 : index
    %347 = memref.load %arg2[%c225] : memref<288xf32, #tpu.memory_space<smem>>
    %348 = vector.broadcast %347 : f32 to vector<16x16xf32>
    %349 = arith.mulf %348, %322 : vector<16x16xf32>
    %350 = arith.addf %315, %349 : vector<16x16xf32>
    %c261 = arith.constant 261 : index
    %351 = memref.load %arg2[%c261] : memref<288xf32, #tpu.memory_space<smem>>
    %352 = vector.broadcast %351 : f32 to vector<16x16xf32>
    %353 = arith.mulf %352, %322 : vector<16x16xf32>
    %354 = arith.addf %319, %353 : vector<16x16xf32>
    %355 = vector.extract_strided_slice %321 {offsets = [0, 1], sizes = [16, 16], strides = [1, 1]} : vector<18x18xf32> to vector<16x16xf32>
    %c10 = arith.constant 10 : index
    %356 = memref.load %arg2[%c10] : memref<288xf32, #tpu.memory_space<smem>>
    %357 = vector.broadcast %356 : f32 to vector<16x16xf32>
    %358 = arith.mulf %357, %355 : vector<16x16xf32>
    %359 = arith.addf %326, %358 : vector<16x16xf32>
    %c46 = arith.constant 46 : index
    %360 = memref.load %arg2[%c46] : memref<288xf32, #tpu.memory_space<smem>>
    %361 = vector.broadcast %360 : f32 to vector<16x16xf32>
    %362 = arith.mulf %361, %355 : vector<16x16xf32>
    %363 = arith.addf %330, %362 : vector<16x16xf32>
    %c82 = arith.constant 82 : index
    %364 = memref.load %arg2[%c82] : memref<288xf32, #tpu.memory_space<smem>>
    %365 = vector.broadcast %364 : f32 to vector<16x16xf32>
    %366 = arith.mulf %365, %355 : vector<16x16xf32>
    %367 = arith.addf %334, %366 : vector<16x16xf32>
    %c118 = arith.constant 118 : index
    %368 = memref.load %arg2[%c118] : memref<288xf32, #tpu.memory_space<smem>>
    %369 = vector.broadcast %368 : f32 to vector<16x16xf32>
    %370 = arith.mulf %369, %355 : vector<16x16xf32>
    %371 = arith.addf %338, %370 : vector<16x16xf32>
    %c154 = arith.constant 154 : index
    %372 = memref.load %arg2[%c154] : memref<288xf32, #tpu.memory_space<smem>>
    %373 = vector.broadcast %372 : f32 to vector<16x16xf32>
    %374 = arith.mulf %373, %355 : vector<16x16xf32>
    %375 = arith.addf %342, %374 : vector<16x16xf32>
    %c190 = arith.constant 190 : index
    %376 = memref.load %arg2[%c190] : memref<288xf32, #tpu.memory_space<smem>>
    %377 = vector.broadcast %376 : f32 to vector<16x16xf32>
    %378 = arith.mulf %377, %355 : vector<16x16xf32>
    %379 = arith.addf %346, %378 : vector<16x16xf32>
    %c226 = arith.constant 226 : index
    %380 = memref.load %arg2[%c226] : memref<288xf32, #tpu.memory_space<smem>>
    %381 = vector.broadcast %380 : f32 to vector<16x16xf32>
    %382 = arith.mulf %381, %355 : vector<16x16xf32>
    %383 = arith.addf %350, %382 : vector<16x16xf32>
    %c262 = arith.constant 262 : index
    %384 = memref.load %arg2[%c262] : memref<288xf32, #tpu.memory_space<smem>>
    %385 = vector.broadcast %384 : f32 to vector<16x16xf32>
    %386 = arith.mulf %385, %355 : vector<16x16xf32>
    %387 = arith.addf %354, %386 : vector<16x16xf32>
    %388 = vector.extract_strided_slice %321 {offsets = [0, 2], sizes = [16, 16], strides = [1, 1]} : vector<18x18xf32> to vector<16x16xf32>
    %c11 = arith.constant 11 : index
    %389 = memref.load %arg2[%c11] : memref<288xf32, #tpu.memory_space<smem>>
    %390 = vector.broadcast %389 : f32 to vector<16x16xf32>
    %391 = arith.mulf %390, %388 : vector<16x16xf32>
    %392 = arith.addf %359, %391 : vector<16x16xf32>
    %c47 = arith.constant 47 : index
    %393 = memref.load %arg2[%c47] : memref<288xf32, #tpu.memory_space<smem>>
    %394 = vector.broadcast %393 : f32 to vector<16x16xf32>
    %395 = arith.mulf %394, %388 : vector<16x16xf32>
    %396 = arith.addf %363, %395 : vector<16x16xf32>
    %c83 = arith.constant 83 : index
    %397 = memref.load %arg2[%c83] : memref<288xf32, #tpu.memory_space<smem>>
    %398 = vector.broadcast %397 : f32 to vector<16x16xf32>
    %399 = arith.mulf %398, %388 : vector<16x16xf32>
    %400 = arith.addf %367, %399 : vector<16x16xf32>
    %c119 = arith.constant 119 : index
    %401 = memref.load %arg2[%c119] : memref<288xf32, #tpu.memory_space<smem>>
    %402 = vector.broadcast %401 : f32 to vector<16x16xf32>
    %403 = arith.mulf %402, %388 : vector<16x16xf32>
    %404 = arith.addf %371, %403 : vector<16x16xf32>
    %c155 = arith.constant 155 : index
    %405 = memref.load %arg2[%c155] : memref<288xf32, #tpu.memory_space<smem>>
    %406 = vector.broadcast %405 : f32 to vector<16x16xf32>
    %407 = arith.mulf %406, %388 : vector<16x16xf32>
    %408 = arith.addf %375, %407 : vector<16x16xf32>
    %c191 = arith.constant 191 : index
    %409 = memref.load %arg2[%c191] : memref<288xf32, #tpu.memory_space<smem>>
    %410 = vector.broadcast %409 : f32 to vector<16x16xf32>
    %411 = arith.mulf %410, %388 : vector<16x16xf32>
    %412 = arith.addf %379, %411 : vector<16x16xf32>
    %c227 = arith.constant 227 : index
    %413 = memref.load %arg2[%c227] : memref<288xf32, #tpu.memory_space<smem>>
    %414 = vector.broadcast %413 : f32 to vector<16x16xf32>
    %415 = arith.mulf %414, %388 : vector<16x16xf32>
    %416 = arith.addf %383, %415 : vector<16x16xf32>
    %c263 = arith.constant 263 : index
    %417 = memref.load %arg2[%c263] : memref<288xf32, #tpu.memory_space<smem>>
    %418 = vector.broadcast %417 : f32 to vector<16x16xf32>
    %419 = arith.mulf %418, %388 : vector<16x16xf32>
    %420 = arith.addf %387, %419 : vector<16x16xf32>
    %421 = vector.extract_strided_slice %321 {offsets = [1, 0], sizes = [16, 16], strides = [1, 1]} : vector<18x18xf32> to vector<16x16xf32>
    %c12 = arith.constant 12 : index
    %422 = memref.load %arg2[%c12] : memref<288xf32, #tpu.memory_space<smem>>
    %423 = vector.broadcast %422 : f32 to vector<16x16xf32>
    %424 = arith.mulf %423, %421 : vector<16x16xf32>
    %425 = arith.addf %392, %424 : vector<16x16xf32>
    %c48 = arith.constant 48 : index
    %426 = memref.load %arg2[%c48] : memref<288xf32, #tpu.memory_space<smem>>
    %427 = vector.broadcast %426 : f32 to vector<16x16xf32>
    %428 = arith.mulf %427, %421 : vector<16x16xf32>
    %429 = arith.addf %396, %428 : vector<16x16xf32>
    %c84 = arith.constant 84 : index
    %430 = memref.load %arg2[%c84] : memref<288xf32, #tpu.memory_space<smem>>
    %431 = vector.broadcast %430 : f32 to vector<16x16xf32>
    %432 = arith.mulf %431, %421 : vector<16x16xf32>
    %433 = arith.addf %400, %432 : vector<16x16xf32>
    %c120 = arith.constant 120 : index
    %434 = memref.load %arg2[%c120] : memref<288xf32, #tpu.memory_space<smem>>
    %435 = vector.broadcast %434 : f32 to vector<16x16xf32>
    %436 = arith.mulf %435, %421 : vector<16x16xf32>
    %437 = arith.addf %404, %436 : vector<16x16xf32>
    %c156 = arith.constant 156 : index
    %438 = memref.load %arg2[%c156] : memref<288xf32, #tpu.memory_space<smem>>
    %439 = vector.broadcast %438 : f32 to vector<16x16xf32>
    %440 = arith.mulf %439, %421 : vector<16x16xf32>
    %441 = arith.addf %408, %440 : vector<16x16xf32>
    %c192 = arith.constant 192 : index
    %442 = memref.load %arg2[%c192] : memref<288xf32, #tpu.memory_space<smem>>
    %443 = vector.broadcast %442 : f32 to vector<16x16xf32>
    %444 = arith.mulf %443, %421 : vector<16x16xf32>
    %445 = arith.addf %412, %444 : vector<16x16xf32>
    %c228 = arith.constant 228 : index
    %446 = memref.load %arg2[%c228] : memref<288xf32, #tpu.memory_space<smem>>
    %447 = vector.broadcast %446 : f32 to vector<16x16xf32>
    %448 = arith.mulf %447, %421 : vector<16x16xf32>
    %449 = arith.addf %416, %448 : vector<16x16xf32>
    %c264 = arith.constant 264 : index
    %450 = memref.load %arg2[%c264] : memref<288xf32, #tpu.memory_space<smem>>
    %451 = vector.broadcast %450 : f32 to vector<16x16xf32>
    %452 = arith.mulf %451, %421 : vector<16x16xf32>
    %453 = arith.addf %420, %452 : vector<16x16xf32>
    %454 = vector.extract_strided_slice %321 {offsets = [1, 1], sizes = [16, 16], strides = [1, 1]} : vector<18x18xf32> to vector<16x16xf32>
    %c13 = arith.constant 13 : index
    %455 = memref.load %arg2[%c13] : memref<288xf32, #tpu.memory_space<smem>>
    %456 = vector.broadcast %455 : f32 to vector<16x16xf32>
    %457 = arith.mulf %456, %454 : vector<16x16xf32>
    %458 = arith.addf %425, %457 : vector<16x16xf32>
    %c49 = arith.constant 49 : index
    %459 = memref.load %arg2[%c49] : memref<288xf32, #tpu.memory_space<smem>>
    %460 = vector.broadcast %459 : f32 to vector<16x16xf32>
    %461 = arith.mulf %460, %454 : vector<16x16xf32>
    %462 = arith.addf %429, %461 : vector<16x16xf32>
    %c85 = arith.constant 85 : index
    %463 = memref.load %arg2[%c85] : memref<288xf32, #tpu.memory_space<smem>>
    %464 = vector.broadcast %463 : f32 to vector<16x16xf32>
    %465 = arith.mulf %464, %454 : vector<16x16xf32>
    %466 = arith.addf %433, %465 : vector<16x16xf32>
    %c121 = arith.constant 121 : index
    %467 = memref.load %arg2[%c121] : memref<288xf32, #tpu.memory_space<smem>>
    %468 = vector.broadcast %467 : f32 to vector<16x16xf32>
    %469 = arith.mulf %468, %454 : vector<16x16xf32>
    %470 = arith.addf %437, %469 : vector<16x16xf32>
    %c157 = arith.constant 157 : index
    %471 = memref.load %arg2[%c157] : memref<288xf32, #tpu.memory_space<smem>>
    %472 = vector.broadcast %471 : f32 to vector<16x16xf32>
    %473 = arith.mulf %472, %454 : vector<16x16xf32>
    %474 = arith.addf %441, %473 : vector<16x16xf32>
    %c193 = arith.constant 193 : index
    %475 = memref.load %arg2[%c193] : memref<288xf32, #tpu.memory_space<smem>>
    %476 = vector.broadcast %475 : f32 to vector<16x16xf32>
    %477 = arith.mulf %476, %454 : vector<16x16xf32>
    %478 = arith.addf %445, %477 : vector<16x16xf32>
    %c229 = arith.constant 229 : index
    %479 = memref.load %arg2[%c229] : memref<288xf32, #tpu.memory_space<smem>>
    %480 = vector.broadcast %479 : f32 to vector<16x16xf32>
    %481 = arith.mulf %480, %454 : vector<16x16xf32>
    %482 = arith.addf %449, %481 : vector<16x16xf32>
    %c265 = arith.constant 265 : index
    %483 = memref.load %arg2[%c265] : memref<288xf32, #tpu.memory_space<smem>>
    %484 = vector.broadcast %483 : f32 to vector<16x16xf32>
    %485 = arith.mulf %484, %454 : vector<16x16xf32>
    %486 = arith.addf %453, %485 : vector<16x16xf32>
    %487 = vector.extract_strided_slice %321 {offsets = [1, 2], sizes = [16, 16], strides = [1, 1]} : vector<18x18xf32> to vector<16x16xf32>
    %c14 = arith.constant 14 : index
    %488 = memref.load %arg2[%c14] : memref<288xf32, #tpu.memory_space<smem>>
    %489 = vector.broadcast %488 : f32 to vector<16x16xf32>
    %490 = arith.mulf %489, %487 : vector<16x16xf32>
    %491 = arith.addf %458, %490 : vector<16x16xf32>
    %c50 = arith.constant 50 : index
    %492 = memref.load %arg2[%c50] : memref<288xf32, #tpu.memory_space<smem>>
    %493 = vector.broadcast %492 : f32 to vector<16x16xf32>
    %494 = arith.mulf %493, %487 : vector<16x16xf32>
    %495 = arith.addf %462, %494 : vector<16x16xf32>
    %c86 = arith.constant 86 : index
    %496 = memref.load %arg2[%c86] : memref<288xf32, #tpu.memory_space<smem>>
    %497 = vector.broadcast %496 : f32 to vector<16x16xf32>
    %498 = arith.mulf %497, %487 : vector<16x16xf32>
    %499 = arith.addf %466, %498 : vector<16x16xf32>
    %c122 = arith.constant 122 : index
    %500 = memref.load %arg2[%c122] : memref<288xf32, #tpu.memory_space<smem>>
    %501 = vector.broadcast %500 : f32 to vector<16x16xf32>
    %502 = arith.mulf %501, %487 : vector<16x16xf32>
    %503 = arith.addf %470, %502 : vector<16x16xf32>
    %c158 = arith.constant 158 : index
    %504 = memref.load %arg2[%c158] : memref<288xf32, #tpu.memory_space<smem>>
    %505 = vector.broadcast %504 : f32 to vector<16x16xf32>
    %506 = arith.mulf %505, %487 : vector<16x16xf32>
    %507 = arith.addf %474, %506 : vector<16x16xf32>
    %c194 = arith.constant 194 : index
    %508 = memref.load %arg2[%c194] : memref<288xf32, #tpu.memory_space<smem>>
    %509 = vector.broadcast %508 : f32 to vector<16x16xf32>
    %510 = arith.mulf %509, %487 : vector<16x16xf32>
    %511 = arith.addf %478, %510 : vector<16x16xf32>
    %c230 = arith.constant 230 : index
    %512 = memref.load %arg2[%c230] : memref<288xf32, #tpu.memory_space<smem>>
    %513 = vector.broadcast %512 : f32 to vector<16x16xf32>
    %514 = arith.mulf %513, %487 : vector<16x16xf32>
    %515 = arith.addf %482, %514 : vector<16x16xf32>
    %c266 = arith.constant 266 : index
    %516 = memref.load %arg2[%c266] : memref<288xf32, #tpu.memory_space<smem>>
    %517 = vector.broadcast %516 : f32 to vector<16x16xf32>
    %518 = arith.mulf %517, %487 : vector<16x16xf32>
    %519 = arith.addf %486, %518 : vector<16x16xf32>
    %520 = vector.extract_strided_slice %321 {offsets = [2, 0], sizes = [16, 16], strides = [1, 1]} : vector<18x18xf32> to vector<16x16xf32>
    %c15 = arith.constant 15 : index
    %521 = memref.load %arg2[%c15] : memref<288xf32, #tpu.memory_space<smem>>
    %522 = vector.broadcast %521 : f32 to vector<16x16xf32>
    %523 = arith.mulf %522, %520 : vector<16x16xf32>
    %524 = arith.addf %491, %523 : vector<16x16xf32>
    %c51 = arith.constant 51 : index
    %525 = memref.load %arg2[%c51] : memref<288xf32, #tpu.memory_space<smem>>
    %526 = vector.broadcast %525 : f32 to vector<16x16xf32>
    %527 = arith.mulf %526, %520 : vector<16x16xf32>
    %528 = arith.addf %495, %527 : vector<16x16xf32>
    %c87 = arith.constant 87 : index
    %529 = memref.load %arg2[%c87] : memref<288xf32, #tpu.memory_space<smem>>
    %530 = vector.broadcast %529 : f32 to vector<16x16xf32>
    %531 = arith.mulf %530, %520 : vector<16x16xf32>
    %532 = arith.addf %499, %531 : vector<16x16xf32>
    %c123 = arith.constant 123 : index
    %533 = memref.load %arg2[%c123] : memref<288xf32, #tpu.memory_space<smem>>
    %534 = vector.broadcast %533 : f32 to vector<16x16xf32>
    %535 = arith.mulf %534, %520 : vector<16x16xf32>
    %536 = arith.addf %503, %535 : vector<16x16xf32>
    %c159 = arith.constant 159 : index
    %537 = memref.load %arg2[%c159] : memref<288xf32, #tpu.memory_space<smem>>
    %538 = vector.broadcast %537 : f32 to vector<16x16xf32>
    %539 = arith.mulf %538, %520 : vector<16x16xf32>
    %540 = arith.addf %507, %539 : vector<16x16xf32>
    %c195 = arith.constant 195 : index
    %541 = memref.load %arg2[%c195] : memref<288xf32, #tpu.memory_space<smem>>
    %542 = vector.broadcast %541 : f32 to vector<16x16xf32>
    %543 = arith.mulf %542, %520 : vector<16x16xf32>
    %544 = arith.addf %511, %543 : vector<16x16xf32>
    %c231 = arith.constant 231 : index
    %545 = memref.load %arg2[%c231] : memref<288xf32, #tpu.memory_space<smem>>
    %546 = vector.broadcast %545 : f32 to vector<16x16xf32>
    %547 = arith.mulf %546, %520 : vector<16x16xf32>
    %548 = arith.addf %515, %547 : vector<16x16xf32>
    %c267 = arith.constant 267 : index
    %549 = memref.load %arg2[%c267] : memref<288xf32, #tpu.memory_space<smem>>
    %550 = vector.broadcast %549 : f32 to vector<16x16xf32>
    %551 = arith.mulf %550, %520 : vector<16x16xf32>
    %552 = arith.addf %519, %551 : vector<16x16xf32>
    %553 = vector.extract_strided_slice %321 {offsets = [2, 1], sizes = [16, 16], strides = [1, 1]} : vector<18x18xf32> to vector<16x16xf32>
    %c16 = arith.constant 16 : index
    %554 = memref.load %arg2[%c16] : memref<288xf32, #tpu.memory_space<smem>>
    %555 = vector.broadcast %554 : f32 to vector<16x16xf32>
    %556 = arith.mulf %555, %553 : vector<16x16xf32>
    %557 = arith.addf %524, %556 : vector<16x16xf32>
    %c52 = arith.constant 52 : index
    %558 = memref.load %arg2[%c52] : memref<288xf32, #tpu.memory_space<smem>>
    %559 = vector.broadcast %558 : f32 to vector<16x16xf32>
    %560 = arith.mulf %559, %553 : vector<16x16xf32>
    %561 = arith.addf %528, %560 : vector<16x16xf32>
    %c88 = arith.constant 88 : index
    %562 = memref.load %arg2[%c88] : memref<288xf32, #tpu.memory_space<smem>>
    %563 = vector.broadcast %562 : f32 to vector<16x16xf32>
    %564 = arith.mulf %563, %553 : vector<16x16xf32>
    %565 = arith.addf %532, %564 : vector<16x16xf32>
    %c124 = arith.constant 124 : index
    %566 = memref.load %arg2[%c124] : memref<288xf32, #tpu.memory_space<smem>>
    %567 = vector.broadcast %566 : f32 to vector<16x16xf32>
    %568 = arith.mulf %567, %553 : vector<16x16xf32>
    %569 = arith.addf %536, %568 : vector<16x16xf32>
    %c160 = arith.constant 160 : index
    %570 = memref.load %arg2[%c160] : memref<288xf32, #tpu.memory_space<smem>>
    %571 = vector.broadcast %570 : f32 to vector<16x16xf32>
    %572 = arith.mulf %571, %553 : vector<16x16xf32>
    %573 = arith.addf %540, %572 : vector<16x16xf32>
    %c196 = arith.constant 196 : index
    %574 = memref.load %arg2[%c196] : memref<288xf32, #tpu.memory_space<smem>>
    %575 = vector.broadcast %574 : f32 to vector<16x16xf32>
    %576 = arith.mulf %575, %553 : vector<16x16xf32>
    %577 = arith.addf %544, %576 : vector<16x16xf32>
    %c232 = arith.constant 232 : index
    %578 = memref.load %arg2[%c232] : memref<288xf32, #tpu.memory_space<smem>>
    %579 = vector.broadcast %578 : f32 to vector<16x16xf32>
    %580 = arith.mulf %579, %553 : vector<16x16xf32>
    %581 = arith.addf %548, %580 : vector<16x16xf32>
    %c268 = arith.constant 268 : index
    %582 = memref.load %arg2[%c268] : memref<288xf32, #tpu.memory_space<smem>>
    %583 = vector.broadcast %582 : f32 to vector<16x16xf32>
    %584 = arith.mulf %583, %553 : vector<16x16xf32>
    %585 = arith.addf %552, %584 : vector<16x16xf32>
    %586 = vector.extract_strided_slice %321 {offsets = [2, 2], sizes = [16, 16], strides = [1, 1]} : vector<18x18xf32> to vector<16x16xf32>
    %c17 = arith.constant 17 : index
    %587 = memref.load %arg2[%c17] : memref<288xf32, #tpu.memory_space<smem>>
    %588 = vector.broadcast %587 : f32 to vector<16x16xf32>
    %589 = arith.mulf %588, %586 : vector<16x16xf32>
    %590 = arith.addf %557, %589 : vector<16x16xf32>
    %c53 = arith.constant 53 : index
    %591 = memref.load %arg2[%c53] : memref<288xf32, #tpu.memory_space<smem>>
    %592 = vector.broadcast %591 : f32 to vector<16x16xf32>
    %593 = arith.mulf %592, %586 : vector<16x16xf32>
    %594 = arith.addf %561, %593 : vector<16x16xf32>
    %c89 = arith.constant 89 : index
    %595 = memref.load %arg2[%c89] : memref<288xf32, #tpu.memory_space<smem>>
    %596 = vector.broadcast %595 : f32 to vector<16x16xf32>
    %597 = arith.mulf %596, %586 : vector<16x16xf32>
    %598 = arith.addf %565, %597 : vector<16x16xf32>
    %c125 = arith.constant 125 : index
    %599 = memref.load %arg2[%c125] : memref<288xf32, #tpu.memory_space<smem>>
    %600 = vector.broadcast %599 : f32 to vector<16x16xf32>
    %601 = arith.mulf %600, %586 : vector<16x16xf32>
    %602 = arith.addf %569, %601 : vector<16x16xf32>
    %c161 = arith.constant 161 : index
    %603 = memref.load %arg2[%c161] : memref<288xf32, #tpu.memory_space<smem>>
    %604 = vector.broadcast %603 : f32 to vector<16x16xf32>
    %605 = arith.mulf %604, %586 : vector<16x16xf32>
    %606 = arith.addf %573, %605 : vector<16x16xf32>
    %c197 = arith.constant 197 : index
    %607 = memref.load %arg2[%c197] : memref<288xf32, #tpu.memory_space<smem>>
    %608 = vector.broadcast %607 : f32 to vector<16x16xf32>
    %609 = arith.mulf %608, %586 : vector<16x16xf32>
    %610 = arith.addf %577, %609 : vector<16x16xf32>
    %c233 = arith.constant 233 : index
    %611 = memref.load %arg2[%c233] : memref<288xf32, #tpu.memory_space<smem>>
    %612 = vector.broadcast %611 : f32 to vector<16x16xf32>
    %613 = arith.mulf %612, %586 : vector<16x16xf32>
    %614 = arith.addf %581, %613 : vector<16x16xf32>
    %c269 = arith.constant 269 : index
    %615 = memref.load %arg2[%c269] : memref<288xf32, #tpu.memory_space<smem>>
    %616 = vector.broadcast %615 : f32 to vector<16x16xf32>
    %617 = arith.mulf %616, %586 : vector<16x16xf32>
    %618 = arith.addf %585, %617 : vector<16x16xf32>
    %c2_24 = arith.constant 2 : index
    %c0_25 = arith.constant 0 : index
    %c0_26 = arith.constant 0 : index
    %619 = vector.load %arg5[%c2_24, %c0_25, %c0_26] : memref<4x18x18xf32, #tpu.memory_space<vmem>>, vector<1x18x18xf32>
    %620 = vector.shape_cast %619 : vector<1x18x18xf32> to vector<18x18xf32>
    %621 = vector.extract_strided_slice %620 {offsets = [0, 0], sizes = [16, 16], strides = [1, 1]} : vector<18x18xf32> to vector<16x16xf32>
    %c18 = arith.constant 18 : index
    %622 = memref.load %arg2[%c18] : memref<288xf32, #tpu.memory_space<smem>>
    %623 = vector.broadcast %622 : f32 to vector<16x16xf32>
    %624 = arith.mulf %623, %621 : vector<16x16xf32>
    %625 = arith.addf %590, %624 : vector<16x16xf32>
    %c54 = arith.constant 54 : index
    %626 = memref.load %arg2[%c54] : memref<288xf32, #tpu.memory_space<smem>>
    %627 = vector.broadcast %626 : f32 to vector<16x16xf32>
    %628 = arith.mulf %627, %621 : vector<16x16xf32>
    %629 = arith.addf %594, %628 : vector<16x16xf32>
    %c90 = arith.constant 90 : index
    %630 = memref.load %arg2[%c90] : memref<288xf32, #tpu.memory_space<smem>>
    %631 = vector.broadcast %630 : f32 to vector<16x16xf32>
    %632 = arith.mulf %631, %621 : vector<16x16xf32>
    %633 = arith.addf %598, %632 : vector<16x16xf32>
    %c126 = arith.constant 126 : index
    %634 = memref.load %arg2[%c126] : memref<288xf32, #tpu.memory_space<smem>>
    %635 = vector.broadcast %634 : f32 to vector<16x16xf32>
    %636 = arith.mulf %635, %621 : vector<16x16xf32>
    %637 = arith.addf %602, %636 : vector<16x16xf32>
    %c162 = arith.constant 162 : index
    %638 = memref.load %arg2[%c162] : memref<288xf32, #tpu.memory_space<smem>>
    %639 = vector.broadcast %638 : f32 to vector<16x16xf32>
    %640 = arith.mulf %639, %621 : vector<16x16xf32>
    %641 = arith.addf %606, %640 : vector<16x16xf32>
    %c198 = arith.constant 198 : index
    %642 = memref.load %arg2[%c198] : memref<288xf32, #tpu.memory_space<smem>>
    %643 = vector.broadcast %642 : f32 to vector<16x16xf32>
    %644 = arith.mulf %643, %621 : vector<16x16xf32>
    %645 = arith.addf %610, %644 : vector<16x16xf32>
    %c234 = arith.constant 234 : index
    %646 = memref.load %arg2[%c234] : memref<288xf32, #tpu.memory_space<smem>>
    %647 = vector.broadcast %646 : f32 to vector<16x16xf32>
    %648 = arith.mulf %647, %621 : vector<16x16xf32>
    %649 = arith.addf %614, %648 : vector<16x16xf32>
    %c270 = arith.constant 270 : index
    %650 = memref.load %arg2[%c270] : memref<288xf32, #tpu.memory_space<smem>>
    %651 = vector.broadcast %650 : f32 to vector<16x16xf32>
    %652 = arith.mulf %651, %621 : vector<16x16xf32>
    %653 = arith.addf %618, %652 : vector<16x16xf32>
    %654 = vector.extract_strided_slice %620 {offsets = [0, 1], sizes = [16, 16], strides = [1, 1]} : vector<18x18xf32> to vector<16x16xf32>
    %c19 = arith.constant 19 : index
    %655 = memref.load %arg2[%c19] : memref<288xf32, #tpu.memory_space<smem>>
    %656 = vector.broadcast %655 : f32 to vector<16x16xf32>
    %657 = arith.mulf %656, %654 : vector<16x16xf32>
    %658 = arith.addf %625, %657 : vector<16x16xf32>
    %c55 = arith.constant 55 : index
    %659 = memref.load %arg2[%c55] : memref<288xf32, #tpu.memory_space<smem>>
    %660 = vector.broadcast %659 : f32 to vector<16x16xf32>
    %661 = arith.mulf %660, %654 : vector<16x16xf32>
    %662 = arith.addf %629, %661 : vector<16x16xf32>
    %c91 = arith.constant 91 : index
    %663 = memref.load %arg2[%c91] : memref<288xf32, #tpu.memory_space<smem>>
    %664 = vector.broadcast %663 : f32 to vector<16x16xf32>
    %665 = arith.mulf %664, %654 : vector<16x16xf32>
    %666 = arith.addf %633, %665 : vector<16x16xf32>
    %c127 = arith.constant 127 : index
    %667 = memref.load %arg2[%c127] : memref<288xf32, #tpu.memory_space<smem>>
    %668 = vector.broadcast %667 : f32 to vector<16x16xf32>
    %669 = arith.mulf %668, %654 : vector<16x16xf32>
    %670 = arith.addf %637, %669 : vector<16x16xf32>
    %c163 = arith.constant 163 : index
    %671 = memref.load %arg2[%c163] : memref<288xf32, #tpu.memory_space<smem>>
    %672 = vector.broadcast %671 : f32 to vector<16x16xf32>
    %673 = arith.mulf %672, %654 : vector<16x16xf32>
    %674 = arith.addf %641, %673 : vector<16x16xf32>
    %c199 = arith.constant 199 : index
    %675 = memref.load %arg2[%c199] : memref<288xf32, #tpu.memory_space<smem>>
    %676 = vector.broadcast %675 : f32 to vector<16x16xf32>
    %677 = arith.mulf %676, %654 : vector<16x16xf32>
    %678 = arith.addf %645, %677 : vector<16x16xf32>
    %c235 = arith.constant 235 : index
    %679 = memref.load %arg2[%c235] : memref<288xf32, #tpu.memory_space<smem>>
    %680 = vector.broadcast %679 : f32 to vector<16x16xf32>
    %681 = arith.mulf %680, %654 : vector<16x16xf32>
    %682 = arith.addf %649, %681 : vector<16x16xf32>
    %c271 = arith.constant 271 : index
    %683 = memref.load %arg2[%c271] : memref<288xf32, #tpu.memory_space<smem>>
    %684 = vector.broadcast %683 : f32 to vector<16x16xf32>
    %685 = arith.mulf %684, %654 : vector<16x16xf32>
    %686 = arith.addf %653, %685 : vector<16x16xf32>
    %687 = vector.extract_strided_slice %620 {offsets = [0, 2], sizes = [16, 16], strides = [1, 1]} : vector<18x18xf32> to vector<16x16xf32>
    %c20 = arith.constant 20 : index
    %688 = memref.load %arg2[%c20] : memref<288xf32, #tpu.memory_space<smem>>
    %689 = vector.broadcast %688 : f32 to vector<16x16xf32>
    %690 = arith.mulf %689, %687 : vector<16x16xf32>
    %691 = arith.addf %658, %690 : vector<16x16xf32>
    %c56 = arith.constant 56 : index
    %692 = memref.load %arg2[%c56] : memref<288xf32, #tpu.memory_space<smem>>
    %693 = vector.broadcast %692 : f32 to vector<16x16xf32>
    %694 = arith.mulf %693, %687 : vector<16x16xf32>
    %695 = arith.addf %662, %694 : vector<16x16xf32>
    %c92 = arith.constant 92 : index
    %696 = memref.load %arg2[%c92] : memref<288xf32, #tpu.memory_space<smem>>
    %697 = vector.broadcast %696 : f32 to vector<16x16xf32>
    %698 = arith.mulf %697, %687 : vector<16x16xf32>
    %699 = arith.addf %666, %698 : vector<16x16xf32>
    %c128 = arith.constant 128 : index
    %700 = memref.load %arg2[%c128] : memref<288xf32, #tpu.memory_space<smem>>
    %701 = vector.broadcast %700 : f32 to vector<16x16xf32>
    %702 = arith.mulf %701, %687 : vector<16x16xf32>
    %703 = arith.addf %670, %702 : vector<16x16xf32>
    %c164 = arith.constant 164 : index
    %704 = memref.load %arg2[%c164] : memref<288xf32, #tpu.memory_space<smem>>
    %705 = vector.broadcast %704 : f32 to vector<16x16xf32>
    %706 = arith.mulf %705, %687 : vector<16x16xf32>
    %707 = arith.addf %674, %706 : vector<16x16xf32>
    %c200 = arith.constant 200 : index
    %708 = memref.load %arg2[%c200] : memref<288xf32, #tpu.memory_space<smem>>
    %709 = vector.broadcast %708 : f32 to vector<16x16xf32>
    %710 = arith.mulf %709, %687 : vector<16x16xf32>
    %711 = arith.addf %678, %710 : vector<16x16xf32>
    %c236 = arith.constant 236 : index
    %712 = memref.load %arg2[%c236] : memref<288xf32, #tpu.memory_space<smem>>
    %713 = vector.broadcast %712 : f32 to vector<16x16xf32>
    %714 = arith.mulf %713, %687 : vector<16x16xf32>
    %715 = arith.addf %682, %714 : vector<16x16xf32>
    %c272 = arith.constant 272 : index
    %716 = memref.load %arg2[%c272] : memref<288xf32, #tpu.memory_space<smem>>
    %717 = vector.broadcast %716 : f32 to vector<16x16xf32>
    %718 = arith.mulf %717, %687 : vector<16x16xf32>
    %719 = arith.addf %686, %718 : vector<16x16xf32>
    %720 = vector.extract_strided_slice %620 {offsets = [1, 0], sizes = [16, 16], strides = [1, 1]} : vector<18x18xf32> to vector<16x16xf32>
    %c21 = arith.constant 21 : index
    %721 = memref.load %arg2[%c21] : memref<288xf32, #tpu.memory_space<smem>>
    %722 = vector.broadcast %721 : f32 to vector<16x16xf32>
    %723 = arith.mulf %722, %720 : vector<16x16xf32>
    %724 = arith.addf %691, %723 : vector<16x16xf32>
    %c57 = arith.constant 57 : index
    %725 = memref.load %arg2[%c57] : memref<288xf32, #tpu.memory_space<smem>>
    %726 = vector.broadcast %725 : f32 to vector<16x16xf32>
    %727 = arith.mulf %726, %720 : vector<16x16xf32>
    %728 = arith.addf %695, %727 : vector<16x16xf32>
    %c93 = arith.constant 93 : index
    %729 = memref.load %arg2[%c93] : memref<288xf32, #tpu.memory_space<smem>>
    %730 = vector.broadcast %729 : f32 to vector<16x16xf32>
    %731 = arith.mulf %730, %720 : vector<16x16xf32>
    %732 = arith.addf %699, %731 : vector<16x16xf32>
    %c129 = arith.constant 129 : index
    %733 = memref.load %arg2[%c129] : memref<288xf32, #tpu.memory_space<smem>>
    %734 = vector.broadcast %733 : f32 to vector<16x16xf32>
    %735 = arith.mulf %734, %720 : vector<16x16xf32>
    %736 = arith.addf %703, %735 : vector<16x16xf32>
    %c165 = arith.constant 165 : index
    %737 = memref.load %arg2[%c165] : memref<288xf32, #tpu.memory_space<smem>>
    %738 = vector.broadcast %737 : f32 to vector<16x16xf32>
    %739 = arith.mulf %738, %720 : vector<16x16xf32>
    %740 = arith.addf %707, %739 : vector<16x16xf32>
    %c201 = arith.constant 201 : index
    %741 = memref.load %arg2[%c201] : memref<288xf32, #tpu.memory_space<smem>>
    %742 = vector.broadcast %741 : f32 to vector<16x16xf32>
    %743 = arith.mulf %742, %720 : vector<16x16xf32>
    %744 = arith.addf %711, %743 : vector<16x16xf32>
    %c237 = arith.constant 237 : index
    %745 = memref.load %arg2[%c237] : memref<288xf32, #tpu.memory_space<smem>>
    %746 = vector.broadcast %745 : f32 to vector<16x16xf32>
    %747 = arith.mulf %746, %720 : vector<16x16xf32>
    %748 = arith.addf %715, %747 : vector<16x16xf32>
    %c273 = arith.constant 273 : index
    %749 = memref.load %arg2[%c273] : memref<288xf32, #tpu.memory_space<smem>>
    %750 = vector.broadcast %749 : f32 to vector<16x16xf32>
    %751 = arith.mulf %750, %720 : vector<16x16xf32>
    %752 = arith.addf %719, %751 : vector<16x16xf32>
    %753 = vector.extract_strided_slice %620 {offsets = [1, 1], sizes = [16, 16], strides = [1, 1]} : vector<18x18xf32> to vector<16x16xf32>
    %c22 = arith.constant 22 : index
    %754 = memref.load %arg2[%c22] : memref<288xf32, #tpu.memory_space<smem>>
    %755 = vector.broadcast %754 : f32 to vector<16x16xf32>
    %756 = arith.mulf %755, %753 : vector<16x16xf32>
    %757 = arith.addf %724, %756 : vector<16x16xf32>
    %c58 = arith.constant 58 : index
    %758 = memref.load %arg2[%c58] : memref<288xf32, #tpu.memory_space<smem>>
    %759 = vector.broadcast %758 : f32 to vector<16x16xf32>
    %760 = arith.mulf %759, %753 : vector<16x16xf32>
    %761 = arith.addf %728, %760 : vector<16x16xf32>
    %c94 = arith.constant 94 : index
    %762 = memref.load %arg2[%c94] : memref<288xf32, #tpu.memory_space<smem>>
    %763 = vector.broadcast %762 : f32 to vector<16x16xf32>
    %764 = arith.mulf %763, %753 : vector<16x16xf32>
    %765 = arith.addf %732, %764 : vector<16x16xf32>
    %c130 = arith.constant 130 : index
    %766 = memref.load %arg2[%c130] : memref<288xf32, #tpu.memory_space<smem>>
    %767 = vector.broadcast %766 : f32 to vector<16x16xf32>
    %768 = arith.mulf %767, %753 : vector<16x16xf32>
    %769 = arith.addf %736, %768 : vector<16x16xf32>
    %c166 = arith.constant 166 : index
    %770 = memref.load %arg2[%c166] : memref<288xf32, #tpu.memory_space<smem>>
    %771 = vector.broadcast %770 : f32 to vector<16x16xf32>
    %772 = arith.mulf %771, %753 : vector<16x16xf32>
    %773 = arith.addf %740, %772 : vector<16x16xf32>
    %c202 = arith.constant 202 : index
    %774 = memref.load %arg2[%c202] : memref<288xf32, #tpu.memory_space<smem>>
    %775 = vector.broadcast %774 : f32 to vector<16x16xf32>
    %776 = arith.mulf %775, %753 : vector<16x16xf32>
    %777 = arith.addf %744, %776 : vector<16x16xf32>
    %c238 = arith.constant 238 : index
    %778 = memref.load %arg2[%c238] : memref<288xf32, #tpu.memory_space<smem>>
    %779 = vector.broadcast %778 : f32 to vector<16x16xf32>
    %780 = arith.mulf %779, %753 : vector<16x16xf32>
    %781 = arith.addf %748, %780 : vector<16x16xf32>
    %c274 = arith.constant 274 : index
    %782 = memref.load %arg2[%c274] : memref<288xf32, #tpu.memory_space<smem>>
    %783 = vector.broadcast %782 : f32 to vector<16x16xf32>
    %784 = arith.mulf %783, %753 : vector<16x16xf32>
    %785 = arith.addf %752, %784 : vector<16x16xf32>
    %786 = vector.extract_strided_slice %620 {offsets = [1, 2], sizes = [16, 16], strides = [1, 1]} : vector<18x18xf32> to vector<16x16xf32>
    %c23 = arith.constant 23 : index
    %787 = memref.load %arg2[%c23] : memref<288xf32, #tpu.memory_space<smem>>
    %788 = vector.broadcast %787 : f32 to vector<16x16xf32>
    %789 = arith.mulf %788, %786 : vector<16x16xf32>
    %790 = arith.addf %757, %789 : vector<16x16xf32>
    %c59 = arith.constant 59 : index
    %791 = memref.load %arg2[%c59] : memref<288xf32, #tpu.memory_space<smem>>
    %792 = vector.broadcast %791 : f32 to vector<16x16xf32>
    %793 = arith.mulf %792, %786 : vector<16x16xf32>
    %794 = arith.addf %761, %793 : vector<16x16xf32>
    %c95 = arith.constant 95 : index
    %795 = memref.load %arg2[%c95] : memref<288xf32, #tpu.memory_space<smem>>
    %796 = vector.broadcast %795 : f32 to vector<16x16xf32>
    %797 = arith.mulf %796, %786 : vector<16x16xf32>
    %798 = arith.addf %765, %797 : vector<16x16xf32>
    %c131 = arith.constant 131 : index
    %799 = memref.load %arg2[%c131] : memref<288xf32, #tpu.memory_space<smem>>
    %800 = vector.broadcast %799 : f32 to vector<16x16xf32>
    %801 = arith.mulf %800, %786 : vector<16x16xf32>
    %802 = arith.addf %769, %801 : vector<16x16xf32>
    %c167 = arith.constant 167 : index
    %803 = memref.load %arg2[%c167] : memref<288xf32, #tpu.memory_space<smem>>
    %804 = vector.broadcast %803 : f32 to vector<16x16xf32>
    %805 = arith.mulf %804, %786 : vector<16x16xf32>
    %806 = arith.addf %773, %805 : vector<16x16xf32>
    %c203 = arith.constant 203 : index
    %807 = memref.load %arg2[%c203] : memref<288xf32, #tpu.memory_space<smem>>
    %808 = vector.broadcast %807 : f32 to vector<16x16xf32>
    %809 = arith.mulf %808, %786 : vector<16x16xf32>
    %810 = arith.addf %777, %809 : vector<16x16xf32>
    %c239 = arith.constant 239 : index
    %811 = memref.load %arg2[%c239] : memref<288xf32, #tpu.memory_space<smem>>
    %812 = vector.broadcast %811 : f32 to vector<16x16xf32>
    %813 = arith.mulf %812, %786 : vector<16x16xf32>
    %814 = arith.addf %781, %813 : vector<16x16xf32>
    %c275 = arith.constant 275 : index
    %815 = memref.load %arg2[%c275] : memref<288xf32, #tpu.memory_space<smem>>
    %816 = vector.broadcast %815 : f32 to vector<16x16xf32>
    %817 = arith.mulf %816, %786 : vector<16x16xf32>
    %818 = arith.addf %785, %817 : vector<16x16xf32>
    %819 = vector.extract_strided_slice %620 {offsets = [2, 0], sizes = [16, 16], strides = [1, 1]} : vector<18x18xf32> to vector<16x16xf32>
    %c24 = arith.constant 24 : index
    %820 = memref.load %arg2[%c24] : memref<288xf32, #tpu.memory_space<smem>>
    %821 = vector.broadcast %820 : f32 to vector<16x16xf32>
    %822 = arith.mulf %821, %819 : vector<16x16xf32>
    %823 = arith.addf %790, %822 : vector<16x16xf32>
    %c60 = arith.constant 60 : index
    %824 = memref.load %arg2[%c60] : memref<288xf32, #tpu.memory_space<smem>>
    %825 = vector.broadcast %824 : f32 to vector<16x16xf32>
    %826 = arith.mulf %825, %819 : vector<16x16xf32>
    %827 = arith.addf %794, %826 : vector<16x16xf32>
    %c96 = arith.constant 96 : index
    %828 = memref.load %arg2[%c96] : memref<288xf32, #tpu.memory_space<smem>>
    %829 = vector.broadcast %828 : f32 to vector<16x16xf32>
    %830 = arith.mulf %829, %819 : vector<16x16xf32>
    %831 = arith.addf %798, %830 : vector<16x16xf32>
    %c132 = arith.constant 132 : index
    %832 = memref.load %arg2[%c132] : memref<288xf32, #tpu.memory_space<smem>>
    %833 = vector.broadcast %832 : f32 to vector<16x16xf32>
    %834 = arith.mulf %833, %819 : vector<16x16xf32>
    %835 = arith.addf %802, %834 : vector<16x16xf32>
    %c168 = arith.constant 168 : index
    %836 = memref.load %arg2[%c168] : memref<288xf32, #tpu.memory_space<smem>>
    %837 = vector.broadcast %836 : f32 to vector<16x16xf32>
    %838 = arith.mulf %837, %819 : vector<16x16xf32>
    %839 = arith.addf %806, %838 : vector<16x16xf32>
    %c204 = arith.constant 204 : index
    %840 = memref.load %arg2[%c204] : memref<288xf32, #tpu.memory_space<smem>>
    %841 = vector.broadcast %840 : f32 to vector<16x16xf32>
    %842 = arith.mulf %841, %819 : vector<16x16xf32>
    %843 = arith.addf %810, %842 : vector<16x16xf32>
    %c240 = arith.constant 240 : index
    %844 = memref.load %arg2[%c240] : memref<288xf32, #tpu.memory_space<smem>>
    %845 = vector.broadcast %844 : f32 to vector<16x16xf32>
    %846 = arith.mulf %845, %819 : vector<16x16xf32>
    %847 = arith.addf %814, %846 : vector<16x16xf32>
    %c276 = arith.constant 276 : index
    %848 = memref.load %arg2[%c276] : memref<288xf32, #tpu.memory_space<smem>>
    %849 = vector.broadcast %848 : f32 to vector<16x16xf32>
    %850 = arith.mulf %849, %819 : vector<16x16xf32>
    %851 = arith.addf %818, %850 : vector<16x16xf32>
    %852 = vector.extract_strided_slice %620 {offsets = [2, 1], sizes = [16, 16], strides = [1, 1]} : vector<18x18xf32> to vector<16x16xf32>
    %c25 = arith.constant 25 : index
    %853 = memref.load %arg2[%c25] : memref<288xf32, #tpu.memory_space<smem>>
    %854 = vector.broadcast %853 : f32 to vector<16x16xf32>
    %855 = arith.mulf %854, %852 : vector<16x16xf32>
    %856 = arith.addf %823, %855 : vector<16x16xf32>
    %c61 = arith.constant 61 : index
    %857 = memref.load %arg2[%c61] : memref<288xf32, #tpu.memory_space<smem>>
    %858 = vector.broadcast %857 : f32 to vector<16x16xf32>
    %859 = arith.mulf %858, %852 : vector<16x16xf32>
    %860 = arith.addf %827, %859 : vector<16x16xf32>
    %c97 = arith.constant 97 : index
    %861 = memref.load %arg2[%c97] : memref<288xf32, #tpu.memory_space<smem>>
    %862 = vector.broadcast %861 : f32 to vector<16x16xf32>
    %863 = arith.mulf %862, %852 : vector<16x16xf32>
    %864 = arith.addf %831, %863 : vector<16x16xf32>
    %c133 = arith.constant 133 : index
    %865 = memref.load %arg2[%c133] : memref<288xf32, #tpu.memory_space<smem>>
    %866 = vector.broadcast %865 : f32 to vector<16x16xf32>
    %867 = arith.mulf %866, %852 : vector<16x16xf32>
    %868 = arith.addf %835, %867 : vector<16x16xf32>
    %c169 = arith.constant 169 : index
    %869 = memref.load %arg2[%c169] : memref<288xf32, #tpu.memory_space<smem>>
    %870 = vector.broadcast %869 : f32 to vector<16x16xf32>
    %871 = arith.mulf %870, %852 : vector<16x16xf32>
    %872 = arith.addf %839, %871 : vector<16x16xf32>
    %c205 = arith.constant 205 : index
    %873 = memref.load %arg2[%c205] : memref<288xf32, #tpu.memory_space<smem>>
    %874 = vector.broadcast %873 : f32 to vector<16x16xf32>
    %875 = arith.mulf %874, %852 : vector<16x16xf32>
    %876 = arith.addf %843, %875 : vector<16x16xf32>
    %c241 = arith.constant 241 : index
    %877 = memref.load %arg2[%c241] : memref<288xf32, #tpu.memory_space<smem>>
    %878 = vector.broadcast %877 : f32 to vector<16x16xf32>
    %879 = arith.mulf %878, %852 : vector<16x16xf32>
    %880 = arith.addf %847, %879 : vector<16x16xf32>
    %c277 = arith.constant 277 : index
    %881 = memref.load %arg2[%c277] : memref<288xf32, #tpu.memory_space<smem>>
    %882 = vector.broadcast %881 : f32 to vector<16x16xf32>
    %883 = arith.mulf %882, %852 : vector<16x16xf32>
    %884 = arith.addf %851, %883 : vector<16x16xf32>
    %885 = vector.extract_strided_slice %620 {offsets = [2, 2], sizes = [16, 16], strides = [1, 1]} : vector<18x18xf32> to vector<16x16xf32>
    %c26 = arith.constant 26 : index
    %886 = memref.load %arg2[%c26] : memref<288xf32, #tpu.memory_space<smem>>
    %887 = vector.broadcast %886 : f32 to vector<16x16xf32>
    %888 = arith.mulf %887, %885 : vector<16x16xf32>
    %889 = arith.addf %856, %888 : vector<16x16xf32>
    %c62 = arith.constant 62 : index
    %890 = memref.load %arg2[%c62] : memref<288xf32, #tpu.memory_space<smem>>
    %891 = vector.broadcast %890 : f32 to vector<16x16xf32>
    %892 = arith.mulf %891, %885 : vector<16x16xf32>
    %893 = arith.addf %860, %892 : vector<16x16xf32>
    %c98 = arith.constant 98 : index
    %894 = memref.load %arg2[%c98] : memref<288xf32, #tpu.memory_space<smem>>
    %895 = vector.broadcast %894 : f32 to vector<16x16xf32>
    %896 = arith.mulf %895, %885 : vector<16x16xf32>
    %897 = arith.addf %864, %896 : vector<16x16xf32>
    %c134 = arith.constant 134 : index
    %898 = memref.load %arg2[%c134] : memref<288xf32, #tpu.memory_space<smem>>
    %899 = vector.broadcast %898 : f32 to vector<16x16xf32>
    %900 = arith.mulf %899, %885 : vector<16x16xf32>
    %901 = arith.addf %868, %900 : vector<16x16xf32>
    %c170 = arith.constant 170 : index
    %902 = memref.load %arg2[%c170] : memref<288xf32, #tpu.memory_space<smem>>
    %903 = vector.broadcast %902 : f32 to vector<16x16xf32>
    %904 = arith.mulf %903, %885 : vector<16x16xf32>
    %905 = arith.addf %872, %904 : vector<16x16xf32>
    %c206 = arith.constant 206 : index
    %906 = memref.load %arg2[%c206] : memref<288xf32, #tpu.memory_space<smem>>
    %907 = vector.broadcast %906 : f32 to vector<16x16xf32>
    %908 = arith.mulf %907, %885 : vector<16x16xf32>
    %909 = arith.addf %876, %908 : vector<16x16xf32>
    %c242 = arith.constant 242 : index
    %910 = memref.load %arg2[%c242] : memref<288xf32, #tpu.memory_space<smem>>
    %911 = vector.broadcast %910 : f32 to vector<16x16xf32>
    %912 = arith.mulf %911, %885 : vector<16x16xf32>
    %913 = arith.addf %880, %912 : vector<16x16xf32>
    %c278 = arith.constant 278 : index
    %914 = memref.load %arg2[%c278] : memref<288xf32, #tpu.memory_space<smem>>
    %915 = vector.broadcast %914 : f32 to vector<16x16xf32>
    %916 = arith.mulf %915, %885 : vector<16x16xf32>
    %917 = arith.addf %884, %916 : vector<16x16xf32>
    %c3_27 = arith.constant 3 : index
    %c0_28 = arith.constant 0 : index
    %c0_29 = arith.constant 0 : index
    %918 = vector.load %arg5[%c3_27, %c0_28, %c0_29] : memref<4x18x18xf32, #tpu.memory_space<vmem>>, vector<1x18x18xf32>
    %919 = vector.shape_cast %918 : vector<1x18x18xf32> to vector<18x18xf32>
    %920 = vector.extract_strided_slice %919 {offsets = [0, 0], sizes = [16, 16], strides = [1, 1]} : vector<18x18xf32> to vector<16x16xf32>
    %c27 = arith.constant 27 : index
    %921 = memref.load %arg2[%c27] : memref<288xf32, #tpu.memory_space<smem>>
    %922 = vector.broadcast %921 : f32 to vector<16x16xf32>
    %923 = arith.mulf %922, %920 : vector<16x16xf32>
    %924 = arith.addf %889, %923 : vector<16x16xf32>
    %c63 = arith.constant 63 : index
    %925 = memref.load %arg2[%c63] : memref<288xf32, #tpu.memory_space<smem>>
    %926 = vector.broadcast %925 : f32 to vector<16x16xf32>
    %927 = arith.mulf %926, %920 : vector<16x16xf32>
    %928 = arith.addf %893, %927 : vector<16x16xf32>
    %c99 = arith.constant 99 : index
    %929 = memref.load %arg2[%c99] : memref<288xf32, #tpu.memory_space<smem>>
    %930 = vector.broadcast %929 : f32 to vector<16x16xf32>
    %931 = arith.mulf %930, %920 : vector<16x16xf32>
    %932 = arith.addf %897, %931 : vector<16x16xf32>
    %c135 = arith.constant 135 : index
    %933 = memref.load %arg2[%c135] : memref<288xf32, #tpu.memory_space<smem>>
    %934 = vector.broadcast %933 : f32 to vector<16x16xf32>
    %935 = arith.mulf %934, %920 : vector<16x16xf32>
    %936 = arith.addf %901, %935 : vector<16x16xf32>
    %c171 = arith.constant 171 : index
    %937 = memref.load %arg2[%c171] : memref<288xf32, #tpu.memory_space<smem>>
    %938 = vector.broadcast %937 : f32 to vector<16x16xf32>
    %939 = arith.mulf %938, %920 : vector<16x16xf32>
    %940 = arith.addf %905, %939 : vector<16x16xf32>
    %c207 = arith.constant 207 : index
    %941 = memref.load %arg2[%c207] : memref<288xf32, #tpu.memory_space<smem>>
    %942 = vector.broadcast %941 : f32 to vector<16x16xf32>
    %943 = arith.mulf %942, %920 : vector<16x16xf32>
    %944 = arith.addf %909, %943 : vector<16x16xf32>
    %c243 = arith.constant 243 : index
    %945 = memref.load %arg2[%c243] : memref<288xf32, #tpu.memory_space<smem>>
    %946 = vector.broadcast %945 : f32 to vector<16x16xf32>
    %947 = arith.mulf %946, %920 : vector<16x16xf32>
    %948 = arith.addf %913, %947 : vector<16x16xf32>
    %c279 = arith.constant 279 : index
    %949 = memref.load %arg2[%c279] : memref<288xf32, #tpu.memory_space<smem>>
    %950 = vector.broadcast %949 : f32 to vector<16x16xf32>
    %951 = arith.mulf %950, %920 : vector<16x16xf32>
    %952 = arith.addf %917, %951 : vector<16x16xf32>
    %953 = vector.extract_strided_slice %919 {offsets = [0, 1], sizes = [16, 16], strides = [1, 1]} : vector<18x18xf32> to vector<16x16xf32>
    %c28 = arith.constant 28 : index
    %954 = memref.load %arg2[%c28] : memref<288xf32, #tpu.memory_space<smem>>
    %955 = vector.broadcast %954 : f32 to vector<16x16xf32>
    %956 = arith.mulf %955, %953 : vector<16x16xf32>
    %957 = arith.addf %924, %956 : vector<16x16xf32>
    %c64 = arith.constant 64 : index
    %958 = memref.load %arg2[%c64] : memref<288xf32, #tpu.memory_space<smem>>
    %959 = vector.broadcast %958 : f32 to vector<16x16xf32>
    %960 = arith.mulf %959, %953 : vector<16x16xf32>
    %961 = arith.addf %928, %960 : vector<16x16xf32>
    %c100 = arith.constant 100 : index
    %962 = memref.load %arg2[%c100] : memref<288xf32, #tpu.memory_space<smem>>
    %963 = vector.broadcast %962 : f32 to vector<16x16xf32>
    %964 = arith.mulf %963, %953 : vector<16x16xf32>
    %965 = arith.addf %932, %964 : vector<16x16xf32>
    %c136 = arith.constant 136 : index
    %966 = memref.load %arg2[%c136] : memref<288xf32, #tpu.memory_space<smem>>
    %967 = vector.broadcast %966 : f32 to vector<16x16xf32>
    %968 = arith.mulf %967, %953 : vector<16x16xf32>
    %969 = arith.addf %936, %968 : vector<16x16xf32>
    %c172 = arith.constant 172 : index
    %970 = memref.load %arg2[%c172] : memref<288xf32, #tpu.memory_space<smem>>
    %971 = vector.broadcast %970 : f32 to vector<16x16xf32>
    %972 = arith.mulf %971, %953 : vector<16x16xf32>
    %973 = arith.addf %940, %972 : vector<16x16xf32>
    %c208 = arith.constant 208 : index
    %974 = memref.load %arg2[%c208] : memref<288xf32, #tpu.memory_space<smem>>
    %975 = vector.broadcast %974 : f32 to vector<16x16xf32>
    %976 = arith.mulf %975, %953 : vector<16x16xf32>
    %977 = arith.addf %944, %976 : vector<16x16xf32>
    %c244 = arith.constant 244 : index
    %978 = memref.load %arg2[%c244] : memref<288xf32, #tpu.memory_space<smem>>
    %979 = vector.broadcast %978 : f32 to vector<16x16xf32>
    %980 = arith.mulf %979, %953 : vector<16x16xf32>
    %981 = arith.addf %948, %980 : vector<16x16xf32>
    %c280 = arith.constant 280 : index
    %982 = memref.load %arg2[%c280] : memref<288xf32, #tpu.memory_space<smem>>
    %983 = vector.broadcast %982 : f32 to vector<16x16xf32>
    %984 = arith.mulf %983, %953 : vector<16x16xf32>
    %985 = arith.addf %952, %984 : vector<16x16xf32>
    %986 = vector.extract_strided_slice %919 {offsets = [0, 2], sizes = [16, 16], strides = [1, 1]} : vector<18x18xf32> to vector<16x16xf32>
    %c29 = arith.constant 29 : index
    %987 = memref.load %arg2[%c29] : memref<288xf32, #tpu.memory_space<smem>>
    %988 = vector.broadcast %987 : f32 to vector<16x16xf32>
    %989 = arith.mulf %988, %986 : vector<16x16xf32>
    %990 = arith.addf %957, %989 : vector<16x16xf32>
    %c65 = arith.constant 65 : index
    %991 = memref.load %arg2[%c65] : memref<288xf32, #tpu.memory_space<smem>>
    %992 = vector.broadcast %991 : f32 to vector<16x16xf32>
    %993 = arith.mulf %992, %986 : vector<16x16xf32>
    %994 = arith.addf %961, %993 : vector<16x16xf32>
    %c101 = arith.constant 101 : index
    %995 = memref.load %arg2[%c101] : memref<288xf32, #tpu.memory_space<smem>>
    %996 = vector.broadcast %995 : f32 to vector<16x16xf32>
    %997 = arith.mulf %996, %986 : vector<16x16xf32>
    %998 = arith.addf %965, %997 : vector<16x16xf32>
    %c137 = arith.constant 137 : index
    %999 = memref.load %arg2[%c137] : memref<288xf32, #tpu.memory_space<smem>>
    %1000 = vector.broadcast %999 : f32 to vector<16x16xf32>
    %1001 = arith.mulf %1000, %986 : vector<16x16xf32>
    %1002 = arith.addf %969, %1001 : vector<16x16xf32>
    %c173 = arith.constant 173 : index
    %1003 = memref.load %arg2[%c173] : memref<288xf32, #tpu.memory_space<smem>>
    %1004 = vector.broadcast %1003 : f32 to vector<16x16xf32>
    %1005 = arith.mulf %1004, %986 : vector<16x16xf32>
    %1006 = arith.addf %973, %1005 : vector<16x16xf32>
    %c209 = arith.constant 209 : index
    %1007 = memref.load %arg2[%c209] : memref<288xf32, #tpu.memory_space<smem>>
    %1008 = vector.broadcast %1007 : f32 to vector<16x16xf32>
    %1009 = arith.mulf %1008, %986 : vector<16x16xf32>
    %1010 = arith.addf %977, %1009 : vector<16x16xf32>
    %c245 = arith.constant 245 : index
    %1011 = memref.load %arg2[%c245] : memref<288xf32, #tpu.memory_space<smem>>
    %1012 = vector.broadcast %1011 : f32 to vector<16x16xf32>
    %1013 = arith.mulf %1012, %986 : vector<16x16xf32>
    %1014 = arith.addf %981, %1013 : vector<16x16xf32>
    %c281 = arith.constant 281 : index
    %1015 = memref.load %arg2[%c281] : memref<288xf32, #tpu.memory_space<smem>>
    %1016 = vector.broadcast %1015 : f32 to vector<16x16xf32>
    %1017 = arith.mulf %1016, %986 : vector<16x16xf32>
    %1018 = arith.addf %985, %1017 : vector<16x16xf32>
    %1019 = vector.extract_strided_slice %919 {offsets = [1, 0], sizes = [16, 16], strides = [1, 1]} : vector<18x18xf32> to vector<16x16xf32>
    %c30 = arith.constant 30 : index
    %1020 = memref.load %arg2[%c30] : memref<288xf32, #tpu.memory_space<smem>>
    %1021 = vector.broadcast %1020 : f32 to vector<16x16xf32>
    %1022 = arith.mulf %1021, %1019 : vector<16x16xf32>
    %1023 = arith.addf %990, %1022 : vector<16x16xf32>
    %c66 = arith.constant 66 : index
    %1024 = memref.load %arg2[%c66] : memref<288xf32, #tpu.memory_space<smem>>
    %1025 = vector.broadcast %1024 : f32 to vector<16x16xf32>
    %1026 = arith.mulf %1025, %1019 : vector<16x16xf32>
    %1027 = arith.addf %994, %1026 : vector<16x16xf32>
    %c102 = arith.constant 102 : index
    %1028 = memref.load %arg2[%c102] : memref<288xf32, #tpu.memory_space<smem>>
    %1029 = vector.broadcast %1028 : f32 to vector<16x16xf32>
    %1030 = arith.mulf %1029, %1019 : vector<16x16xf32>
    %1031 = arith.addf %998, %1030 : vector<16x16xf32>
    %c138 = arith.constant 138 : index
    %1032 = memref.load %arg2[%c138] : memref<288xf32, #tpu.memory_space<smem>>
    %1033 = vector.broadcast %1032 : f32 to vector<16x16xf32>
    %1034 = arith.mulf %1033, %1019 : vector<16x16xf32>
    %1035 = arith.addf %1002, %1034 : vector<16x16xf32>
    %c174 = arith.constant 174 : index
    %1036 = memref.load %arg2[%c174] : memref<288xf32, #tpu.memory_space<smem>>
    %1037 = vector.broadcast %1036 : f32 to vector<16x16xf32>
    %1038 = arith.mulf %1037, %1019 : vector<16x16xf32>
    %1039 = arith.addf %1006, %1038 : vector<16x16xf32>
    %c210 = arith.constant 210 : index
    %1040 = memref.load %arg2[%c210] : memref<288xf32, #tpu.memory_space<smem>>
    %1041 = vector.broadcast %1040 : f32 to vector<16x16xf32>
    %1042 = arith.mulf %1041, %1019 : vector<16x16xf32>
    %1043 = arith.addf %1010, %1042 : vector<16x16xf32>
    %c246 = arith.constant 246 : index
    %1044 = memref.load %arg2[%c246] : memref<288xf32, #tpu.memory_space<smem>>
    %1045 = vector.broadcast %1044 : f32 to vector<16x16xf32>
    %1046 = arith.mulf %1045, %1019 : vector<16x16xf32>
    %1047 = arith.addf %1014, %1046 : vector<16x16xf32>
    %c282 = arith.constant 282 : index
    %1048 = memref.load %arg2[%c282] : memref<288xf32, #tpu.memory_space<smem>>
    %1049 = vector.broadcast %1048 : f32 to vector<16x16xf32>
    %1050 = arith.mulf %1049, %1019 : vector<16x16xf32>
    %1051 = arith.addf %1018, %1050 : vector<16x16xf32>
    %1052 = vector.extract_strided_slice %919 {offsets = [1, 1], sizes = [16, 16], strides = [1, 1]} : vector<18x18xf32> to vector<16x16xf32>
    %c31 = arith.constant 31 : index
    %1053 = memref.load %arg2[%c31] : memref<288xf32, #tpu.memory_space<smem>>
    %1054 = vector.broadcast %1053 : f32 to vector<16x16xf32>
    %1055 = arith.mulf %1054, %1052 : vector<16x16xf32>
    %1056 = arith.addf %1023, %1055 : vector<16x16xf32>
    %c67 = arith.constant 67 : index
    %1057 = memref.load %arg2[%c67] : memref<288xf32, #tpu.memory_space<smem>>
    %1058 = vector.broadcast %1057 : f32 to vector<16x16xf32>
    %1059 = arith.mulf %1058, %1052 : vector<16x16xf32>
    %1060 = arith.addf %1027, %1059 : vector<16x16xf32>
    %c103 = arith.constant 103 : index
    %1061 = memref.load %arg2[%c103] : memref<288xf32, #tpu.memory_space<smem>>
    %1062 = vector.broadcast %1061 : f32 to vector<16x16xf32>
    %1063 = arith.mulf %1062, %1052 : vector<16x16xf32>
    %1064 = arith.addf %1031, %1063 : vector<16x16xf32>
    %c139 = arith.constant 139 : index
    %1065 = memref.load %arg2[%c139] : memref<288xf32, #tpu.memory_space<smem>>
    %1066 = vector.broadcast %1065 : f32 to vector<16x16xf32>
    %1067 = arith.mulf %1066, %1052 : vector<16x16xf32>
    %1068 = arith.addf %1035, %1067 : vector<16x16xf32>
    %c175 = arith.constant 175 : index
    %1069 = memref.load %arg2[%c175] : memref<288xf32, #tpu.memory_space<smem>>
    %1070 = vector.broadcast %1069 : f32 to vector<16x16xf32>
    %1071 = arith.mulf %1070, %1052 : vector<16x16xf32>
    %1072 = arith.addf %1039, %1071 : vector<16x16xf32>
    %c211 = arith.constant 211 : index
    %1073 = memref.load %arg2[%c211] : memref<288xf32, #tpu.memory_space<smem>>
    %1074 = vector.broadcast %1073 : f32 to vector<16x16xf32>
    %1075 = arith.mulf %1074, %1052 : vector<16x16xf32>
    %1076 = arith.addf %1043, %1075 : vector<16x16xf32>
    %c247 = arith.constant 247 : index
    %1077 = memref.load %arg2[%c247] : memref<288xf32, #tpu.memory_space<smem>>
    %1078 = vector.broadcast %1077 : f32 to vector<16x16xf32>
    %1079 = arith.mulf %1078, %1052 : vector<16x16xf32>
    %1080 = arith.addf %1047, %1079 : vector<16x16xf32>
    %c283 = arith.constant 283 : index
    %1081 = memref.load %arg2[%c283] : memref<288xf32, #tpu.memory_space<smem>>
    %1082 = vector.broadcast %1081 : f32 to vector<16x16xf32>
    %1083 = arith.mulf %1082, %1052 : vector<16x16xf32>
    %1084 = arith.addf %1051, %1083 : vector<16x16xf32>
    %1085 = vector.extract_strided_slice %919 {offsets = [1, 2], sizes = [16, 16], strides = [1, 1]} : vector<18x18xf32> to vector<16x16xf32>
    %c32 = arith.constant 32 : index
    %1086 = memref.load %arg2[%c32] : memref<288xf32, #tpu.memory_space<smem>>
    %1087 = vector.broadcast %1086 : f32 to vector<16x16xf32>
    %1088 = arith.mulf %1087, %1085 : vector<16x16xf32>
    %1089 = arith.addf %1056, %1088 : vector<16x16xf32>
    %c68 = arith.constant 68 : index
    %1090 = memref.load %arg2[%c68] : memref<288xf32, #tpu.memory_space<smem>>
    %1091 = vector.broadcast %1090 : f32 to vector<16x16xf32>
    %1092 = arith.mulf %1091, %1085 : vector<16x16xf32>
    %1093 = arith.addf %1060, %1092 : vector<16x16xf32>
    %c104 = arith.constant 104 : index
    %1094 = memref.load %arg2[%c104] : memref<288xf32, #tpu.memory_space<smem>>
    %1095 = vector.broadcast %1094 : f32 to vector<16x16xf32>
    %1096 = arith.mulf %1095, %1085 : vector<16x16xf32>
    %1097 = arith.addf %1064, %1096 : vector<16x16xf32>
    %c140 = arith.constant 140 : index
    %1098 = memref.load %arg2[%c140] : memref<288xf32, #tpu.memory_space<smem>>
    %1099 = vector.broadcast %1098 : f32 to vector<16x16xf32>
    %1100 = arith.mulf %1099, %1085 : vector<16x16xf32>
    %1101 = arith.addf %1068, %1100 : vector<16x16xf32>
    %c176 = arith.constant 176 : index
    %1102 = memref.load %arg2[%c176] : memref<288xf32, #tpu.memory_space<smem>>
    %1103 = vector.broadcast %1102 : f32 to vector<16x16xf32>
    %1104 = arith.mulf %1103, %1085 : vector<16x16xf32>
    %1105 = arith.addf %1072, %1104 : vector<16x16xf32>
    %c212 = arith.constant 212 : index
    %1106 = memref.load %arg2[%c212] : memref<288xf32, #tpu.memory_space<smem>>
    %1107 = vector.broadcast %1106 : f32 to vector<16x16xf32>
    %1108 = arith.mulf %1107, %1085 : vector<16x16xf32>
    %1109 = arith.addf %1076, %1108 : vector<16x16xf32>
    %c248 = arith.constant 248 : index
    %1110 = memref.load %arg2[%c248] : memref<288xf32, #tpu.memory_space<smem>>
    %1111 = vector.broadcast %1110 : f32 to vector<16x16xf32>
    %1112 = arith.mulf %1111, %1085 : vector<16x16xf32>
    %1113 = arith.addf %1080, %1112 : vector<16x16xf32>
    %c284 = arith.constant 284 : index
    %1114 = memref.load %arg2[%c284] : memref<288xf32, #tpu.memory_space<smem>>
    %1115 = vector.broadcast %1114 : f32 to vector<16x16xf32>
    %1116 = arith.mulf %1115, %1085 : vector<16x16xf32>
    %1117 = arith.addf %1084, %1116 : vector<16x16xf32>
    %1118 = vector.extract_strided_slice %919 {offsets = [2, 0], sizes = [16, 16], strides = [1, 1]} : vector<18x18xf32> to vector<16x16xf32>
    %c33 = arith.constant 33 : index
    %1119 = memref.load %arg2[%c33] : memref<288xf32, #tpu.memory_space<smem>>
    %1120 = vector.broadcast %1119 : f32 to vector<16x16xf32>
    %1121 = arith.mulf %1120, %1118 : vector<16x16xf32>
    %1122 = arith.addf %1089, %1121 : vector<16x16xf32>
    %c69 = arith.constant 69 : index
    %1123 = memref.load %arg2[%c69] : memref<288xf32, #tpu.memory_space<smem>>
    %1124 = vector.broadcast %1123 : f32 to vector<16x16xf32>
    %1125 = arith.mulf %1124, %1118 : vector<16x16xf32>
    %1126 = arith.addf %1093, %1125 : vector<16x16xf32>
    %c105 = arith.constant 105 : index
    %1127 = memref.load %arg2[%c105] : memref<288xf32, #tpu.memory_space<smem>>
    %1128 = vector.broadcast %1127 : f32 to vector<16x16xf32>
    %1129 = arith.mulf %1128, %1118 : vector<16x16xf32>
    %1130 = arith.addf %1097, %1129 : vector<16x16xf32>
    %c141 = arith.constant 141 : index
    %1131 = memref.load %arg2[%c141] : memref<288xf32, #tpu.memory_space<smem>>
    %1132 = vector.broadcast %1131 : f32 to vector<16x16xf32>
    %1133 = arith.mulf %1132, %1118 : vector<16x16xf32>
    %1134 = arith.addf %1101, %1133 : vector<16x16xf32>
    %c177 = arith.constant 177 : index
    %1135 = memref.load %arg2[%c177] : memref<288xf32, #tpu.memory_space<smem>>
    %1136 = vector.broadcast %1135 : f32 to vector<16x16xf32>
    %1137 = arith.mulf %1136, %1118 : vector<16x16xf32>
    %1138 = arith.addf %1105, %1137 : vector<16x16xf32>
    %c213 = arith.constant 213 : index
    %1139 = memref.load %arg2[%c213] : memref<288xf32, #tpu.memory_space<smem>>
    %1140 = vector.broadcast %1139 : f32 to vector<16x16xf32>
    %1141 = arith.mulf %1140, %1118 : vector<16x16xf32>
    %1142 = arith.addf %1109, %1141 : vector<16x16xf32>
    %c249 = arith.constant 249 : index
    %1143 = memref.load %arg2[%c249] : memref<288xf32, #tpu.memory_space<smem>>
    %1144 = vector.broadcast %1143 : f32 to vector<16x16xf32>
    %1145 = arith.mulf %1144, %1118 : vector<16x16xf32>
    %1146 = arith.addf %1113, %1145 : vector<16x16xf32>
    %c285 = arith.constant 285 : index
    %1147 = memref.load %arg2[%c285] : memref<288xf32, #tpu.memory_space<smem>>
    %1148 = vector.broadcast %1147 : f32 to vector<16x16xf32>
    %1149 = arith.mulf %1148, %1118 : vector<16x16xf32>
    %1150 = arith.addf %1117, %1149 : vector<16x16xf32>
    %1151 = vector.extract_strided_slice %919 {offsets = [2, 1], sizes = [16, 16], strides = [1, 1]} : vector<18x18xf32> to vector<16x16xf32>
    %c34 = arith.constant 34 : index
    %1152 = memref.load %arg2[%c34] : memref<288xf32, #tpu.memory_space<smem>>
    %1153 = vector.broadcast %1152 : f32 to vector<16x16xf32>
    %1154 = arith.mulf %1153, %1151 : vector<16x16xf32>
    %1155 = arith.addf %1122, %1154 : vector<16x16xf32>
    %c70 = arith.constant 70 : index
    %1156 = memref.load %arg2[%c70] : memref<288xf32, #tpu.memory_space<smem>>
    %1157 = vector.broadcast %1156 : f32 to vector<16x16xf32>
    %1158 = arith.mulf %1157, %1151 : vector<16x16xf32>
    %1159 = arith.addf %1126, %1158 : vector<16x16xf32>
    %c106 = arith.constant 106 : index
    %1160 = memref.load %arg2[%c106] : memref<288xf32, #tpu.memory_space<smem>>
    %1161 = vector.broadcast %1160 : f32 to vector<16x16xf32>
    %1162 = arith.mulf %1161, %1151 : vector<16x16xf32>
    %1163 = arith.addf %1130, %1162 : vector<16x16xf32>
    %c142 = arith.constant 142 : index
    %1164 = memref.load %arg2[%c142] : memref<288xf32, #tpu.memory_space<smem>>
    %1165 = vector.broadcast %1164 : f32 to vector<16x16xf32>
    %1166 = arith.mulf %1165, %1151 : vector<16x16xf32>
    %1167 = arith.addf %1134, %1166 : vector<16x16xf32>
    %c178 = arith.constant 178 : index
    %1168 = memref.load %arg2[%c178] : memref<288xf32, #tpu.memory_space<smem>>
    %1169 = vector.broadcast %1168 : f32 to vector<16x16xf32>
    %1170 = arith.mulf %1169, %1151 : vector<16x16xf32>
    %1171 = arith.addf %1138, %1170 : vector<16x16xf32>
    %c214 = arith.constant 214 : index
    %1172 = memref.load %arg2[%c214] : memref<288xf32, #tpu.memory_space<smem>>
    %1173 = vector.broadcast %1172 : f32 to vector<16x16xf32>
    %1174 = arith.mulf %1173, %1151 : vector<16x16xf32>
    %1175 = arith.addf %1142, %1174 : vector<16x16xf32>
    %c250 = arith.constant 250 : index
    %1176 = memref.load %arg2[%c250] : memref<288xf32, #tpu.memory_space<smem>>
    %1177 = vector.broadcast %1176 : f32 to vector<16x16xf32>
    %1178 = arith.mulf %1177, %1151 : vector<16x16xf32>
    %1179 = arith.addf %1146, %1178 : vector<16x16xf32>
    %c286 = arith.constant 286 : index
    %1180 = memref.load %arg2[%c286] : memref<288xf32, #tpu.memory_space<smem>>
    %1181 = vector.broadcast %1180 : f32 to vector<16x16xf32>
    %1182 = arith.mulf %1181, %1151 : vector<16x16xf32>
    %1183 = arith.addf %1150, %1182 : vector<16x16xf32>
    %1184 = vector.extract_strided_slice %919 {offsets = [2, 2], sizes = [16, 16], strides = [1, 1]} : vector<18x18xf32> to vector<16x16xf32>
    %c35 = arith.constant 35 : index
    %1185 = memref.load %arg2[%c35] : memref<288xf32, #tpu.memory_space<smem>>
    %1186 = vector.broadcast %1185 : f32 to vector<16x16xf32>
    %1187 = arith.mulf %1186, %1184 : vector<16x16xf32>
    %1188 = arith.addf %1155, %1187 : vector<16x16xf32>
    %c71 = arith.constant 71 : index
    %1189 = memref.load %arg2[%c71] : memref<288xf32, #tpu.memory_space<smem>>
    %1190 = vector.broadcast %1189 : f32 to vector<16x16xf32>
    %1191 = arith.mulf %1190, %1184 : vector<16x16xf32>
    %1192 = arith.addf %1159, %1191 : vector<16x16xf32>
    %c107 = arith.constant 107 : index
    %1193 = memref.load %arg2[%c107] : memref<288xf32, #tpu.memory_space<smem>>
    %1194 = vector.broadcast %1193 : f32 to vector<16x16xf32>
    %1195 = arith.mulf %1194, %1184 : vector<16x16xf32>
    %1196 = arith.addf %1163, %1195 : vector<16x16xf32>
    %c143 = arith.constant 143 : index
    %1197 = memref.load %arg2[%c143] : memref<288xf32, #tpu.memory_space<smem>>
    %1198 = vector.broadcast %1197 : f32 to vector<16x16xf32>
    %1199 = arith.mulf %1198, %1184 : vector<16x16xf32>
    %1200 = arith.addf %1167, %1199 : vector<16x16xf32>
    %c179 = arith.constant 179 : index
    %1201 = memref.load %arg2[%c179] : memref<288xf32, #tpu.memory_space<smem>>
    %1202 = vector.broadcast %1201 : f32 to vector<16x16xf32>
    %1203 = arith.mulf %1202, %1184 : vector<16x16xf32>
    %1204 = arith.addf %1171, %1203 : vector<16x16xf32>
    %c215 = arith.constant 215 : index
    %1205 = memref.load %arg2[%c215] : memref<288xf32, #tpu.memory_space<smem>>
    %1206 = vector.broadcast %1205 : f32 to vector<16x16xf32>
    %1207 = arith.mulf %1206, %1184 : vector<16x16xf32>
    %1208 = arith.addf %1175, %1207 : vector<16x16xf32>
    %c251 = arith.constant 251 : index
    %1209 = memref.load %arg2[%c251] : memref<288xf32, #tpu.memory_space<smem>>
    %1210 = vector.broadcast %1209 : f32 to vector<16x16xf32>
    %1211 = arith.mulf %1210, %1184 : vector<16x16xf32>
    %1212 = arith.addf %1179, %1211 : vector<16x16xf32>
    %c287 = arith.constant 287 : index
    %1213 = memref.load %arg2[%c287] : memref<288xf32, #tpu.memory_space<smem>>
    %1214 = vector.broadcast %1213 : f32 to vector<16x16xf32>
    %1215 = arith.mulf %1214, %1184 : vector<16x16xf32>
    %1216 = arith.addf %1183, %1215 : vector<16x16xf32>
    %c0_30 = arith.constant 0 : index
    %c0_31 = arith.constant 0 : index
    %c0_32 = arith.constant 0 : index
    %c0_33 = arith.constant 0 : index
    %1217 = vector.load %arg4[%c0_30, %c0_31, %c0_32, %c0_33] : memref<1x8x16x16xf32, #tpu.memory_space<vmem>>, vector<1x1x16x16xf32>
    %1218 = vector.shape_cast %1217 : vector<1x1x16x16xf32> to vector<16x16xf32>
    %1219 = vector.shape_cast %1188 : vector<16x16xf32> to vector<1x1x16x16xf32>
    tpu.vector_store %arg4[%c0_30, %c0_31, %c0_32, %c0_33], %1219 {strides = array<i32>} : memref<1x8x16x16xf32, #tpu.memory_space<vmem>>, vector<1x1x16x16xf32>,
    %c0_34 = arith.constant 0 : index
    %c1_35 = arith.constant 1 : index
    %c0_36 = arith.constant 0 : index
    %c0_37 = arith.constant 0 : index
    %1220 = vector.load %arg4[%c0_34, %c1_35, %c0_36, %c0_37] : memref<1x8x16x16xf32, #tpu.memory_space<vmem>>, vector<1x1x16x16xf32>
    %1221 = vector.shape_cast %1220 : vector<1x1x16x16xf32> to vector<16x16xf32>
    %1222 = vector.shape_cast %1192 : vector<16x16xf32> to vector<1x1x16x16xf32>
    tpu.vector_store %arg4[%c0_34, %c1_35, %c0_36, %c0_37], %1222 {strides = array<i32>} : memref<1x8x16x16xf32, #tpu.memory_space<vmem>>, vector<1x1x16x16xf32>,
    %c0_38 = arith.constant 0 : index
    %c2_39 = arith.constant 2 : index
    %c0_40 = arith.constant 0 : index
    %c0_41 = arith.constant 0 : index
    %1223 = vector.load %arg4[%c0_38, %c2_39, %c0_40, %c0_41] : memref<1x8x16x16xf32, #tpu.memory_space<vmem>>, vector<1x1x16x16xf32>
    %1224 = vector.shape_cast %1223 : vector<1x1x16x16xf32> to vector<16x16xf32>
    %1225 = vector.shape_cast %1196 : vector<16x16xf32> to vector<1x1x16x16xf32>
    tpu.vector_store %arg4[%c0_38, %c2_39, %c0_40, %c0_41], %1225 {strides = array<i32>} : memref<1x8x16x16xf32, #tpu.memory_space<vmem>>, vector<1x1x16x16xf32>,
    %c0_42 = arith.constant 0 : index
    %c3_43 = arith.constant 3 : index
    %c0_44 = arith.constant 0 : index
    %c0_45 = arith.constant 0 : index
    %1226 = vector.load %arg4[%c0_42, %c3_43, %c0_44, %c0_45] : memref<1x8x16x16xf32, #tpu.memory_space<vmem>>, vector<1x1x16x16xf32>
    %1227 = vector.shape_cast %1226 : vector<1x1x16x16xf32> to vector<16x16xf32>
    %1228 = vector.shape_cast %1200 : vector<16x16xf32> to vector<1x1x16x16xf32>
    tpu.vector_store %arg4[%c0_42, %c3_43, %c0_44, %c0_45], %1228 {strides = array<i32>} : memref<1x8x16x16xf32, #tpu.memory_space<vmem>>, vector<1x1x16x16xf32>,
    %c0_46 = arith.constant 0 : index
    %c4_47 = arith.constant 4 : index
    %c0_48 = arith.constant 0 : index
    %c0_49 = arith.constant 0 : index
    %1229 = vector.load %arg4[%c0_46, %c4_47, %c0_48, %c0_49] : memref<1x8x16x16xf32, #tpu.memory_space<vmem>>, vector<1x1x16x16xf32>
    %1230 = vector.shape_cast %1229 : vector<1x1x16x16xf32> to vector<16x16xf32>
    %1231 = vector.shape_cast %1204 : vector<16x16xf32> to vector<1x1x16x16xf32>
    tpu.vector_store %arg4[%c0_46, %c4_47, %c0_48, %c0_49], %1231 {strides = array<i32>} : memref<1x8x16x16xf32, #tpu.memory_space<vmem>>, vector<1x1x16x16xf32>,
    %c0_50 = arith.constant 0 : index
    %c5_51 = arith.constant 5 : index
    %c0_52 = arith.constant 0 : index
    %c0_53 = arith.constant 0 : index
    %1232 = vector.load %arg4[%c0_50, %c5_51, %c0_52, %c0_53] : memref<1x8x16x16xf32, #tpu.memory_space<vmem>>, vector<1x1x16x16xf32>
    %1233 = vector.shape_cast %1232 : vector<1x1x16x16xf32> to vector<16x16xf32>
    %1234 = vector.shape_cast %1208 : vector<16x16xf32> to vector<1x1x16x16xf32>
    tpu.vector_store %arg4[%c0_50, %c5_51, %c0_52, %c0_53], %1234 {strides = array<i32>} : memref<1x8x16x16xf32, #tpu.memory_space<vmem>>, vector<1x1x16x16xf32>,
    %c0_54 = arith.constant 0 : index
    %c6_55 = arith.constant 6 : index
    %c0_56 = arith.constant 0 : index
    %c0_57 = arith.constant 0 : index
    %1235 = vector.load %arg4[%c0_54, %c6_55, %c0_56, %c0_57] : memref<1x8x16x16xf32, #tpu.memory_space<vmem>>, vector<1x1x16x16xf32>
    %1236 = vector.shape_cast %1235 : vector<1x1x16x16xf32> to vector<16x16xf32>
    %1237 = vector.shape_cast %1212 : vector<16x16xf32> to vector<1x1x16x16xf32>
    tpu.vector_store %arg4[%c0_54, %c6_55, %c0_56, %c0_57], %1237 {strides = array<i32>} : memref<1x8x16x16xf32, #tpu.memory_space<vmem>>, vector<1x1x16x16xf32>,
    %c0_58 = arith.constant 0 : index
    %c7_59 = arith.constant 7 : index
    %c0_60 = arith.constant 0 : index
    %c0_61 = arith.constant 0 : index
    %1238 = vector.load %arg4[%c0_58, %c7_59, %c0_60, %c0_61] : memref<1x8x16x16xf32, #tpu.memory_space<vmem>>, vector<1x1x16x16xf32>
    %1239 = vector.shape_cast %1238 : vector<1x1x16x16xf32> to vector<16x16xf32>
    %1240 = vector.shape_cast %1216 : vector<16x16xf32> to vector<1x1x16x16xf32>
    tpu.vector_store %arg4[%c0_58, %c7_59, %c0_60, %c0_61], %1240 {strides = array<i32>} : memref<1x8x16x16xf32, #tpu.memory_space<vmem>>, vector<1x1x16x16xf32>,
    return
  }
  func.func @transform_0(%arg0: i32) -> (i32, i32, i32, i32) {
    %c0_i32 = arith.constant 0 : i32
    %c0_i32_0 = arith.constant 0 : i32
    %c0_i32_1 = arith.constant 0 : i32
    %c0_i32_2 = arith.constant 0 : i32
    return %arg0, %c0_i32, %c0_i32_0, %c0_i32_1 : i32, i32, i32, i32
  }
  func.func @transform_1(%arg0: i32) -> i32 {
    %c0_i32 = arith.constant 0 : i32
    %c0_i32_0 = arith.constant 0 : i32
    return %c0_i32 : i32
  }
  func.func @transform_2(%arg0: i32) -> i32 {
    %c0_i32 = arith.constant 0 : i32
    %c0_i32_0 = arith.constant 0 : i32
    return %c0_i32 : i32
  }
  func.func @transform_3(%arg0: i32) -> (i32, i32, i32, i32) {
    %c0_i32 = arith.constant 0 : i32
    %c0_i32_0 = arith.constant 0 : i32
    %c0_i32_1 = arith.constant 0 : i32
    %c0_i32_2 = arith.constant 0 : i32
    return %arg0, %c0_i32, %c0_i32_0, %c0_i32_1 : i32, i32, i32, i32
  }
}

</mosaic_0001>

<llo_original>
// kernel: tpu_custom_call.1
$region0: #{tpu_custom_call.1}
  #allocation0 [shape = 'u32[]', space=smem, size = 0x4, offset = 0x4, fixed_abs, tag = 'smem constant byte address 0x4 - core index']
  #allocation1 [shape = 'u32[144,128]{1,0:T(1,128)}', space=vmem, size = 0x12000, scoped, tag = 'internal scratch']
  #allocation2 [shape = 'f32[4,18,18]{2,1,0:T(8,128)}', space=vmem, size = 0xc000, scoped, tag = 'scratch operand']
  %s0 = inlined_call_operand.hbm [shape: f32[2,4,16,16], index: 0, kind: input, shape index: {}]
  %s1 = inlined_call_operand.hbm [shape: f32[288], index: 1, kind: input, shape index: {}]
  %s2 = inlined_call_operand.vmem [shape: f32[8], index: 2, kind: input, shape index: {}]
  %s3 = inlined_call_operand.hbm [shape: f32[2,8,16,16], index: 3, kind: output, shape index: {}]
  %s4 = sld [smem:[#allocation0]]
  $region57: #{tpu_custom_call.1} parent=0
    _
  %s6 = ssub.s32 1, %s4
  %s7 = scalar_select 0, %s6, %s4
  $region1: #{tpu_custom_call.1} parent=0
    #allocation3 [shape = 'u8[65536]{0}', space=vmem, size = 0x10000, scoped, tag = 'input window, operand 0']
    #allocation4 [shape = 's32[2]{0}', space=sflag, size = 0x8, scoped, tag = 'scoped memory for tpu_custom_call.1']
    #allocation5 [shape = 's32[2]{0}', space=sflag, size = 0x8, scoped, tag = 'scoped memory for tpu_custom_call.1']
    #allocation6 [shape = 's32[2]{0}', space=sflag, size = 0x8, scoped, tag = 'scoped memory for tpu_custom_call.1']
    #allocation7 [shape = 's32[2]{0}', space=sflag, size = 0x8, scoped, tag = 'scoped memory for tpu_custom_call.1']
    #allocation8 [shape = 'u8[1536]{0}', space=smem, size = 0x600, scoped, tag = 'input window, operand 1, single buffered']
    #allocation9 [shape = 'u8[512]{0}', space=smem, size = 0x200, scoped, tag = 'input window, operand 2, single buffered']
    #allocation10 [shape = 'u8[131072]{0}', space=vmem, size = 0x20000, scoped, tag = 'output window, operand 0']
    %8 = vsyncpa [#allocation4], 0
    %s9 = scalar_lea.sflag [#allocation4], 1
    %10 = vsyncpa %s9, 0
    %11 = vsyncpa [#allocation6], 0
    %12 = vsyncpa [#allocation7], 0
    %13 = vsyncpa [#allocation5], 0
    %s14 = scalar_lea.sflag [#allocation5], 1
    %15 = vsyncpa %s14, 0
    loop: start=0, step=1, limit=4
    $region2: #{tpu_custom_call.1} parent=1 // loop_pre_header
      _
    $region3: #{tpu_custom_call.1} parent=1 // loop_header
      %s17 = sphi 0, %s21
      %p18 = scmp.ge.s32.totalorder %s17, 4
      %s27 = sphi 0, %s29
      %s30 = sphi 0, %s27
      %s31 = sphi 0, %s30
      %s47 = sphi 0, %s31
      %s51 = sphi 0, %s51
      %s53 = sphi 0, %s51
      %s54 = sphi 0, %s53
      %s68 = sphi 0, %s54
      %s72 = sphi 0, %s72
      %s74 = sphi 0, %s72
      %s75 = sphi 0, %s74
      %s89 = sphi 0, %s75
      %s95 = sphi 0, %s97
      %s98 = sphi 0, %s95
      %s99 = sphi 0, %s98
      %s115 = sphi 0, %s99
    $region4: #{tpu_custom_call.1} parent=1 // loop_header_branch
      %20 = sbr.rel (%p18) target = $region8
    $region5: #{tpu_custom_call.1} parent=1 // loop_body
      %s22 = ssub.s32 %s17, 1
      %s23 = ssub.s32 %s17, 2
      %s24 = sadd.s32 %s17, 1
      %s25 = ssub.s32 %s17, %s24
      %p26 = scmp.eq.s32.totalorder %s25, 0
      %s28 = sadd.s32 %s27, 1
      %s29 = scalar_select %p26, %s27, %s28
      %p32 = pneg %p26
      %p33 = scmp.eq.s32.totalorder %s17, 1
      %p34 = por %p32, %p33
      %p35 = scmp.ne.s32.totalorder %s27, %s30
      %p36 = scmp.eq.s32.totalorder %s17, 0
      %p37 = por %p35, %p36
      %p38 = scmp.ne.s32.totalorder %s27, %s30
      %p39 = scmp.eq.s32.totalorder %s22, 1
      %p40 = por %p38, %p39
      %p41 = scmp.ne.s32.totalorder %s30, %s31
      %p42 = scmp.eq.s32.totalorder %s22, 0
      %p43 = por %p41, %p42
      %p44 = scmp.ne.s32.totalorder %s30, %s31
      %p45 = scmp.eq.s32.totalorder %s23, 1
      %p46 = por %p44, %p45
      %p48 = scmp.ne.s32.totalorder %s31, %s47
      %p49 = scmp.eq.s32.totalorder %s23, 0
      %p50 = por %p48, %p49
      %s52 = sadd.s32 %s51, 1
      %p55 = scmp.eq.s32.totalorder %s17, 1
      %p56 = scmp.ne.s32.totalorder %s51, %s53
      %p57 = scmp.eq.s32.totalorder %s17, 0
      %p58 = por %p56, %p57
      %p59 = scmp.ne.s32.totalorder %s51, %s53
      %p60 = scmp.eq.s32.totalorder %s22, 1
      %p61 = por %p59, %p60
      %p62 = scmp.ne.s32.totalorder %s53, %s54
      %p63 = scmp.eq.s32.totalorder %s22, 0
      %p64 = por %p62, %p63
      %p65 = scmp.ne.s32.totalorder %s53, %s54
      %p66 = scmp.eq.s32.totalorder %s23, 1
      %p67 = por %p65, %p66
      %p69 = scmp.ne.s32.totalorder %s54, %s68
      %p70 = scmp.eq.s32.totalorder %s23, 0
      %p71 = por %p69, %p70
      %s73 = sadd.s32 %s72, 1
      %p76 = scmp.eq.s32.totalorder %s17, 1
      %p77 = scmp.ne.s32.totalorder %s72, %s74
      %p78 = scmp.eq.s32.totalorder %s17, 0
      %p79 = por %p77, %p78
      %p80 = scmp.ne.s32.totalorder %s72, %s74
      %p81 = scmp.eq.s32.totalorder %s22, 1
      %p82 = por %p80, %p81
      %p83 = scmp.ne.s32.totalorder %s74, %s75
      %p84 = scmp.eq.s32.totalorder %s22, 0
      %p85 = por %p83, %p84
      %p86 = scmp.ne.s32.totalorder %s74, %s75
      %p87 = scmp.eq.s32.totalorder %s23, 1
      %p88 = por %p86, %p87
      %p90 = scmp.ne.s32.totalorder %s75, %s89
      %p91 = scmp.eq.s32.totalorder %s23, 0
      %p92 = por %p90, %p91
      %s93 = ssub.s32 %s17, %s24
      %p94 = scmp.eq.s32.totalorder %s93, 0
      %s96 = sadd.s32 %s95, 1
      %s97 = scalar_select %p94, %s95, %s96
      %p100 = pneg %p94
      %p101 = scmp.eq.s32.totalorder %s17, 1
      %p102 = por %p100, %p101
      %p103 = scmp.ne.s32.totalorder %s95, %s98
      %p104 = scmp.eq.s32.totalorder %s17, 0
      %p105 = por %p103, %p104
      %p106 = scmp.ne.s32.totalorder %s95, %s98
      %p107 = scmp.eq.s32.totalorder %s22, 1
      %p108 = por %p106, %p107
      %p109 = scmp.ne.s32.totalorder %s98, %s99
      %p110 = scmp.eq.s32.totalorder %s22, 0
      %p111 = por %p109, %p110
      %p112 = scmp.ne.s32.totalorder %s98, %s99
      %p113 = scmp.eq.s32.totalorder %s23, 1
      %p114 = por %p112, %p113
      %p116 = scmp.ne.s32.totalorder %s99, %s115
      %p117 = scmp.eq.s32.totalorder %s23, 0
      %p118 = por %p116, %p117
      %p119 = scmp.le.s32.totalorder 1, %s17
      %p120 = scmp.lt.s32.totalorder %s17, 3
      %p121 = pnand %p119, %p120
      %p122 = pneg %p121
      // Predicated region
      $region9: #{tpu_custom_call.1} parent=5 // pred_check
        _
      $region10: #{tpu_custom_call.1} parent=5 // pred_check_branch
        %124 = sbr.rel (%p121) target = $region12
      $region11: #{tpu_custom_call.1} parent=5 // pred_region
        %s125 = ssub.s32 %s17, 1
        // Predicated region
        $region13: #{tpu_custom_call.1} parent=11 // pred_check
          %p126 = pneg %p64
        $region14: #{tpu_custom_call.1} parent=11 // pred_check_branch
          %128 = sbr.rel (%p126) target = $region16
        $region15: #{tpu_custom_call.1} parent=11 // pred_region
          %s130 = ssub.s32 48, 48
          %131 = vsyncadd [#allocation6], %s130
          %134 = dma.hbm_to_smem %s1, 48, [#allocation8], [#allocation6]
        $region16: #{tpu_custom_call.1} parent=11 // pred_fallthru
          _
        // Predicated region
        $region17: #{tpu_custom_call.1} parent=11 // pred_check
          %p135 = pneg %p85
        $region18: #{tpu_custom_call.1} parent=11 // pred_check_branch
          %137 = sbr.rel (%p135) target = $region20
        $region19: #{tpu_custom_call.1} parent=11 // pred_region
          %s139 = ssub.s32 16, 16
          %140 = vsyncadd [#allocation7], %s139
          %s142 = sshll.u32 %s2, 4
          %s143 = int_to_ptr.vmem [resolvable:$true] %s142
          %145 = dma.vmem_to_smem %s143, 16, [#allocation9], [#allocation7]
        $region20: #{tpu_custom_call.1} parent=11 // pred_fallthru
          _
      $region12: #{tpu_custom_call.1} parent=5 // pred_fallthru
        _
      %p146 = scmp.lt.s32.totalorder %s17, 2
      // Predicated region
      $region21: #{tpu_custom_call.1} parent=5 // pred_check
        %p147 = pneg %p146
      $region22: #{tpu_custom_call.1} parent=5 // pred_check_branch
        %149 = sbr.rel (%p147) target = $region24
      $region23: #{tpu_custom_call.1} parent=5 // pred_region
        // Predicated region
        $region25: #{tpu_custom_call.1} parent=23 // pred_check
          %p150 = pneg %p37
        $region26: #{tpu_custom_call.1} parent=23 // pred_check_branch
          %152 = sbr.rel (%p150) target = $region28
        $region27: #{tpu_custom_call.1} parent=23 // pred_region
          %s153 = sand.u32 %s27, 1
          %s154 = scalar_lea.sflag [#allocation4], %s153
          %s155 = sand.u32 %s27, 1
          %s156 = smul.addr %s155, 64
          %s157 = scalar_lea.vmem [#allocation3], %s156
          %s159 = ssub.s32 1024, 1024
          %160 = vsyncadd %s154, %s159
          %s161 = smul.addr %s17, 8
          %s162 = smul.addr %s161, 128
          %s163 = scalar_lea.hbm %s0, %s162
          %s164 = sshll.u32 %s157, 4
          %s165 = int_to_ptr.vmem [resolvable:$true] %s164
          %170 = dma.hbm_to_vmem [thread:$0]  %s163, 1024, %s165, %s154, 128, 128, 8
        $region28: #{tpu_custom_call.1} parent=23 // pred_fallthru
          _
      $region24: #{tpu_custom_call.1} parent=5 // pred_fallthru
        _
      %p171 = scmp.le.s32.totalorder 1, %s17
      %p172 = scmp.lt.s32.totalorder %s17, 3
      %p173 = pnand %p171, %p172
      %p174 = pneg %p173
      // Predicated region
      $region29: #{tpu_custom_call.1} parent=5 // pred_check
        _
      $region30: #{tpu_custom_call.1} parent=5 // pred_check_branch
        %176 = sbr.rel (%p173) target = $region32
      $region31: #{tpu_custom_call.1} parent=5 // pred_region
        %s177 = ssub.s32 %s17, 1
        %s178 = sand.u32 %s30, 1
        %s179 = scalar_lea.sflag [#allocation4], %s178
        %s180 = sand.u32 %s30, 1
        %s181 = smul.addr %s180, 64
        %s182 = scalar_lea.vmem [#allocation3], %s181
        // Predicated region
        $region33: #{tpu_custom_call.1} parent=31 // pred_check
          %p183 = pneg %p43
        $region34: #{tpu_custom_call.1} parent=31 // pred_check_branch
          %185 = sbr.rel (%p183) target = $region36
        $region35: #{tpu_custom_call.1} parent=31 // pred_region
          %186 = dma.done %s179, 1024
        $region36: #{tpu_custom_call.1} parent=31 // pred_fallthru
          _
        // Predicated region
        $region37: #{tpu_custom_call.1} parent=31 // pred_check
          %p187 = pneg %p64
        $region38: #{tpu_custom_call.1} parent=31 // pred_check_branch
          %189 = sbr.rel (%p187) target = $region40
        $region39: #{tpu_custom_call.1} parent=31 // pred_region
          %190 = dma.done [#allocation6], 48
        $region40: #{tpu_custom_call.1} parent=31 // pred_fallthru
          _
        // Predicated region
        $region41: #{tpu_custom_call.1} parent=31 // pred_check
          %p191 = pneg %p85
        $region42: #{tpu_custom_call.1} parent=31 // pred_check_branch
          %193 = sbr.rel (%p191) target = $region44
        $region43: #{tpu_custom_call.1} parent=31 // pred_region
          %194 = dma.done [#allocation7], 16
        $region44: #{tpu_custom_call.1} parent=31 // pred_fallthru
          _
        %195 = sfence
        %s196 = sand.u32 %s30, 1
        %s197 = scalar_lea.sflag [#allocation4], %s196
        %s198 = sand.u32 %s30, 1
        %s199 = smul.addr %s198, 64
        %s200 = scalar_lea.vmem [#allocation3], %s199
        %p201 = pneg %p43
        %p202 = pneg %p40
        %p203 = pneg %p64
        %p204 = pneg %p61
        %p205 = pneg %p85
        %p206 = pneg %p82
        %p207 = pneg %p111
        %p208 = pneg %p108
        %s209 = sand.u32 %s98, 1
        %s210 = scalar_lea.sflag [#allocation5], %s209
        %s211 = sand.u32 %s98, 1
        %s212 = smul.addr %s211, 128
        %s213 = scalar_lea.vmem [#allocation10], %s212
        %vm214 = vcmask 146432
        %215 = vst.msk [vmem:[#allocation2] sm:$0xff] %vm214, 0.0
        %216 = vst.msk [vmem:[#allocation2 + $0x8] sm:$0xff] %vm214, 0.0
        %vm217 = vcmask 140288
        %218 = vst.msk [vmem:[#allocation2 + $0x10] sm:$0x3] %vm217, 0.0
        %219 = vst.msk [vmem:[#allocation2 + $0x18] sm:$0xff] %vm214, 0.0
        %220 = vst.msk [vmem:[#allocation2 + $0x20] sm:$0xff] %vm214, 0.0
        %221 = vst.msk [vmem:[#allocation2 + $0x28] sm:$0x3] %vm217, 0.0
        %222 = vst.msk [vmem:[#allocation2 + $0x30] sm:$0xff] %vm214, 0.0
        %223 = vst.msk [vmem:[#allocation2 + $0x38] sm:$0xff] %vm214, 0.0
        %224 = vst.msk [vmem:[#allocation2 + $0x40] sm:$0x3] %vm217, 0.0
        %225 = vst.msk [vmem:[#allocation2 + $0x48] sm:$0xff] %vm214, 0.0
        %226 = vst.msk [vmem:[#allocation2 + $0x50] sm:$0xff] %vm214, 0.0
        %227 = vst.msk [vmem:[#allocation2 + $0x58] sm:$0x3] %vm217, 0.0
        %v228 = vld [vmem:[%s182] sm:$0xff]
        %v229 = vld [vmem:[%s182 + $0x8] sm:$0xff]
        %v230 = vld [vmem:[%s182 + $0x10] sm:$0xff]
        %v231 = vld [vmem:[%s182 + $0x18] sm:$0xff]
        %v232 = vld [vmem:[%s182 + $0x20] sm:$0xff]
        %v233 = vld [vmem:[%s182 + $0x28] sm:$0xff]
        %v234 = vld [vmem:[%s182 + $0x30] sm:$0xff]
        %v235 = vld [vmem:[%s182 + $0x38] sm:$0xff]
        %244 = vrot.lane.b32.xlu0 %v228, 1
        %v245 = vpop.permute.xlu0 %244
        %246 = vrot.lane.b32.xlu0 %v229, 1
        %v247 = vpop.permute.xlu0 %246
        %248 = vrot.lane.b32.xlu0 %v230, 1
        %v249 = vpop.permute.xlu0 %248
        %250 = vrot.lane.b32.xlu0 %v231, 1
        %v251 = vpop.permute.xlu0 %250
        %252 = vrot.lane.b32.xlu0 %v232, 1
        %v253 = vpop.permute.xlu0 %252
        %254 = vrot.lane.b32.xlu0 %v233, 1
        %v255 = vpop.permute.xlu0 %254
        %256 = vrot.lane.b32.xlu0 %v234, 1
        %v257 = vpop.permute.xlu0 %256
        %258 = vrot.lane.b32.xlu0 %v235, 1
        %v259 = vpop.permute.xlu0 %258
        %vm268 = vcmask 138248
        %269 = vst.msk [vmem:[#allocation2 + $0x2] sm:$0xff] %vm268, %v245
        %270 = vst.msk [vmem:[#allocation2 + $0xa] sm:$0xff] %vm268, %v247
        %271 = vst.msk [vmem:[#allocation2 + $0x1a] sm:$0xff] %vm268, %v249
        %272 = vst.msk [vmem:[#allocation2 + $0x22] sm:$0xff] %vm268, %v251
        %273 = vst.msk [vmem:[#allocation2 + $0x32] sm:$0xff] %vm268, %v253
        %274 = vst.msk [vmem:[#allocation2 + $0x3a] sm:$0xff] %vm268, %v255
        %275 = vst.msk [vmem:[#allocation2 + $0x4a] sm:$0xff] %vm268, %v257
        %276 = vst.msk [vmem:[#allocation2 + $0x52] sm:$0xff] %vm268, %v259
        %s277 = sld [smem:[#allocation9]]
        %v278 = vstv %s277
        %s279 = sld [smem:[#allocation9 + $0x1]]
        %v280 = vstv %s279
        %s281 = sld [smem:[#allocation9 + $0x2]]
        %v282 = vstv %s281
        %s283 = sld [smem:[#allocation9 + $0x3]]
        %v284 = vstv %s283
        %s285 = sld [smem:[#allocation9 + $0x4]]
        %v286 = vstv %s285
        %s287 = sld [smem:[#allocation9 + $0x5]]
        %v288 = vstv %s287
        %s289 = sld [smem:[#allocation9 + $0x6]]
        %v290 = vstv %s289
        %s291 = sld [smem:[#allocation9 + $0x7]]
        %v292 = vstv %s291
        %v293 = vld [vmem:[#allocation2] sm:$0xff]
        %v294 = vld [vmem:[#allocation2 + $0x8] sm:$0xff]
        %v295 = vld [vmem:[#allocation2 + $0x10] sm:$0x3]
        %s296 = sld [smem:[#allocation8]]
        %v297 = vstv %s296
        %v298 = vmul.f32 %v297, %v293
        %v299 = vmul.f32 %v297, %v294
        %v300 = vadd.f32 %v278, %v298
        %v301 = vadd.f32 %v278, %v299
        %s302 = sld [smem:[#allocation8 + $0x24]]
        %v303 = vstv %s302
        %v304 = vmul.f32 %v303, %v293
        %v305 = vmul.f32 %v303, %v294
        %v306 = vadd.f32 %v280, %v304
        %v307 = vadd.f32 %v280, %v305
        %s308 = sld [smem:[#allocation8 + $0x48]]
        %v309 = vstv %s308
        %v310 = vmul.f32 %v309, %v293
        %v311 = vmul.f32 %v309, %v294
        %v312 = vadd.f32 %v282, %v310
        %v313 = vadd.f32 %v282, %v311
        %s314 = sld [smem:[#allocation8 + $0x6c]]
        %v315 = vstv %s314
        %v316 = vmul.f32 %v315, %v293
        %v317 = vmul.f32 %v315, %v294
        %v318 = vadd.f32 %v284, %v316
        %v319 = vadd.f32 %v284, %v317
        %s320 = sld [smem:[#allocation8 + $0x90]]
        %v321 = vstv %s320
        %v322 = vmul.f32 %v321, %v293
        %v323 = vmul.f32 %v321, %v294
        %v324 = vadd.f32 %v286, %v322
        %v325 = vadd.f32 %v286, %v323
        %s326 = sld [smem:[#allocation8 + $0xb4]]
        %v327 = vstv %s326
        %v328 = vmul.f32 %v327, %v293
        %v329 = vmul.f32 %v327, %v294
        %v330 = vadd.f32 %v288, %v328
        %v331 = vadd.f32 %v288, %v329
        %s332 = sld [smem:[#allocation8 + $0xd8]]
        %v333 = vstv %s332
        %v334 = vmul.f32 %v333, %v293
        %v335 = vmul.f32 %v333, %v294
        %v336 = vadd.f32 %v290, %v334
        %v337 = vadd.f32 %v290, %v335
        %s338 = sld [smem:[#allocation8 + $0xfc]]
        %v339 = vstv %s338
        %v340 = vmul.f32 %v339, %v293
        %v341 = vmul.f32 %v339, %v294
        %v342 = vadd.f32 %v292, %v340
        %v343 = vadd.f32 %v292, %v341
        %s344 = sld [smem:[#allocation8 + $0x1]]
        %v345 = vstv %s344
        %v346 = vmul.f32 %v345, %v293
        %v347 = vmul.f32 %v345, %v294
        %350 = vrot.lane.b32.xlu0 %v346, 127
        %v351 = vpop.permute.xlu0 %350
        %352 = vrot.lane.b32.xlu0 %v347, 127
        %v353 = vpop.permute.xlu0 %352
        %v356 = vadd.f32 %v300, %v351
        %v357 = vadd.f32 %v301, %v353
        %s358 = sld [smem:[#allocation8 + $0x25]]
        %v359 = vstv %s358
        %v360 = vmul.f32 %v359, %v293
        %v361 = vmul.f32 %v359, %v294
        %364 = vrot.lane.b32.xlu0 %v360, 127
        %v365 = vpop.permute.xlu0 %364
        %366 = vrot.lane.b32.xlu0 %v361, 127
        %v367 = vpop.permute.xlu0 %366
        %v370 = vadd.f32 %v306, %v365
        %v371 = vadd.f32 %v307, %v367
        %s372 = sld [smem:[#allocation8 + $0x49]]
        %v373 = vstv %s372
        %v374 = vmul.f32 %v373, %v293
        %v375 = vmul.f32 %v373, %v294
        %378 = vrot.lane.b32.xlu0 %v374, 127
        %v379 = vpop.permute.xlu0 %378
        %380 = vrot.lane.b32.xlu0 %v375, 127
        %v381 = vpop.permute.xlu0 %380
        %v384 = vadd.f32 %v312, %v379
        %v385 = vadd.f32 %v313, %v381
        %s386 = sld [smem:[#allocation8 + $0x6d]]
        %v387 = vstv %s386
        %v388 = vmul.f32 %v387, %v293
        %v389 = vmul.f32 %v387, %v294
        %392 = vrot.lane.b32.xlu0 %v388, 127
        %v393 = vpop.permute.xlu0 %392
        %394 = vrot.lane.b32.xlu0 %v389, 127
        %v395 = vpop.permute.xlu0 %394
        %v398 = vadd.f32 %v318, %v393
        %v399 = vadd.f32 %v319, %v395
        %s400 = sld [smem:[#allocation8 + $0x91]]
        %v401 = vstv %s400
        %v402 = vmul.f32 %v401, %v293
        %v403 = vmul.f32 %v401, %v294
        %406 = vrot.lane.b32.xlu0 %v402, 127
        %v407 = vpop.permute.xlu0 %406
        %408 = vrot.lane.b32.xlu0 %v403, 127
        %v409 = vpop.permute.xlu0 %408
        %v412 = vadd.f32 %v324, %v407
        %v413 = vadd.f32 %v325, %v409
        %s414 = sld [smem:[#allocation8 + $0xb5]]
        %v415 = vstv %s414
        %v416 = vmul.f32 %v415, %v293
        %v417 = vmul.f32 %v415, %v294
        %420 = vrot.lane.b32.xlu0 %v416, 127
        %v421 = vpop.permute.xlu0 %420
        %422 = vrot.lane.b32.xlu0 %v417, 127
        %v423 = vpop.permute.xlu0 %422
        %v426 = vadd.f32 %v330, %v421
        %v427 = vadd.f32 %v331, %v423
        %s428 = sld [smem:[#allocation8 + $0xd9]]
        %v429 = vstv %s428
        %v430 = vmul.f32 %v429, %v293
        %v431 = vmul.f32 %v429, %v294
        %434 = vrot.lane.b32.xlu0 %v430, 127
        %v435 = vpop.permute.xlu0 %434
        %436 = vrot.lane.b32.xlu0 %v431, 127
        %v437 = vpop.permute.xlu0 %436
        %v440 = vadd.f32 %v336, %v435
        %v441 = vadd.f32 %v337, %v437
        %s442 = sld [smem:[#allocation8 + $0xfd]]
        %v443 = vstv %s442
        %v444 = vmul.f32 %v443, %v293
        %v445 = vmul.f32 %v443, %v294
        %448 = vrot.lane.b32.xlu0 %v444, 127
        %v449 = vpop.permute.xlu0 %448
        %450 = vrot.lane.b32.xlu0 %v445, 127
        %v451 = vpop.permute.xlu0 %450
        %v454 = vadd.f32 %v342, %v449
        %v455 = vadd.f32 %v343, %v451
        %s456 = sld [smem:[#allocation8 + $0x2]]
        %v457 = vstv %s456
        %v458 = vmul.f32 %v457, %v293
        %v459 = vmul.f32 %v457, %v294
        %462 = vrot.lane.b32.xlu0 %v458, 126
        %v463 = vpop.permute.xlu0 %462
        %464 = vrot.lane.b32.xlu0 %v459, 126
        %v465 = vpop.permute.xlu0 %464
        %v468 = vadd.f32 %v356, %v463
        %v469 = vadd.f32 %v357, %v465
        %s470 = sld [smem:[#allocation8 + $0x26]]
        %v471 = vstv %s470
        %v472 = vmul.f32 %v471, %v293
        %v473 = vmul.f32 %v471, %v294
        %476 = vrot.lane.b32.xlu0 %v472, 126
        %v477 = vpop.permute.xlu0 %476
        %478 = vrot.lane.b32.xlu0 %v473, 126
        %v479 = vpop.permute.xlu0 %478
        %v482 = vadd.f32 %v370, %v477
        %v483 = vadd.f32 %v371, %v479
        %s484 = sld [smem:[#allocation8 + $0x4a]]
        %v485 = vstv %s484
        %v486 = vmul.f32 %v485, %v293
        %v487 = vmul.f32 %v485, %v294
        %490 = vrot.lane.b32.xlu0 %v486, 126
        %v491 = vpop.permute.xlu0 %490
        %492 = vrot.lane.b32.xlu0 %v487, 126
        %v493 = vpop.permute.xlu0 %492
        %v496 = vadd.f32 %v384, %v491
        %v497 = vadd.f32 %v385, %v493
        %s498 = sld [smem:[#allocation8 + $0x6e]]
        %v499 = vstv %s498
        %v500 = vmul.f32 %v499, %v293
        %v501 = vmul.f32 %v499, %v294
        %504 = vrot.lane.b32.xlu0 %v500, 126
        %v505 = vpop.permute.xlu0 %504
        %506 = vrot.lane.b32.xlu0 %v501, 126
        %v507 = vpop.permute.xlu0 %506
        %v510 = vadd.f32 %v398, %v505
        %v511 = vadd.f32 %v399, %v507
        %s512 = sld [smem:[#allocation8 + $0x92]]
        %v513 = vstv %s512
        %v514 = vmul.f32 %v513, %v293
        %v515 = vmul.f32 %v513, %v294
        %518 = vrot.lane.b32.xlu0 %v514, 126
        %v519 = vpop.permute.xlu0 %518
        %520 = vrot.lane.b32.xlu0 %v515, 126
        %v521 = vpop.permute.xlu0 %520
        %v524 = vadd.f32 %v412, %v519
        %v525 = vadd.f32 %v413, %v521
        %s526 = sld [smem:[#allocation8 + $0xb6]]
        %v527 = vstv %s526
        %v528 = vmul.f32 %v527, %v293
        %v529 = vmul.f32 %v527, %v294
        %532 = vrot.lane.b32.xlu0 %v528, 126
        %v533 = vpop.permute.xlu0 %532
        %534 = vrot.lane.b32.xlu0 %v529, 126
        %v535 = vpop.permute.xlu0 %534
        %v538 = vadd.f32 %v426, %v533
        %v539 = vadd.f32 %v427, %v535
        %s540 = sld [smem:[#allocation8 + $0xda]]
        %v541 = vstv %s540
        %v542 = vmul.f32 %v541, %v293
        %v543 = vmul.f32 %v541, %v294
        %546 = vrot.lane.b32.xlu0 %v542, 126
        %v547 = vpop.permute.xlu0 %546
        %548 = vrot.lane.b32.xlu0 %v543, 126
        %v549 = vpop.permute.xlu0 %548
        %v552 = vadd.f32 %v440, %v547
        %v553 = vadd.f32 %v441, %v549
        %s554 = sld [smem:[#allocation8 + $0xfe]]
        %v555 = vstv %s554
        %v556 = vmul.f32 %v555, %v293
        %v557 = vmul.f32 %v555, %v294
        %560 = vrot.lane.b32.xlu0 %v556, 126
        %v561 = vpop.permute.xlu0 %560
        %562 = vrot.lane.b32.xlu0 %v557, 126
        %v563 = vpop.permute.xlu0 %562
        %v566 = vadd.f32 %v454, %v561
        %v567 = vadd.f32 %v455, %v563
        %s568 = sld [smem:[#allocation8 + $0x3]]
        %v569 = vstv %s568
        %v570 = vmul.f32 %v569, %v293
        %v571 = vmul.f32 %v569, %v294
        %v572 = vmul.f32 %v569, %v295
        %vm576 = vcmask 1046528
        %v577 = vrot.slane %v570, 1
        %v578 = vrot.slane %v571, 1
        %v579 = vsel %vm576, %v577, %v578
        %v580 = vrot.slane %v572, 1
        %v581 = vsel %vm576, %v578, %v580
        %v584 = vadd.f32 %v468, %v579
        %v585 = vadd.f32 %v469, %v581
        %s586 = sld [smem:[#allocation8 + $0x27]]
        %v587 = vstv %s586
        %v588 = vmul.f32 %v587, %v293
        %v589 = vmul.f32 %v587, %v294
        %v590 = vmul.f32 %v587, %v295
        %v594 = vrot.slane %v588, 1
        %v595 = vrot.slane %v589, 1
        %v596 = vsel %vm576, %v594, %v595
        %v597 = vrot.slane %v590, 1
        %v598 = vsel %vm576, %v595, %v597
        %v601 = vadd.f32 %v482, %v596
        %v602 = vadd.f32 %v483, %v598
        %s603 = sld [smem:[#allocation8 + $0x4b]]
        %v604 = vstv %s603
        %v605 = vmul.f32 %v604, %v293
        %v606 = vmul.f32 %v604, %v294
        %v607 = vmul.f32 %v604, %v295
        %v611 = vrot.slane %v605, 1
        %v612 = vrot.slane %v606, 1
        %v613 = vsel %vm576, %v611, %v612
        %v614 = vrot.slane %v607, 1
        %v615 = vsel %vm576, %v612, %v614
        %v618 = vadd.f32 %v496, %v613
        %v619 = vadd.f32 %v497, %v615
        %s620 = sld [smem:[#allocation8 + $0x6f]]
        %v621 = vstv %s620
        %v622 = vmul.f32 %v621, %v293
        %v623 = vmul.f32 %v621, %v294
        %v624 = vmul.f32 %v621, %v295
        %v628 = vrot.slane %v622, 1
        %v629 = vrot.slane %v623, 1
        %v630 = vsel %vm576, %v628, %v629
        %v631 = vrot.slane %v624, 1
        %v632 = vsel %vm576, %v629, %v631
        %v635 = vadd.f32 %v510, %v630
        %v636 = vadd.f32 %v511, %v632
        %s637 = sld [smem:[#allocation8 + $0x93]]
        %v638 = vstv %s637
        %v639 = vmul.f32 %v638, %v293
        %v640 = vmul.f32 %v638, %v294
        %v641 = vmul.f32 %v638, %v295
        %v645 = vrot.slane %v639, 1
        %v646 = vrot.slane %v640, 1
        %v647 = vsel %vm576, %v645, %v646
        %v648 = vrot.slane %v641, 1
        %v649 = vsel %vm576, %v646, %v648
        %v652 = vadd.f32 %v524, %v647
        %v653 = vadd.f32 %v525, %v649
        %s654 = sld [smem:[#allocation8 + $0xb7]]
        %v655 = vstv %s654
        %v656 = vmul.f32 %v655, %v293
        %v657 = vmul.f32 %v655, %v294
        %v658 = vmul.f32 %v655, %v295
        %v662 = vrot.slane %v656, 1
        %v663 = vrot.slane %v657, 1
        %v664 = vsel %vm576, %v662, %v663
        %v665 = vrot.slane %v658, 1
        %v666 = vsel %vm576, %v663, %v665
        %v669 = vadd.f32 %v538, %v664
        %v670 = vadd.f32 %v539, %v666
        %s671 = sld [smem:[#allocation8 + $0xdb]]
        %v672 = vstv %s671
        %v673 = vmul.f32 %v672, %v293
        %v674 = vmul.f32 %v672, %v294
        %v675 = vmul.f32 %v672, %v295
        %v679 = vrot.slane %v673, 1
        %v680 = vrot.slane %v674, 1
        %v681 = vsel %vm576, %v679, %v680
        %v682 = vrot.slane %v675, 1
        %v683 = vsel %vm576, %v680, %v682
        %v686 = vadd.f32 %v552, %v681
        %v687 = vadd.f32 %v553, %v683
        %s688 = sld [smem:[#allocation8 + $0xff]]
        %v689 = vstv %s688
        %v690 = vmul.f32 %v689, %v293
        %v691 = vmul.f32 %v689, %v294
        %v692 = vmul.f32 %v689, %v295
        %v696 = vrot.slane %v690, 1
        %v697 = vrot.slane %v691, 1
        %v698 = vsel %vm576, %v696, %v697
        %v699 = vrot.slane %v692, 1
        %v700 = vsel %vm576, %v697, %v699
        %v703 = vadd.f32 %v566, %v698
        %v704 = vadd.f32 %v567, %v700
        %s705 = sld [smem:[#allocation8 + $0x4]]
        %v706 = vstv %s705
        %v707 = vmul.f32 %v706, %v293
        %v708 = vmul.f32 %v706, %v294
        %v709 = vmul.f32 %v706, %v295
        %v713 = vrot.slane %v707, 1
        %v714 = vrot.slane %v708, 1
        %v715 = vsel %vm576, %v713, %v714
        %v716 = vrot.slane %v709, 1
        %v717 = vsel %vm576, %v714, %v716
        %718 = vrot.lane.b32.xlu0 %v715, 127
        %v719 = vpop.permute.xlu0 %718
        %720 = vrot.lane.b32.xlu0 %v717, 127
        %v721 = vpop.permute.xlu0 %720
        %v724 = vadd.f32 %v584, %v719
        %v725 = vadd.f32 %v585, %v721
        %s726 = sld [smem:[#allocation8 + $0x28]]
        %v727 = vstv %s726
        %v728 = vmul.f32 %v727, %v293
        %v729 = vmul.f32 %v727, %v294
        %v730 = vmul.f32 %v727, %v295
        %v734 = vrot.slane %v728, 1
        %v735 = vrot.slane %v729, 1
        %v736 = vsel %vm576, %v734, %v735
        %v737 = vrot.slane %v730, 1
        %v738 = vsel %vm576, %v735, %v737
        %739 = vrot.lane.b32.xlu0 %v736, 127
        %v740 = vpop.permute.xlu0 %739
        %741 = vrot.lane.b32.xlu0 %v738, 127
        %v742 = vpop.permute.xlu0 %741
        %v745 = vadd.f32 %v601, %v740
        %v746 = vadd.f32 %v602, %v742
        %s747 = sld [smem:[#allocation8 + $0x4c]]
        %v748 = vstv %s747
        %v749 = vmul.f32 %v748, %v293
        %v750 = vmul.f32 %v748, %v294
        %v751 = vmul.f32 %v748, %v295
        %v755 = vrot.slane %v749, 1
        %v756 = vrot.slane %v750, 1
        %v757 = vsel %vm576, %v755, %v756
        %v758 = vrot.slane %v751, 1
        %v759 = vsel %vm576, %v756, %v758
        %760 = vrot.lane.b32.xlu0 %v757, 127
        %v761 = vpop.permute.xlu0 %760
        %762 = vrot.lane.b32.xlu0 %v759, 127
        %v763 = vpop.permute.xlu0 %762
        %v766 = vadd.f32 %v618, %v761
        %v767 = vadd.f32 %v619, %v763
        %s768 = sld [smem:[#allocation8 + $0x70]]
        %v769 = vstv %s768
        %v770 = vmul.f32 %v769, %v293
        %v771 = vmul.f32 %v769, %v294
        %v772 = vmul.f32 %v769, %v295
        %v776 = vrot.slane %v770, 1
        %v777 = vrot.slane %v771, 1
        %v778 = vsel %vm576, %v776, %v777
        %v779 = vrot.slane %v772, 1
        %v780 = vsel %vm576, %v777, %v779
        %781 = vrot.lane.b32.xlu0 %v778, 127
        %v782 = vpop.permute.xlu0 %781
        %783 = vrot.lane.b32.xlu0 %v780, 127
        %v784 = vpop.permute.xlu0 %783
        %v787 = vadd.f32 %v635, %v782
        %v788 = vadd.f32 %v636, %v784
        %s789 = sld [smem:[#allocation8 + $0x94]]
        %v790 = vstv %s789
        %v791 = vmul.f32 %v790, %v293
        %v792 = vmul.f32 %v790, %v294
        %v793 = vmul.f32 %v790, %v295
        %v797 = vrot.slane %v791, 1
        %v798 = vrot.slane %v792, 1
        %v799 = vsel %vm576, %v797, %v798
        %v800 = vrot.slane %v793, 1
        %v801 = vsel %vm576, %v798, %v800
        %802 = vrot.lane.b32.xlu0 %v799, 127
        %v803 = vpop.permute.xlu0 %802
        %804 = vrot.lane.b32.xlu0 %v801, 127
        %v805 = vpop.permute.xlu0 %804
        %v808 = vadd.f32 %v652, %v803
        %v809 = vadd.f32 %v653, %v805
        %s810 = sld [smem:[#allocation8 + $0xb8]]
        %v811 = vstv %s810
        %v812 = vmul.f32 %v811, %v293
        %v813 = vmul.f32 %v811, %v294
        %v814 = vmul.f32 %v811, %v295
        %v818 = vrot.slane %v812, 1
        %v819 = vrot.slane %v813, 1
        %v820 = vsel %vm576, %v818, %v819
        %v821 = vrot.slane %v814, 1
        %v822 = vsel %vm576, %v819, %v821
        %823 = vrot.lane.b32.xlu0 %v820, 127
        %v824 = vpop.permute.xlu0 %823
        %825 = vrot.lane.b32.xlu0 %v822, 127
        %v826 = vpop.permute.xlu0 %825
        %v829 = vadd.f32 %v669, %v824
        %v830 = vadd.f32 %v670, %v826
        %s831 = sld [smem:[#allocation8 + $0xdc]]
        %v832 = vstv %s831
        %v833 = vmul.f32 %v832, %v293
        %v834 = vmul.f32 %v832, %v294
        %v835 = vmul.f32 %v832, %v295
        %v839 = vrot.slane %v833, 1
        %v840 = vrot.slane %v834, 1
        %v841 = vsel %vm576, %v839, %v840
        %v842 = vrot.slane %v835, 1
        %v843 = vsel %vm576, %v840, %v842
        %844 = vrot.lane.b32.xlu0 %v841, 127
        %v845 = vpop.permute.xlu0 %844
        %846 = vrot.lane.b32.xlu0 %v843, 127
        %v847 = vpop.permute.xlu0 %846
        %v850 = vadd.f32 %v686, %v845
        %v851 = vadd.f32 %v687, %v847
        %s852 = sld [smem:[#allocation8 + $0x100]]
        %v853 = vstv %s852
        %v854 = vmul.f32 %v853, %v293
        %v855 = vmul.f32 %v853, %v294
        %v856 = vmul.f32 %v853, %v295
        %v860 = vrot.slane %v854, 1
        %v861 = vrot.slane %v855, 1
        %v862 = vsel %vm576, %v860, %v861
        %v863 = vrot.slane %v856, 1
        %v864 = vsel %vm576, %v861, %v863
        %865 = vrot.lane.b32.xlu0 %v862, 127
        %v866 = vpop.permute.xlu0 %865
        %867 = vrot.lane.b32.xlu0 %v864, 127
        %v868 = vpop.permute.xlu0 %867
        %v871 = vadd.f32 %v703, %v866
        %v872 = vadd.f32 %v704, %v868
        %s873 = sld [smem:[#allocation8 + $0x5]]
        %v874 = vstv %s873
        %v875 = vmul.f32 %v874, %v293
        %v876 = vmul.f32 %v874, %v294
        %v877 = vmul.f32 %v874, %v295
        %v881 = vrot.slane %v875, 1
        %v882 = vrot.slane %v876, 1
        %v883 = vsel %vm576, %v881, %v882
        %v884 = vrot.slane %v877, 1
        %v885 = vsel %vm576, %v882, %v884
        %886 = vrot.lane.b32.xlu0 %v883, 126
        %v887 = vpop.permute.xlu0 %886
        %888 = vrot.lane.b32.xlu0 %v885, 126
        %v889 = vpop.permute.xlu0 %888
        %v892 = vadd.f32 %v724, %v887
        %v893 = vadd.f32 %v725, %v889
        %s894 = sld [smem:[#allocation8 + $0x29]]
        %v895 = vstv %s894
        %v896 = vmul.f32 %v895, %v293
        %v897 = vmul.f32 %v895, %v294
        %v898 = vmul.f32 %v895, %v295
        %v902 = vrot.slane %v896, 1
        %v903 = vrot.slane %v897, 1
        %v904 = vsel %vm576, %v902, %v903
        %v905 = vrot.slane %v898, 1
        %v906 = vsel %vm576, %v903, %v905
        %907 = vrot.lane.b32.xlu0 %v904, 126
        %v908 = vpop.permute.xlu0 %907
        %909 = vrot.lane.b32.xlu0 %v906, 126
        %v910 = vpop.permute.xlu0 %909
        %v913 = vadd.f32 %v745, %v908
        %v914 = vadd.f32 %v746, %v910
        %s915 = sld [smem:[#allocation8 + $0x4d]]
        %v916 = vstv %s915
        %v917 = vmul.f32 %v916, %v293
        %v918 = vmul.f32 %v916, %v294
        %v919 = vmul.f32 %v916, %v295
        %v923 = vrot.slane %v917, 1
        %v924 = vrot.slane %v918, 1
        %v925 = vsel %vm576, %v923, %v924
        %v926 = vrot.slane %v919, 1
        %v927 = vsel %vm576, %v924, %v926
        %928 = vrot.lane.b32.xlu0 %v925, 126
        %v929 = vpop.permute.xlu0 %928
        %930 = vrot.lane.b32.xlu0 %v927, 126
        %v931 = vpop.permute.xlu0 %930
        %v934 = vadd.f32 %v766, %v929
        %v935 = vadd.f32 %v767, %v931
        %s936 = sld [smem:[#allocation8 + $0x71]]
        %v937 = vstv %s936
        %v938 = vmul.f32 %v937, %v293
        %v939 = vmul.f32 %v937, %v294
        %v940 = vmul.f32 %v937, %v295
        %v944 = vrot.slane %v938, 1
        %v945 = vrot.slane %v939, 1
        %v946 = vsel %vm576, %v944, %v945
        %v947 = vrot.slane %v940, 1
        %v948 = vsel %vm576, %v945, %v947
        %949 = vrot.lane.b32.xlu0 %v946, 126
        %v950 = vpop.permute.xlu0 %949
        %951 = vrot.lane.b32.xlu0 %v948, 126
        %v952 = vpop.permute.xlu0 %951
        %v955 = vadd.f32 %v787, %v950
        %v956 = vadd.f32 %v788, %v952
        %s957 = sld [smem:[#allocation8 + $0x95]]
        %v958 = vstv %s957
        %v959 = vmul.f32 %v958, %v293
        %v960 = vmul.f32 %v958, %v294
        %v961 = vmul.f32 %v958, %v295
        %v965 = vrot.slane %v959, 1
        %v966 = vrot.slane %v960, 1
        %v967 = vsel %vm576, %v965, %v966
        %v968 = vrot.slane %v961, 1
        %v969 = vsel %vm576, %v966, %v968
        %970 = vrot.lane.b32.xlu0 %v967, 126
        %v971 = vpop.permute.xlu0 %970
        %972 = vrot.lane.b32.xlu0 %v969, 126
        %v973 = vpop.permute.xlu0 %972
        %v976 = vadd.f32 %v808, %v971
        %v977 = vadd.f32 %v809, %v973
        %s978 = sld [smem:[#allocation8 + $0xb9]]
        %v979 = vstv %s978
        %v980 = vmul.f32 %v979, %v293
        %v981 = vmul.f32 %v979, %v294
        %v982 = vmul.f32 %v979, %v295
        %v986 = vrot.slane %v980, 1
        %v987 = vrot.slane %v981, 1
        %v988 = vsel %vm576, %v986, %v987
        %v989 = vrot.slane %v982, 1
        %v990 = vsel %vm576, %v987, %v989
        %991 = vrot.lane.b32.xlu0 %v988, 126
        %v992 = vpop.permute.xlu0 %991
        %993 = vrot.lane.b32.xlu0 %v990, 126
        %v994 = vpop.permute.xlu0 %993
        %v997 = vadd.f32 %v829, %v992
        %v998 = vadd.f32 %v830, %v994
        %s999 = sld [smem:[#allocation8 + $0xdd]]
        %v1000 = vstv %s999
        %v1001 = vmul.f32 %v1000, %v293
        %v1002 = vmul.f32 %v1000, %v294
        %v1003 = vmul.f32 %v1000, %v295
        %v1007 = vrot.slane %v1001, 1
        %v1008 = vrot.slane %v1002, 1
        %v1009 = vsel %vm576, %v1007, %v1008
        %v1010 = vrot.slane %v1003, 1
        %v1011 = vsel %vm576, %v1008, %v1010
        %1012 = vrot.lane.b32.xlu0 %v1009, 126
        %v1013 = vpop.permute.xlu0 %1012
        %1014 = vrot.lane.b32.xlu0 %v1011, 126
        %v1015 = vpop.permute.xlu0 %1014
        %v1018 = vadd.f32 %v850, %v1013
        %v1019 = vadd.f32 %v851, %v1015
        %s1020 = sld [smem:[#allocation8 + $0x101]]
        %v1021 = vstv %s1020
        %v1022 = vmul.f32 %v1021, %v293
        %v1023 = vmul.f32 %v1021, %v294
        %v1024 = vmul.f32 %v1021, %v295
        %v1028 = vrot.slane %v1022, 1
        %v1029 = vrot.slane %v1023, 1
        %v1030 = vsel %vm576, %v1028, %v1029
        %v1031 = vrot.slane %v1024, 1
        %v1032 = vsel %vm576, %v1029, %v1031
        %1033 = vrot.lane.b32.xlu0 %v1030, 126
        %v1034 = vpop.permute.xlu0 %1033
        %1035 = vrot.lane.b32.xlu0 %v1032, 126
        %v1036 = vpop.permute.xlu0 %1035
        %v1039 = vadd.f32 %v871, %v1034
        %v1040 = vadd.f32 %v872, %v1036
        %s1041 = sld [smem:[#allocation8 + $0x6]]
        %v1042 = vstv %s1041
        %v1043 = vmul.f32 %v1042, %v293
        %v1044 = vmul.f32 %v1042, %v294
        %v1045 = vmul.f32 %v1042, %v295
        %vm1049 = vcmask 1045504
        %v1050 = vrot.slane %v1043, 2
        %v1051 = vrot.slane %v1044, 2
        %v1052 = vsel %vm1049, %v1050, %v1051
        %v1053 = vrot.slane %v1045, 2
        %v1054 = vsel %vm1049, %v1051, %v1053
        %v1057 = vadd.f32 %v892, %v1052
        %v1058 = vadd.f32 %v893, %v1054
        %s1059 = sld [smem:[#allocation8 + $0x2a]]
        %v1060 = vstv %s1059
        %v1061 = vmul.f32 %v1060, %v293
        %v1062 = vmul.f32 %v1060, %v294
        %v1063 = vmul.f32 %v1060, %v295
        %v1067 = vrot.slane %v1061, 2
        %v1068 = vrot.slane %v1062, 2
        %v1069 = vsel %vm1049, %v1067, %v1068
        %v1070 = vrot.slane %v1063, 2
        %v1071 = vsel %vm1049, %v1068, %v1070
        %v1074 = vadd.f32 %v913, %v1069
        %v1075 = vadd.f32 %v914, %v1071
        %s1076 = sld [smem:[#allocation8 + $0x4e]]
        %v1077 = vstv %s1076
        %v1078 = vmul.f32 %v1077, %v293
        %v1079 = vmul.f32 %v1077, %v294
        %v1080 = vmul.f32 %v1077, %v295
        %v1084 = vrot.slane %v1078, 2
        %v1085 = vrot.slane %v1079, 2
        %v1086 = vsel %vm1049, %v1084, %v1085
        %v1087 = vrot.slane %v1080, 2
        %v1088 = vsel %vm1049, %v1085, %v1087
        %v1091 = vadd.f32 %v934, %v1086
        %v1092 = vadd.f32 %v935, %v1088
        %s1093 = sld [smem:[#allocation8 + $0x72]]
        %v1094 = vstv %s1093
        %v1095 = vmul.f32 %v1094, %v293
        %v1096 = vmul.f32 %v1094, %v294
        %v1097 = vmul.f32 %v1094, %v295
        %v1101 = vrot.slane %v1095, 2
        %v1102 = vrot.slane %v1096, 2
        %v1103 = vsel %vm1049, %v1101, %v1102
        %v1104 = vrot.slane %v1097, 2
        %v1105 = vsel %vm1049, %v1102, %v1104
        %v1108 = vadd.f32 %v955, %v1103
        %v1109 = vadd.f32 %v956, %v1105
        %s1110 = sld [smem:[#allocation8 + $0x96]]
        %v1111 = vstv %s1110
        %v1112 = vmul.f32 %v1111, %v293
        %v1113 = vmul.f32 %v1111, %v294
        %v1114 = vmul.f32 %v1111, %v295
        %v1118 = vrot.slane %v1112, 2
        %v1119 = vrot.slane %v1113, 2
        %v1120 = vsel %vm1049, %v1118, %v1119
        %v1121 = vrot.slane %v1114, 2
        %v1122 = vsel %vm1049, %v1119, %v1121
        %v1125 = vadd.f32 %v976, %v1120
        %v1126 = vadd.f32 %v977, %v1122
        %s1127 = sld [smem:[#allocation8 + $0xba]]
        %v1128 = vstv %s1127
        %v1129 = vmul.f32 %v1128, %v293
        %v1130 = vmul.f32 %v1128, %v294
        %v1131 = vmul.f32 %v1128, %v295
        %v1135 = vrot.slane %v1129, 2
        %v1136 = vrot.slane %v1130, 2
        %v1137 = vsel %vm1049, %v1135, %v1136
        %v1138 = vrot.slane %v1131, 2
        %v1139 = vsel %vm1049, %v1136, %v1138
        %v1142 = vadd.f32 %v997, %v1137
        %v1143 = vadd.f32 %v998, %v1139
        %s1144 = sld [smem:[#allocation8 + $0xde]]
        %v1145 = vstv %s1144
        %v1146 = vmul.f32 %v1145, %v293
        %v1147 = vmul.f32 %v1145, %v294
        %v1148 = vmul.f32 %v1145, %v295
        %v1152 = vrot.slane %v1146, 2
        %v1153 = vrot.slane %v1147, 2
        %v1154 = vsel %vm1049, %v1152, %v1153
        %v1155 = vrot.slane %v1148, 2
        %v1156 = vsel %vm1049, %v1153, %v1155
        %v1159 = vadd.f32 %v1018, %v1154
        %v1160 = vadd.f32 %v1019, %v1156
        %s1161 = sld [smem:[#allocation8 + $0x102]]
        %v1162 = vstv %s1161
        %v1163 = vmul.f32 %v1162, %v293
        %v1164 = vmul.f32 %v1162, %v294
        %v1165 = vmul.f32 %v1162, %v295
        %v1169 = vrot.slane %v1163, 2
        %v1170 = vrot.slane %v1164, 2
        %v1171 = vsel %vm1049, %v1169, %v1170
        %v1172 = vrot.slane %v1165, 2
        %v1173 = vsel %vm1049, %v1170, %v1172
        %v1176 = vadd.f32 %v1039, %v1171
        %v1177 = vadd.f32 %v1040, %v1173
        %s1178 = sld [smem:[#allocation8 + $0x7]]
        %v1179 = vstv %s1178
        %v1180 = vmul.f32 %v1179, %v293
        %v1181 = vmul.f32 %v1179, %v294
        %v1182 = vmul.f32 %v1179, %v295
        %v1186 = vrot.slane %v1180, 2
        %v1187 = vrot.slane %v1181, 2
        %v1188 = vsel %vm1049, %v1186, %v1187
        %v1189 = vrot.slane %v1182, 2
        %v1190 = vsel %vm1049, %v1187, %v1189
        %1191 = vrot.lane.b32.xlu0 %v1188, 127
        %v1192 = vpop.permute.xlu0 %1191
        %1193 = vrot.lane.b32.xlu0 %v1190, 127
        %v1194 = vpop.permute.xlu0 %1193
        %v1197 = vadd.f32 %v1057, %v1192
        %v1198 = vadd.f32 %v1058, %v1194
        %s1199 = sld [smem:[#allocation8 + $0x2b]]
        %v1200 = vstv %s1199
        %v1201 = vmul.f32 %v1200, %v293
        %v1202 = vmul.f32 %v1200, %v294
        %v1203 = vmul.f32 %v1200, %v295
        %v1207 = vrot.slane %v1201, 2
        %v1208 = vrot.slane %v1202, 2
        %v1209 = vsel %vm1049, %v1207, %v1208
        %v1210 = vrot.slane %v1203, 2
        %v1211 = vsel %vm1049, %v1208, %v1210
        %1212 = vrot.lane.b32.xlu0 %v1209, 127
        %v1213 = vpop.permute.xlu0 %1212
        %1214 = vrot.lane.b32.xlu0 %v1211, 127
        %v1215 = vpop.permute.xlu0 %1214
        %v1218 = vadd.f32 %v1074, %v1213
        %v1219 = vadd.f32 %v1075, %v1215
        %s1220 = sld [smem:[#allocation8 + $0x4f]]
        %v1221 = vstv %s1220
        %v1222 = vmul.f32 %v1221, %v293
        %v1223 = vmul.f32 %v1221, %v294
        %v1224 = vmul.f32 %v1221, %v295
        %v1228 = vrot.slane %v1222, 2
        %v1229 = vrot.slane %v1223, 2
        %v1230 = vsel %vm1049, %v1228, %v1229
        %v1231 = vrot.slane %v1224, 2
        %v1232 = vsel %vm1049, %v1229, %v1231
        %1233 = vrot.lane.b32.xlu0 %v1230, 127
        %v1234 = vpop.permute.xlu0 %1233
        %1235 = vrot.lane.b32.xlu0 %v1232, 127
        %v1236 = vpop.permute.xlu0 %1235
        %v1239 = vadd.f32 %v1091, %v1234
        %v1240 = vadd.f32 %v1092, %v1236
        %s1241 = sld [smem:[#allocation8 + $0x73]]
        %v1242 = vstv %s1241
        %v1243 = vmul.f32 %v1242, %v293
        %v1244 = vmul.f32 %v1242, %v294
        %v1245 = vmul.f32 %v1242, %v295
        %v1249 = vrot.slane %v1243, 2
        %v1250 = vrot.slane %v1244, 2
        %v1251 = vsel %vm1049, %v1249, %v1250
        %v1252 = vrot.slane %v1245, 2
        %v1253 = vsel %vm1049, %v1250, %v1252
        %1254 = vrot.lane.b32.xlu0 %v1251, 127
        %v1255 = vpop.permute.xlu0 %1254
        %1256 = vrot.lane.b32.xlu0 %v1253, 127
        %v1257 = vpop.permute.xlu0 %1256
        %v1260 = vadd.f32 %v1108, %v1255
        %v1261 = vadd.f32 %v1109, %v1257
        %s1262 = sld [smem:[#allocation8 + $0x97]]
        %v1263 = vstv %s1262
        %v1264 = vmul.f32 %v1263, %v293
        %v1265 = vmul.f32 %v1263, %v294
        %v1266 = vmul.f32 %v1263, %v295
        %v1270 = vrot.slane %v1264, 2
        %v1271 = vrot.slane %v1265, 2
        %v1272 = vsel %vm1049, %v1270, %v1271
        %v1273 = vrot.slane %v1266, 2
        %v1274 = vsel %vm1049, %v1271, %v1273
        %1275 = vrot.lane.b32.xlu0 %v1272, 127
        %v1276 = vpop.permute.xlu0 %1275
        %1277 = vrot.lane.b32.xlu0 %v1274, 127
        %v1278 = vpop.permute.xlu0 %1277
        %v1281 = vadd.f32 %v1125, %v1276
        %v1282 = vadd.f32 %v1126, %v1278
        %s1283 = sld [smem:[#allocation8 + $0xbb]]
        %v1284 = vstv %s1283
        %v1285 = vmul.f32 %v1284, %v293
        %v1286 = vmul.f32 %v1284, %v294
        %v1287 = vmul.f32 %v1284, %v295
        %v1291 = vrot.slane %v1285, 2
        %v1292 = vrot.slane %v1286, 2
        %v1293 = vsel %vm1049, %v1291, %v1292
        %v1294 = vrot.slane %v1287, 2
        %v1295 = vsel %vm1049, %v1292, %v1294
        %1296 = vrot.lane.b32.xlu0 %v1293, 127
        %v1297 = vpop.permute.xlu0 %1296
        %1298 = vrot.lane.b32.xlu0 %v1295, 127
        %v1299 = vpop.permute.xlu0 %1298
        %v1302 = vadd.f32 %v1142, %v1297
        %v1303 = vadd.f32 %v1143, %v1299
        %s1304 = sld [smem:[#allocation8 + $0xdf]]
        %v1305 = vstv %s1304
        %v1306 = vmul.f32 %v1305, %v293
        %v1307 = vmul.f32 %v1305, %v294
        %v1308 = vmul.f32 %v1305, %v295
        %v1312 = vrot.slane %v1306, 2
        %v1313 = vrot.slane %v1307, 2
        %v1314 = vsel %vm1049, %v1312, %v1313
        %v1315 = vrot.slane %v1308, 2
        %v1316 = vsel %vm1049, %v1313, %v1315
        %1317 = vrot.lane.b32.xlu0 %v1314, 127
        %v1318 = vpop.permute.xlu0 %1317
        %1319 = vrot.lane.b32.xlu0 %v1316, 127
        %v1320 = vpop.permute.xlu0 %1319
        %v1323 = vadd.f32 %v1159, %v1318
        %v1324 = vadd.f32 %v1160, %v1320
        %s1325 = sld [smem:[#allocation8 + $0x103]]
        %v1326 = vstv %s1325
        %v1327 = vmul.f32 %v1326, %v293
        %v1328 = vmul.f32 %v1326, %v294
        %v1329 = vmul.f32 %v1326, %v295
        %v1333 = vrot.slane %v1327, 2
        %v1334 = vrot.slane %v1328, 2
        %v1335 = vsel %vm1049, %v1333, %v1334
        %v1336 = vrot.slane %v1329, 2
        %v1337 = vsel %vm1049, %v1334, %v1336
        %1338 = vrot.lane.b32.xlu0 %v1335, 127
        %v1339 = vpop.permute.xlu0 %1338
        %1340 = vrot.lane.b32.xlu0 %v1337, 127
        %v1341 = vpop.permute.xlu0 %1340
        %v1344 = vadd.f32 %v1176, %v1339
        %v1345 = vadd.f32 %v1177, %v1341
        %s1346 = sld [smem:[#allocation8 + $0x8]]
        %v1347 = vstv %s1346
        %v1348 = vmul.f32 %v1347, %v293
        %v1349 = vmul.f32 %v1347, %v294
        %v1350 = vmul.f32 %v1347, %v295
        %v1354 = vrot.slane %v1348, 2
        %v1355 = vrot.slane %v1349, 2
        %v1356 = vsel %vm1049, %v1354, %v1355
        %v1357 = vrot.slane %v1350, 2
        %v1358 = vsel %vm1049, %v1355, %v1357
        %1359 = vrot.lane.b32.xlu0 %v1356, 126
        %v1360 = vpop.permute.xlu0 %1359
        %1361 = vrot.lane.b32.xlu0 %v1358, 126
        %v1362 = vpop.permute.xlu0 %1361
        %v1365 = vadd.f32 %v1197, %v1360
        %v1366 = vadd.f32 %v1198, %v1362
        %s1367 = sld [smem:[#allocation8 + $0x2c]]
        %v1368 = vstv %s1367
        %v1369 = vmul.f32 %v1368, %v293
        %v1370 = vmul.f32 %v1368, %v294
        %v1371 = vmul.f32 %v1368, %v295
        %v1375 = vrot.slane %v1369, 2
        %v1376 = vrot.slane %v1370, 2
        %v1377 = vsel %vm1049, %v1375, %v1376
        %v1378 = vrot.slane %v1371, 2
        %v1379 = vsel %vm1049, %v1376, %v1378
        %1380 = vrot.lane.b32.xlu0 %v1377, 126
        %v1381 = vpop.permute.xlu0 %1380
        %1382 = vrot.lane.b32.xlu0 %v1379, 126
        %v1383 = vpop.permute.xlu0 %1382
        %v1386 = vadd.f32 %v1218, %v1381
        %v1387 = vadd.f32 %v1219, %v1383
        %s1388 = sld [smem:[#allocation8 + $0x50]]
        %v1389 = vstv %s1388
        %v1390 = vmul.f32 %v1389, %v293
        %v1391 = vmul.f32 %v1389, %v294
        %v1392 = vmul.f32 %v1389, %v295
        %v1396 = vrot.slane %v1390, 2
        %v1397 = vrot.slane %v1391, 2
        %v1398 = vsel %vm1049, %v1396, %v1397
        %v1399 = vrot.slane %v1392, 2
        %v1400 = vsel %vm1049, %v1397, %v1399
        %1401 = vrot.lane.b32.xlu0 %v1398, 126
        %v1402 = vpop.permute.xlu0 %1401
        %1403 = vrot.lane.b32.xlu0 %v1400, 126
        %v1404 = vpop.permute.xlu0 %1403
        %v1407 = vadd.f32 %v1239, %v1402
        %v1408 = vadd.f32 %v1240, %v1404
        %s1409 = sld [smem:[#allocation8 + $0x74]]
        %v1410 = vstv %s1409
        %v1411 = vmul.f32 %v1410, %v293
        %v1412 = vmul.f32 %v1410, %v294
        %v1413 = vmul.f32 %v1410, %v295
        %v1417 = vrot.slane %v1411, 2
        %v1418 = vrot.slane %v1412, 2
        %v1419 = vsel %vm1049, %v1417, %v1418
        %v1420 = vrot.slane %v1413, 2
        %v1421 = vsel %vm1049, %v1418, %v1420
        %1422 = vrot.lane.b32.xlu0 %v1419, 126
        %v1423 = vpop.permute.xlu0 %1422
        %1424 = vrot.lane.b32.xlu0 %v1421, 126
        %v1425 = vpop.permute.xlu0 %1424
        %v1428 = vadd.f32 %v1260, %v1423
        %v1429 = vadd.f32 %v1261, %v1425
        %s1430 = sld [smem:[#allocation8 + $0x98]]
        %v1431 = vstv %s1430
        %v1432 = vmul.f32 %v1431, %v293
        %v1433 = vmul.f32 %v1431, %v294
        %v1434 = vmul.f32 %v1431, %v295
        %v1438 = vrot.slane %v1432, 2
        %v1439 = vrot.slane %v1433, 2
        %v1440 = vsel %vm1049, %v1438, %v1439
        %v1441 = vrot.slane %v1434, 2
        %v1442 = vsel %vm1049, %v1439, %v1441
        %1443 = vrot.lane.b32.xlu0 %v1440, 126
        %v1444 = vpop.permute.xlu0 %1443
        %1445 = vrot.lane.b32.xlu0 %v1442, 126
        %v1446 = vpop.permute.xlu0 %1445
        %v1449 = vadd.f32 %v1281, %v1444
        %v1450 = vadd.f32 %v1282, %v1446
        %s1451 = sld [smem:[#allocation8 + $0xbc]]
        %v1452 = vstv %s1451
        %v1453 = vmul.f32 %v1452, %v293
        %v1454 = vmul.f32 %v1452, %v294
        %v1455 = vmul.f32 %v1452, %v295
        %v1459 = vrot.slane %v1453, 2
        %v1460 = vrot.slane %v1454, 2
        %v1461 = vsel %vm1049, %v1459, %v1460
        %v1462 = vrot.slane %v1455, 2
        %v1463 = vsel %vm1049, %v1460, %v1462
        %1464 = vrot.lane.b32.xlu0 %v1461, 126
        %v1465 = vpop.permute.xlu0 %1464
        %1466 = vrot.lane.b32.xlu0 %v1463, 126
        %v1467 = vpop.permute.xlu0 %1466
        %v1470 = vadd.f32 %v1302, %v1465
        %v1471 = vadd.f32 %v1303, %v1467
        %s1472 = sld [smem:[#allocation8 + $0xe0]]
        %v1473 = vstv %s1472
        %v1474 = vmul.f32 %v1473, %v293
        %v1475 = vmul.f32 %v1473, %v294
        %v1476 = vmul.f32 %v1473, %v295
        %v1480 = vrot.slane %v1474, 2
        %v1481 = vrot.slane %v1475, 2
        %v1482 = vsel %vm1049, %v1480, %v1481
        %v1483 = vrot.slane %v1476, 2
        %v1484 = vsel %vm1049, %v1481, %v1483
        %1485 = vrot.lane.b32.xlu0 %v1482, 126
        %v1486 = vpop.permute.xlu0 %1485
        %1487 = vrot.lane.b32.xlu0 %v1484, 126
        %v1488 = vpop.permute.xlu0 %1487
        %v1491 = vadd.f32 %v1323, %v1486
        %v1492 = vadd.f32 %v1324, %v1488
        %s1493 = sld [smem:[#allocation8 + $0x104]]
        %v1494 = vstv %s1493
        %v1495 = vmul.f32 %v1494, %v293
        %v1496 = vmul.f32 %v1494, %v294
        %v1497 = vmul.f32 %v1494, %v295
        %v1501 = vrot.slane %v1495, 2
        %v1502 = vrot.slane %v1496, 2
        %v1503 = vsel %vm1049, %v1501, %v1502
        %v1504 = vrot.slane %v1497, 2
        %v1505 = vsel %vm1049, %v1502, %v1504
        %1506 = vrot.lane.b32.xlu0 %v1503, 126
        %v1507 = vpop.permute.xlu0 %1506
        %1508 = vrot.lane.b32.xlu0 %v1505, 126
        %v1509 = vpop.permute.xlu0 %1508
        %v1512 = vadd.f32 %v1344, %v1507
        %v1513 = vadd.f32 %v1345, %v1509
        %s1514 = scalar_lea.vmem [#allocation2], 24
        %v1515 = vld [vmem:[%s1514] sm:$0xff]
        %v1516 = vld [vmem:[%s1514 + $0x8] sm:$0xff]
        %v1517 = vld [vmem:[%s1514 + $0x10] sm:$0x3]
        %s1518 = sld [smem:[#allocation8 + $0x9]]
        %v1519 = vstv %s1518
        %v1520 = vmul.f32 %v1519, %v1515
        %v1521 = vmul.f32 %v1519, %v1516
        %v1522 = vadd.f32 %v1365, %v1520
        %v1523 = vadd.f32 %v1366, %v1521
        %s1524 = sld [smem:[#allocation8 + $0x2d]]
        %v1525 = vstv %s1524
        %v1526 = vmul.f32 %v1525, %v1515
        %v1527 = vmul.f32 %v1525, %v1516
        %v1528 = vadd.f32 %v1386, %v1526
        %v1529 = vadd.f32 %v1387, %v1527
        %s1530 = sld [smem:[#allocation8 + $0x51]]
        %v1531 = vstv %s1530
        %v1532 = vmul.f32 %v1531, %v1515
        %v1533 = vmul.f32 %v1531, %v1516
        %v1534 = vadd.f32 %v1407, %v1532
        %v1535 = vadd.f32 %v1408, %v1533
        %s1536 = sld [smem:[#allocation8 + $0x75]]
        %v1537 = vstv %s1536
        %v1538 = vmul.f32 %v1537, %v1515
        %v1539 = vmul.f32 %v1537, %v1516
        %v1540 = vadd.f32 %v1428, %v1538
        %v1541 = vadd.f32 %v1429, %v1539
        %s1542 = sld [smem:[#allocation8 + $0x99]]
        %v1543 = vstv %s1542
        %v1544 = vmul.f32 %v1543, %v1515
        %v1545 = vmul.f32 %v1543, %v1516
        %v1546 = vadd.f32 %v1449, %v1544
        %v1547 = vadd.f32 %v1450, %v1545
        %s1548 = sld [smem:[#allocation8 + $0xbd]]
        %v1549 = vstv %s1548
        %v1550 = vmul.f32 %v1549, %v1515
        %v1551 = vmul.f32 %v1549, %v1516
        %v1552 = vadd.f32 %v1470, %v1550
        %v1553 = vadd.f32 %v1471, %v1551
        %s1554 = sld [smem:[#allocation8 + $0xe1]]
        %v1555 = vstv %s1554
        %v1556 = vmul.f32 %v1555, %v1515
        %v1557 = vmul.f32 %v1555, %v1516
        %v1558 = vadd.f32 %v1491, %v1556
        %v1559 = vadd.f32 %v1492, %v1557
        %s1560 = sld [smem:[#allocation8 + $0x105]]
        %v1561 = vstv %s1560
        %v1562 = vmul.f32 %v1561, %v1515
        %v1563 = vmul.f32 %v1561, %v1516
        %v1564 = vadd.f32 %v1512, %v1562
        %v1565 = vadd.f32 %v1513, %v1563
        %s1566 = sld [smem:[#allocation8 + $0xa]]
        %v1567 = vstv %s1566
        %v1568 = vmul.f32 %v1567, %v1515
        %v1569 = vmul.f32 %v1567, %v1516
        %1572 = vrot.lane.b32.xlu0 %v1568, 127
        %v1573 = vpop.permute.xlu0 %1572
        %1574 = vrot.lane.b32.xlu0 %v1569, 127
        %v1575 = vpop.permute.xlu0 %1574
        %v1578 = vadd.f32 %v1522, %v1573
        %v1579 = vadd.f32 %v1523, %v1575
        %s1580 = sld [smem:[#allocation8 + $0x2e]]
        %v1581 = vstv %s1580
        %v1582 = vmul.f32 %v1581, %v1515
        %v1583 = vmul.f32 %v1581, %v1516
        %1586 = vrot.lane.b32.xlu0 %v1582, 127
        %v1587 = vpop.permute.xlu0 %1586
        %1588 = vrot.lane.b32.xlu0 %v1583, 127
        %v1589 = vpop.permute.xlu0 %1588
        %v1592 = vadd.f32 %v1528, %v1587
        %v1593 = vadd.f32 %v1529, %v1589
        %s1594 = sld [smem:[#allocation8 + $0x52]]
        %v1595 = vstv %s1594
        %v1596 = vmul.f32 %v1595, %v1515
        %v1597 = vmul.f32 %v1595, %v1516
        %1600 = vrot.lane.b32.xlu0 %v1596, 127
        %v1601 = vpop.permute.xlu0 %1600
        %1602 = vrot.lane.b32.xlu0 %v1597, 127
        %v1603 = vpop.permute.xlu0 %1602
        %v1606 = vadd.f32 %v1534, %v1601
        %v1607 = vadd.f32 %v1535, %v1603
        %s1608 = sld [smem:[#allocation8 + $0x76]]
        %v1609 = vstv %s1608
        %v1610 = vmul.f32 %v1609, %v1515
        %v1611 = vmul.f32 %v1609, %v1516
        %1614 = vrot.lane.b32.xlu0 %v1610, 127
        %v1615 = vpop.permute.xlu0 %1614
        %1616 = vrot.lane.b32.xlu0 %v1611, 127
        %v1617 = vpop.permute.xlu0 %1616
        %v1620 = vadd.f32 %v1540, %v1615
        %v1621 = vadd.f32 %v1541, %v1617
        %s1622 = sld [smem:[#allocation8 + $0x9a]]
        %v1623 = vstv %s1622
        %v1624 = vmul.f32 %v1623, %v1515
        %v1625 = vmul.f32 %v1623, %v1516
        %1628 = vrot.lane.b32.xlu0 %v1624, 127
        %v1629 = vpop.permute.xlu0 %1628
        %1630 = vrot.lane.b32.xlu0 %v1625, 127
        %v1631 = vpop.permute.xlu0 %1630
        %v1634 = vadd.f32 %v1546, %v1629
        %v1635 = vadd.f32 %v1547, %v1631
        %s1636 = sld [smem:[#allocation8 + $0xbe]]
        %v1637 = vstv %s1636
        %v1638 = vmul.f32 %v1637, %v1515
        %v1639 = vmul.f32 %v1637, %v1516
        %1642 = vrot.lane.b32.xlu0 %v1638, 127
        %v1643 = vpop.permute.xlu0 %1642
        %1644 = vrot.lane.b32.xlu0 %v1639, 127
        %v1645 = vpop.permute.xlu0 %1644
        %v1648 = vadd.f32 %v1552, %v1643
        %v1649 = vadd.f32 %v1553, %v1645
        %s1650 = sld [smem:[#allocation8 + $0xe2]]
        %v1651 = vstv %s1650
        %v1652 = vmul.f32 %v1651, %v1515
        %v1653 = vmul.f32 %v1651, %v1516
        %1656 = vrot.lane.b32.xlu0 %v1652, 127
        %v1657 = vpop.permute.xlu0 %1656
        %1658 = vrot.lane.b32.xlu0 %v1653, 127
        %v1659 = vpop.permute.xlu0 %1658
        %v1662 = vadd.f32 %v1558, %v1657
        %v1663 = vadd.f32 %v1559, %v1659
        %s1664 = sld [smem:[#allocation8 + $0x106]]
        %v1665 = vstv %s1664
        %v1666 = vmul.f32 %v1665, %v1515
        %v1667 = vmul.f32 %v1665, %v1516
        %1670 = vrot.lane.b32.xlu0 %v1666, 127
        %v1671 = vpop.permute.xlu0 %1670
        %1672 = vrot.lane.b32.xlu0 %v1667, 127
        %v1673 = vpop.permute.xlu0 %1672
        %v1676 = vadd.f32 %v1564, %v1671
        %v1677 = vadd.f32 %v1565, %v1673
        %s1678 = sld [smem:[#allocation8 + $0xb]]
        %v1679 = vstv %s1678
        %v1680 = vmul.f32 %v1679, %v1515
        %v1681 = vmul.f32 %v1679, %v1516
        %1684 = vrot.lane.b32.xlu0 %v1680, 126
        %v1685 = vpop.permute.xlu0 %1684
        %1686 = vrot.lane.b32.xlu0 %v1681, 126
        %v1687 = vpop.permute.xlu0 %1686
        %v1690 = vadd.f32 %v1578, %v1685
        %v1691 = vadd.f32 %v1579, %v1687
        %s1692 = sld [smem:[#allocation8 + $0x2f]]
        %v1693 = vstv %s1692
        %v1694 = vmul.f32 %v1693, %v1515
        %v1695 = vmul.f32 %v1693, %v1516
        %1698 = vrot.lane.b32.xlu0 %v1694, 126
        %v1699 = vpop.permute.xlu0 %1698
        %1700 = vrot.lane.b32.xlu0 %v1695, 126
        %v1701 = vpop.permute.xlu0 %1700
        %v1704 = vadd.f32 %v1592, %v1699
        %v1705 = vadd.f32 %v1593, %v1701
        %s1706 = sld [smem:[#allocation8 + $0x53]]
        %v1707 = vstv %s1706
        %v1708 = vmul.f32 %v1707, %v1515
        %v1709 = vmul.f32 %v1707, %v1516
        %1712 = vrot.lane.b32.xlu0 %v1708, 126
        %v1713 = vpop.permute.xlu0 %1712
        %1714 = vrot.lane.b32.xlu0 %v1709, 126
        %v1715 = vpop.permute.xlu0 %1714
        %v1718 = vadd.f32 %v1606, %v1713
        %v1719 = vadd.f32 %v1607, %v1715
        %s1720 = sld [smem:[#allocation8 + $0x77]]
        %v1721 = vstv %s1720
        %v1722 = vmul.f32 %v1721, %v1515
        %v1723 = vmul.f32 %v1721, %v1516
        %1726 = vrot.lane.b32.xlu0 %v1722, 126
        %v1727 = vpop.permute.xlu0 %1726
        %1728 = vrot.lane.b32.xlu0 %v1723, 126
        %v1729 = vpop.permute.xlu0 %1728
        %v1732 = vadd.f32 %v1620, %v1727
        %v1733 = vadd.f32 %v1621, %v1729
        %s1734 = sld [smem:[#allocation8 + $0x9b]]
        %v1735 = vstv %s1734
        %v1736 = vmul.f32 %v1735, %v1515
        %v1737 = vmul.f32 %v1735, %v1516
        %1740 = vrot.lane.b32.xlu0 %v1736, 126
        %v1741 = vpop.permute.xlu0 %1740
        %1742 = vrot.lane.b32.xlu0 %v1737, 126
        %v1743 = vpop.permute.xlu0 %1742
        %v1746 = vadd.f32 %v1634, %v1741
        %v1747 = vadd.f32 %v1635, %v1743
        %s1748 = sld [smem:[#allocation8 + $0xbf]]
        %v1749 = vstv %s1748
        %v1750 = vmul.f32 %v1749, %v1515
        %v1751 = vmul.f32 %v1749, %v1516
        %1754 = vrot.lane.b32.xlu0 %v1750, 126
        %v1755 = vpop.permute.xlu0 %1754
        %1756 = vrot.lane.b32.xlu0 %v1751, 126
        %v1757 = vpop.permute.xlu0 %1756
        %v1760 = vadd.f32 %v1648, %v1755
        %v1761 = vadd.f32 %v1649, %v1757
        %s1762 = sld [smem:[#allocation8 + $0xe3]]
        %v1763 = vstv %s1762
        %v1764 = vmul.f32 %v1763, %v1515
        %v1765 = vmul.f32 %v1763, %v1516
        %1768 = vrot.lane.b32.xlu0 %v1764, 126
        %v1769 = vpop.permute.xlu0 %1768
        %1770 = vrot.lane.b32.xlu0 %v1765, 126
        %v1771 = vpop.permute.xlu0 %1770
        %v1774 = vadd.f32 %v1662, %v1769
        %v1775 = vadd.f32 %v1663, %v1771
        %s1776 = sld [smem:[#allocation8 + $0x107]]
        %v1777 = vstv %s1776
        %v1778 = vmul.f32 %v1777, %v1515
        %v1779 = vmul.f32 %v1777, %v1516
        %1782 = vrot.lane.b32.xlu0 %v1778, 126
        %v1783 = vpop.permute.xlu0 %1782
        %1784 = vrot.lane.b32.xlu0 %v1779, 126
        %v1785 = vpop.permute.xlu0 %1784
        %v1788 = vadd.f32 %v1676, %v1783
        %v1789 = vadd.f32 %v1677, %v1785
        %s1790 = sld [smem:[#allocation8 + $0xc]]
        %v1791 = vstv %s1790
        %v1792 = vmul.f32 %v1791, %v1515
        %v1793 = vmul.f32 %v1791, %v1516
        %v1794 = vmul.f32 %v1791, %v1517
        %v1798 = vrot.slane %v1792, 1
        %v1799 = vrot.slane %v1793, 1
        %v1800 = vsel %vm576, %v1798, %v1799
        %v1801 = vrot.slane %v1794, 1
        %v1802 = vsel %vm576, %v1799, %v1801
        %v1805 = vadd.f32 %v1690, %v1800
        %v1806 = vadd.f32 %v1691, %v1802
        %s1807 = sld [smem:[#allocation8 + $0x30]]
        %v1808 = vstv %s1807
        %v1809 = vmul.f32 %v1808, %v1515
        %v1810 = vmul.f32 %v1808, %v1516
        %v1811 = vmul.f32 %v1808, %v1517
        %v1815 = vrot.slane %v1809, 1
        %v1816 = vrot.slane %v1810, 1
        %v1817 = vsel %vm576, %v1815, %v1816
        %v1818 = vrot.slane %v1811, 1
        %v1819 = vsel %vm576, %v1816, %v1818
        %v1822 = vadd.f32 %v1704, %v1817
        %v1823 = vadd.f32 %v1705, %v1819
        %s1824 = sld [smem:[#allocation8 + $0x54]]
        %v1825 = vstv %s1824
        %v1826 = vmul.f32 %v1825, %v1515
        %v1827 = vmul.f32 %v1825, %v1516
        %v1828 = vmul.f32 %v1825, %v1517
        %v1832 = vrot.slane %v1826, 1
        %v1833 = vrot.slane %v1827, 1
        %v1834 = vsel %vm576, %v1832, %v1833
        %v1835 = vrot.slane %v1828, 1
        %v1836 = vsel %vm576, %v1833, %v1835
        %v1839 = vadd.f32 %v1718, %v1834
        %v1840 = vadd.f32 %v1719, %v1836
        %s1841 = sld [smem:[#allocation8 + $0x78]]
        %v1842 = vstv %s1841
        %v1843 = vmul.f32 %v1842, %v1515
        %v1844 = vmul.f32 %v1842, %v1516
        %v1845 = vmul.f32 %v1842, %v1517
        %v1849 = vrot.slane %v1843, 1
        %v1850 = vrot.slane %v1844, 1
        %v1851 = vsel %vm576, %v1849, %v1850
        %v1852 = vrot.slane %v1845, 1
        %v1853 = vsel %vm576, %v1850, %v1852
        %v1856 = vadd.f32 %v1732, %v1851
        %v1857 = vadd.f32 %v1733, %v1853
        %s1858 = sld [smem:[#allocation8 + $0x9c]]
        %v1859 = vstv %s1858
        %v1860 = vmul.f32 %v1859, %v1515
        %v1861 = vmul.f32 %v1859, %v1516
        %v1862 = vmul.f32 %v1859, %v1517
        %v1866 = vrot.slane %v1860, 1
        %v1867 = vrot.slane %v1861, 1
        %v1868 = vsel %vm576, %v1866, %v1867
        %v1869 = vrot.slane %v1862, 1
        %v1870 = vsel %vm576, %v1867, %v1869
        %v1873 = vadd.f32 %v1746, %v1868
        %v1874 = vadd.f32 %v1747, %v1870
        %s1875 = sld [smem:[#allocation8 + $0xc0]]
        %v1876 = vstv %s1875
        %v1877 = vmul.f32 %v1876, %v1515
        %v1878 = vmul.f32 %v1876, %v1516
        %v1879 = vmul.f32 %v1876, %v1517
        %v1883 = vrot.slane %v1877, 1
        %v1884 = vrot.slane %v1878, 1
        %v1885 = vsel %vm576, %v1883, %v1884
        %v1886 = vrot.slane %v1879, 1
        %v1887 = vsel %vm576, %v1884, %v1886
        %v1890 = vadd.f32 %v1760, %v1885
        %v1891 = vadd.f32 %v1761, %v1887
        %s1892 = sld [smem:[#allocation8 + $0xe4]]
        %v1893 = vstv %s1892
        %v1894 = vmul.f32 %v1893, %v1515
        %v1895 = vmul.f32 %v1893, %v1516
        %v1896 = vmul.f32 %v1893, %v1517
        %v1900 = vrot.slane %v1894, 1
        %v1901 = vrot.slane %v1895, 1
        %v1902 = vsel %vm576, %v1900, %v1901
        %v1903 = vrot.slane %v1896, 1
        %v1904 = vsel %vm576, %v1901, %v1903
        %v1907 = vadd.f32 %v1774, %v1902
        %v1908 = vadd.f32 %v1775, %v1904
        %s1909 = sld [smem:[#allocation8 + $0x108]]
        %v1910 = vstv %s1909
        %v1911 = vmul.f32 %v1910, %v1515
        %v1912 = vmul.f32 %v1910, %v1516
        %v1913 = vmul.f32 %v1910, %v1517
        %v1917 = vrot.slane %v1911, 1
        %v1918 = vrot.slane %v1912, 1
        %v1919 = vsel %vm576, %v1917, %v1918
        %v1920 = vrot.slane %v1913, 1
        %v1921 = vsel %vm576, %v1918, %v1920
        %v1924 = vadd.f32 %v1788, %v1919
        %v1925 = vadd.f32 %v1789, %v1921
        %s1926 = sld [smem:[#allocation8 + $0xd]]
        %v1927 = vstv %s1926
        %v1928 = vmul.f32 %v1927, %v1515
        %v1929 = vmul.f32 %v1927, %v1516
        %v1930 = vmul.f32 %v1927, %v1517
        %v1934 = vrot.slane %v1928, 1
        %v1935 = vrot.slane %v1929, 1
        %v1936 = vsel %vm576, %v1934, %v1935
        %v1937 = vrot.slane %v1930, 1
        %v1938 = vsel %vm576, %v1935, %v1937
        %1939 = vrot.lane.b32.xlu0 %v1936, 127
        %v1940 = vpop.permute.xlu0 %1939
        %1941 = vrot.lane.b32.xlu0 %v1938, 127
        %v1942 = vpop.permute.xlu0 %1941
        %v1945 = vadd.f32 %v1805, %v1940
        %v1946 = vadd.f32 %v1806, %v1942
        %s1947 = sld [smem:[#allocation8 + $0x31]]
        %v1948 = vstv %s1947
        %v1949 = vmul.f32 %v1948, %v1515
        %v1950 = vmul.f32 %v1948, %v1516
        %v1951 = vmul.f32 %v1948, %v1517
        %v1955 = vrot.slane %v1949, 1
        %v1956 = vrot.slane %v1950, 1
        %v1957 = vsel %vm576, %v1955, %v1956
        %v1958 = vrot.slane %v1951, 1
        %v1959 = vsel %vm576, %v1956, %v1958
        %1960 = vrot.lane.b32.xlu0 %v1957, 127
        %v1961 = vpop.permute.xlu0 %1960
        %1962 = vrot.lane.b32.xlu0 %v1959, 127
        %v1963 = vpop.permute.xlu0 %1962
        %v1966 = vadd.f32 %v1822, %v1961
        %v1967 = vadd.f32 %v1823, %v1963
        %s1968 = sld [smem:[#allocation8 + $0x55]]
        %v1969 = vstv %s1968
        %v1970 = vmul.f32 %v1969, %v1515
        %v1971 = vmul.f32 %v1969, %v1516
        %v1972 = vmul.f32 %v1969, %v1517
        %v1976 = vrot.slane %v1970, 1
        %v1977 = vrot.slane %v1971, 1
        %v1978 = vsel %vm576, %v1976, %v1977
        %v1979 = vrot.slane %v1972, 1
        %v1980 = vsel %vm576, %v1977, %v1979
        %1981 = vrot.lane.b32.xlu0 %v1978, 127
        %v1982 = vpop.permute.xlu0 %1981
        %1983 = vrot.lane.b32.xlu0 %v1980, 127
        %v1984 = vpop.permute.xlu0 %1983
        %v1987 = vadd.f32 %v1839, %v1982
        %v1988 = vadd.f32 %v1840, %v1984
        %s1989 = sld [smem:[#allocation8 + $0x79]]
        %v1990 = vstv %s1989
        %v1991 = vmul.f32 %v1990, %v1515
        %v1992 = vmul.f32 %v1990, %v1516
        %v1993 = vmul.f32 %v1990, %v1517
        %v1997 = vrot.slane %v1991, 1
        %v1998 = vrot.slane %v1992, 1
        %v1999 = vsel %vm576, %v1997, %v1998
        %v2000 = vrot.slane %v1993, 1
        %v2001 = vsel %vm576, %v1998, %v2000
        %2002 = vrot.lane.b32.xlu0 %v1999, 127
        %v2003 = vpop.permute.xlu0 %2002
        %2004 = vrot.lane.b32.xlu0 %v2001, 127
        %v2005 = vpop.permute.xlu0 %2004
        %v2008 = vadd.f32 %v1856, %v2003
        %v2009 = vadd.f32 %v1857, %v2005
        %s2010 = sld [smem:[#allocation8 + $0x9d]]
        %v2011 = vstv %s2010
        %v2012 = vmul.f32 %v2011, %v1515
        %v2013 = vmul.f32 %v2011, %v1516
        %v2014 = vmul.f32 %v2011, %v1517
        %v2018 = vrot.slane %v2012, 1
        %v2019 = vrot.slane %v2013, 1
        %v2020 = vsel %vm576, %v2018, %v2019
        %v2021 = vrot.slane %v2014, 1
        %v2022 = vsel %vm576, %v2019, %v2021
        %2023 = vrot.lane.b32.xlu0 %v2020, 127
        %v2024 = vpop.permute.xlu0 %2023
        %2025 = vrot.lane.b32.xlu0 %v2022, 127
        %v2026 = vpop.permute.xlu0 %2025
        %v2029 = vadd.f32 %v1873, %v2024
        %v2030 = vadd.f32 %v1874, %v2026
        %s2031 = sld [smem:[#allocation8 + $0xc1]]
        %v2032 = vstv %s2031
        %v2033 = vmul.f32 %v2032, %v1515
        %v2034 = vmul.f32 %v2032, %v1516
        %v2035 = vmul.f32 %v2032, %v1517
        %v2039 = vrot.slane %v2033, 1
        %v2040 = vrot.slane %v2034, 1
        %v2041 = vsel %vm576, %v2039, %v2040
        %v2042 = vrot.slane %v2035, 1
        %v2043 = vsel %vm576, %v2040, %v2042
        %2044 = vrot.lane.b32.xlu0 %v2041, 127
        %v2045 = vpop.permute.xlu0 %2044
        %2046 = vrot.lane.b32.xlu0 %v2043, 127
        %v2047 = vpop.permute.xlu0 %2046
        %v2050 = vadd.f32 %v1890, %v2045
        %v2051 = vadd.f32 %v1891, %v2047
        %s2052 = sld [smem:[#allocation8 + $0xe5]]
        %v2053 = vstv %s2052
        %v2054 = vmul.f32 %v2053, %v1515
        %v2055 = vmul.f32 %v2053, %v1516
        %v2056 = vmul.f32 %v2053, %v1517
        %v2060 = vrot.slane %v2054, 1
        %v2061 = vrot.slane %v2055, 1
        %v2062 = vsel %vm576, %v2060, %v2061
        %v2063 = vrot.slane %v2056, 1
        %v2064 = vsel %vm576, %v2061, %v2063
        %2065 = vrot.lane.b32.xlu0 %v2062, 127
        %v2066 = vpop.permute.xlu0 %2065
        %2067 = vrot.lane.b32.xlu0 %v2064, 127
        %v2068 = vpop.permute.xlu0 %2067
        %v2071 = vadd.f32 %v1907, %v2066
        %v2072 = vadd.f32 %v1908, %v2068
        %s2073 = sld [smem:[#allocation8 + $0x109]]
        %v2074 = vstv %s2073
        %v2075 = vmul.f32 %v2074, %v1515
        %v2076 = vmul.f32 %v2074, %v1516
        %v2077 = vmul.f32 %v2074, %v1517
        %v2081 = vrot.slane %v2075, 1
        %v2082 = vrot.slane %v2076, 1
        %v2083 = vsel %vm576, %v2081, %v2082
        %v2084 = vrot.slane %v2077, 1
        %v2085 = vsel %vm576, %v2082, %v2084
        %2086 = vrot.lane.b32.xlu0 %v2083, 127
        %v2087 = vpop.permute.xlu0 %2086
        %2088 = vrot.lane.b32.xlu0 %v2085, 127
        %v2089 = vpop.permute.xlu0 %2088
        %v2092 = vadd.f32 %v1924, %v2087
        %v2093 = vadd.f32 %v1925, %v2089
        %s2094 = sld [smem:[#allocation8 + $0xe]]
        %v2095 = vstv %s2094
        %v2096 = vmul.f32 %v2095, %v1515
        %v2097 = vmul.f32 %v2095, %v1516
        %v2098 = vmul.f32 %v2095, %v1517
        %v2102 = vrot.slane %v2096, 1
        %v2103 = vrot.slane %v2097, 1
        %v2104 = vsel %vm576, %v2102, %v2103
        %v2105 = vrot.slane %v2098, 1
        %v2106 = vsel %vm576, %v2103, %v2105
        %2107 = vrot.lane.b32.xlu0 %v2104, 126
        %v2108 = vpop.permute.xlu0 %2107
        %2109 = vrot.lane.b32.xlu0 %v2106, 126
        %v2110 = vpop.permute.xlu0 %2109
        %v2113 = vadd.f32 %v1945, %v2108
        %v2114 = vadd.f32 %v1946, %v2110
        %s2115 = sld [smem:[#allocation8 + $0x32]]
        %v2116 = vstv %s2115
        %v2117 = vmul.f32 %v2116, %v1515
        %v2118 = vmul.f32 %v2116, %v1516
        %v2119 = vmul.f32 %v2116, %v1517
        %v2123 = vrot.slane %v2117, 1
        %v2124 = vrot.slane %v2118, 1
        %v2125 = vsel %vm576, %v2123, %v2124
        %v2126 = vrot.slane %v2119, 1
        %v2127 = vsel %vm576, %v2124, %v2126
        %2128 = vrot.lane.b32.xlu0 %v2125, 126
        %v2129 = vpop.permute.xlu0 %2128
        %2130 = vrot.lane.b32.xlu0 %v2127, 126
        %v2131 = vpop.permute.xlu0 %2130
        %v2134 = vadd.f32 %v1966, %v2129
        %v2135 = vadd.f32 %v1967, %v2131
        %s2136 = sld [smem:[#allocation8 + $0x56]]
        %v2137 = vstv %s2136
        %v2138 = vmul.f32 %v2137, %v1515
        %v2139 = vmul.f32 %v2137, %v1516
        %v2140 = vmul.f32 %v2137, %v1517
        %v2144 = vrot.slane %v2138, 1
        %v2145 = vrot.slane %v2139, 1
        %v2146 = vsel %vm576, %v2144, %v2145
        %v2147 = vrot.slane %v2140, 1
        %v2148 = vsel %vm576, %v2145, %v2147
        %2149 = vrot.lane.b32.xlu0 %v2146, 126
        %v2150 = vpop.permute.xlu0 %2149
        %2151 = vrot.lane.b32.xlu0 %v2148, 126
        %v2152 = vpop.permute.xlu0 %2151
        %v2155 = vadd.f32 %v1987, %v2150
        %v2156 = vadd.f32 %v1988, %v2152
        %s2157 = sld [smem:[#allocation8 + $0x7a]]
        %v2158 = vstv %s2157
        %v2159 = vmul.f32 %v2158, %v1515
        %v2160 = vmul.f32 %v2158, %v1516
        %v2161 = vmul.f32 %v2158, %v1517
        %v2165 = vrot.slane %v2159, 1
        %v2166 = vrot.slane %v2160, 1
        %v2167 = vsel %vm576, %v2165, %v2166
        %v2168 = vrot.slane %v2161, 1
        %v2169 = vsel %vm576, %v2166, %v2168
        %2170 = vrot.lane.b32.xlu0 %v2167, 126
        %v2171 = vpop.permute.xlu0 %2170
        %2172 = vrot.lane.b32.xlu0 %v2169, 126
        %v2173 = vpop.permute.xlu0 %2172
        %v2176 = vadd.f32 %v2008, %v2171
        %v2177 = vadd.f32 %v2009, %v2173
        %s2178 = sld [smem:[#allocation8 + $0x9e]]
        %v2179 = vstv %s2178
        %v2180 = vmul.f32 %v2179, %v1515
        %v2181 = vmul.f32 %v2179, %v1516
        %v2182 = vmul.f32 %v2179, %v1517
        %v2186 = vrot.slane %v2180, 1
        %v2187 = vrot.slane %v2181, 1
        %v2188 = vsel %vm576, %v2186, %v2187
        %v2189 = vrot.slane %v2182, 1
        %v2190 = vsel %vm576, %v2187, %v2189
        %2191 = vrot.lane.b32.xlu0 %v2188, 126
        %v2192 = vpop.permute.xlu0 %2191
        %2193 = vrot.lane.b32.xlu0 %v2190, 126
        %v2194 = vpop.permute.xlu0 %2193
        %v2197 = vadd.f32 %v2029, %v2192
        %v2198 = vadd.f32 %v2030, %v2194
        %s2199 = sld [smem:[#allocation8 + $0xc2]]
        %v2200 = vstv %s2199
        %v2201 = vmul.f32 %v2200, %v1515
        %v2202 = vmul.f32 %v2200, %v1516
        %v2203 = vmul.f32 %v2200, %v1517
        %v2207 = vrot.slane %v2201, 1
        %v2208 = vrot.slane %v2202, 1
        %v2209 = vsel %vm576, %v2207, %v2208
        %v2210 = vrot.slane %v2203, 1
        %v2211 = vsel %vm576, %v2208, %v2210
        %2212 = vrot.lane.b32.xlu0 %v2209, 126
        %v2213 = vpop.permute.xlu0 %2212
        %2214 = vrot.lane.b32.xlu0 %v2211, 126
        %v2215 = vpop.permute.xlu0 %2214
        %v2218 = vadd.f32 %v2050, %v2213
        %v2219 = vadd.f32 %v2051, %v2215
        %s2220 = sld [smem:[#allocation8 + $0xe6]]
        %v2221 = vstv %s2220
        %v2222 = vmul.f32 %v2221, %v1515
        %v2223 = vmul.f32 %v2221, %v1516
        %v2224 = vmul.f32 %v2221, %v1517
        %v2228 = vrot.slane %v2222, 1
        %v2229 = vrot.slane %v2223, 1
        %v2230 = vsel %vm576, %v2228, %v2229
        %v2231 = vrot.slane %v2224, 1
        %v2232 = vsel %vm576, %v2229, %v2231
        %2233 = vrot.lane.b32.xlu0 %v2230, 126
        %v2234 = vpop.permute.xlu0 %2233
        %2235 = vrot.lane.b32.xlu0 %v2232, 126
        %v2236 = vpop.permute.xlu0 %2235
        %v2239 = vadd.f32 %v2071, %v2234
        %v2240 = vadd.f32 %v2072, %v2236
        %s2241 = sld [smem:[#allocation8 + $0x10a]]
        %v2242 = vstv %s2241
        %v2243 = vmul.f32 %v2242, %v1515
        %v2244 = vmul.f32 %v2242, %v1516
        %v2245 = vmul.f32 %v2242, %v1517
        %v2249 = vrot.slane %v2243, 1
        %v2250 = vrot.slane %v2244, 1
        %v2251 = vsel %vm576, %v2249, %v2250
        %v2252 = vrot.slane %v2245, 1
        %v2253 = vsel %vm576, %v2250, %v2252
        %2254 = vrot.lane.b32.xlu0 %v2251, 126
        %v2255 = vpop.permute.xlu0 %2254
        %2256 = vrot.lane.b32.xlu0 %v2253, 126
        %v2257 = vpop.permute.xlu0 %2256
        %v2260 = vadd.f32 %v2092, %v2255
        %v2261 = vadd.f32 %v2093, %v2257
        %s2262 = sld [smem:[#allocation8 + $0xf]]
        %v2263 = vstv %s2262
        %v2264 = vmul.f32 %v2263, %v1515
        %v2265 = vmul.f32 %v2263, %v1516
        %v2266 = vmul.f32 %v2263, %v1517
        %v2270 = vrot.slane %v2264, 2
        %v2271 = vrot.slane %v2265, 2
        %v2272 = vsel %vm1049, %v2270, %v2271
        %v2273 = vrot.slane %v2266, 2
        %v2274 = vsel %vm1049, %v2271, %v2273
        %v2277 = vadd.f32 %v2113, %v2272
        %v2278 = vadd.f32 %v2114, %v2274
        %s2279 = sld [smem:[#allocation8 + $0x33]]
        %v2280 = vstv %s2279
        %v2281 = vmul.f32 %v2280, %v1515
        %v2282 = vmul.f32 %v2280, %v1516
        %v2283 = vmul.f32 %v2280, %v1517
        %v2287 = vrot.slane %v2281, 2
        %v2288 = vrot.slane %v2282, 2
        %v2289 = vsel %vm1049, %v2287, %v2288
        %v2290 = vrot.slane %v2283, 2
        %v2291 = vsel %vm1049, %v2288, %v2290
        %v2294 = vadd.f32 %v2134, %v2289
        %v2295 = vadd.f32 %v2135, %v2291
        %s2296 = sld [smem:[#allocation8 + $0x57]]
        %v2297 = vstv %s2296
        %v2298 = vmul.f32 %v2297, %v1515
        %v2299 = vmul.f32 %v2297, %v1516
        %v2300 = vmul.f32 %v2297, %v1517
        %v2304 = vrot.slane %v2298, 2
        %v2305 = vrot.slane %v2299, 2
        %v2306 = vsel %vm1049, %v2304, %v2305
        %v2307 = vrot.slane %v2300, 2
        %v2308 = vsel %vm1049, %v2305, %v2307
        %v2311 = vadd.f32 %v2155, %v2306
        %v2312 = vadd.f32 %v2156, %v2308
        %s2313 = sld [smem:[#allocation8 + $0x7b]]
        %v2314 = vstv %s2313
        %v2315 = vmul.f32 %v2314, %v1515
        %v2316 = vmul.f32 %v2314, %v1516
        %v2317 = vmul.f32 %v2314, %v1517
        %v2321 = vrot.slane %v2315, 2
        %v2322 = vrot.slane %v2316, 2
        %v2323 = vsel %vm1049, %v2321, %v2322
        %v2324 = vrot.slane %v2317, 2
        %v2325 = vsel %vm1049, %v2322, %v2324
        %v2328 = vadd.f32 %v2176, %v2323
        %v2329 = vadd.f32 %v2177, %v2325
        %s2330 = sld [smem:[#allocation8 + $0x9f]]
        %v2331 = vstv %s2330
        %v2332 = vmul.f32 %v2331, %v1515
        %v2333 = vmul.f32 %v2331, %v1516
        %v2334 = vmul.f32 %v2331, %v1517
        %v2338 = vrot.slane %v2332, 2
        %v2339 = vrot.slane %v2333, 2
        %v2340 = vsel %vm1049, %v2338, %v2339
        %v2341 = vrot.slane %v2334, 2
        %v2342 = vsel %vm1049, %v2339, %v2341
        %v2345 = vadd.f32 %v2197, %v2340
        %v2346 = vadd.f32 %v2198, %v2342
        %s2347 = sld [smem:[#allocation8 + $0xc3]]
        %v2348 = vstv %s2347
        %v2349 = vmul.f32 %v2348, %v1515
        %v2350 = vmul.f32 %v2348, %v1516
        %v2351 = vmul.f32 %v2348, %v1517
        %v2355 = vrot.slane %v2349, 2
        %v2356 = vrot.slane %v2350, 2
        %v2357 = vsel %vm1049, %v2355, %v2356
        %v2358 = vrot.slane %v2351, 2
        %v2359 = vsel %vm1049, %v2356, %v2358
        %v2362 = vadd.f32 %v2218, %v2357
        %v2363 = vadd.f32 %v2219, %v2359
        %s2364 = sld [smem:[#allocation8 + $0xe7]]
        %v2365 = vstv %s2364
        %v2366 = vmul.f32 %v2365, %v1515
        %v2367 = vmul.f32 %v2365, %v1516
        %v2368 = vmul.f32 %v2365, %v1517
        %v2372 = vrot.slane %v2366, 2
        %v2373 = vrot.slane %v2367, 2
        %v2374 = vsel %vm1049, %v2372, %v2373
        %v2375 = vrot.slane %v2368, 2
        %v2376 = vsel %vm1049, %v2373, %v2375
        %v2379 = vadd.f32 %v2239, %v2374
        %v2380 = vadd.f32 %v2240, %v2376
        %s2381 = sld [smem:[#allocation8 + $0x10b]]
        %v2382 = vstv %s2381
        %v2383 = vmul.f32 %v2382, %v1515
        %v2384 = vmul.f32 %v2382, %v1516
        %v2385 = vmul.f32 %v2382, %v1517
        %v2389 = vrot.slane %v2383, 2
        %v2390 = vrot.slane %v2384, 2
        %v2391 = vsel %vm1049, %v2389, %v2390
        %v2392 = vrot.slane %v2385, 2
        %v2393 = vsel %vm1049, %v2390, %v2392
        %v2396 = vadd.f32 %v2260, %v2391
        %v2397 = vadd.f32 %v2261, %v2393
        %s2398 = sld [smem:[#allocation8 + $0x10]]
        %v2399 = vstv %s2398
        %v2400 = vmul.f32 %v2399, %v1515
        %v2401 = vmul.f32 %v2399, %v1516
        %v2402 = vmul.f32 %v2399, %v1517
        %v2406 = vrot.slane %v2400, 2
        %v2407 = vrot.slane %v2401, 2
        %v2408 = vsel %vm1049, %v2406, %v2407
        %v2409 = vrot.slane %v2402, 2
        %v2410 = vsel %vm1049, %v2407, %v2409
        %2411 = vrot.lane.b32.xlu0 %v2408, 127
        %v2412 = vpop.permute.xlu0 %2411
        %2413 = vrot.lane.b32.xlu0 %v2410, 127
        %v2414 = vpop.permute.xlu0 %2413
        %v2417 = vadd.f32 %v2277, %v2412
        %v2418 = vadd.f32 %v2278, %v2414
        %s2419 = sld [smem:[#allocation8 + $0x34]]
        %v2420 = vstv %s2419
        %v2421 = vmul.f32 %v2420, %v1515
        %v2422 = vmul.f32 %v2420, %v1516
        %v2423 = vmul.f32 %v2420, %v1517
        %v2427 = vrot.slane %v2421, 2
        %v2428 = vrot.slane %v2422, 2
        %v2429 = vsel %vm1049, %v2427, %v2428
        %v2430 = vrot.slane %v2423, 2
        %v2431 = vsel %vm1049, %v2428, %v2430
        %2432 = vrot.lane.b32.xlu0 %v2429, 127
        %v2433 = vpop.permute.xlu0 %2432
        %2434 = vrot.lane.b32.xlu0 %v2431, 127
        %v2435 = vpop.permute.xlu0 %2434
        %v2438 = vadd.f32 %v2294, %v2433
        %v2439 = vadd.f32 %v2295, %v2435
        %s2440 = sld [smem:[#allocation8 + $0x58]]
        %v2441 = vstv %s2440
        %v2442 = vmul.f32 %v2441, %v1515
        %v2443 = vmul.f32 %v2441, %v1516
        %v2444 = vmul.f32 %v2441, %v1517
        %v2448 = vrot.slane %v2442, 2
        %v2449 = vrot.slane %v2443, 2
        %v2450 = vsel %vm1049, %v2448, %v2449
        %v2451 = vrot.slane %v2444, 2
        %v2452 = vsel %vm1049, %v2449, %v2451
        %2453 = vrot.lane.b32.xlu0 %v2450, 127
        %v2454 = vpop.permute.xlu0 %2453
        %2455 = vrot.lane.b32.xlu0 %v2452, 127
        %v2456 = vpop.permute.xlu0 %2455
        %v2459 = vadd.f32 %v2311, %v2454
        %v2460 = vadd.f32 %v2312, %v2456
        %s2461 = sld [smem:[#allocation8 + $0x7c]]
        %v2462 = vstv %s2461
        %v2463 = vmul.f32 %v2462, %v1515
        %v2464 = vmul.f32 %v2462, %v1516
        %v2465 = vmul.f32 %v2462, %v1517
        %v2469 = vrot.slane %v2463, 2
        %v2470 = vrot.slane %v2464, 2
        %v2471 = vsel %vm1049, %v2469, %v2470
        %v2472 = vrot.slane %v2465, 2
        %v2473 = vsel %vm1049, %v2470, %v2472
        %2474 = vrot.lane.b32.xlu0 %v2471, 127
        %v2475 = vpop.permute.xlu0 %2474
        %2476 = vrot.lane.b32.xlu0 %v2473, 127
        %v2477 = vpop.permute.xlu0 %2476
        %v2480 = vadd.f32 %v2328, %v2475
        %v2481 = vadd.f32 %v2329, %v2477
        %s2482 = sld [smem:[#allocation8 + $0xa0]]
        %v2483 = vstv %s2482
        %v2484 = vmul.f32 %v2483, %v1515
        %v2485 = vmul.f32 %v2483, %v1516
        %v2486 = vmul.f32 %v2483, %v1517
        %v2490 = vrot.slane %v2484, 2
        %v2491 = vrot.slane %v2485, 2
        %v2492 = vsel %vm1049, %v2490, %v2491
        %v2493 = vrot.slane %v2486, 2
        %v2494 = vsel %vm1049, %v2491, %v2493
        %2495 = vrot.lane.b32.xlu0 %v2492, 127
        %v2496 = vpop.permute.xlu0 %2495
        %2497 = vrot.lane.b32.xlu0 %v2494, 127
        %v2498 = vpop.permute.xlu0 %2497
        %v2501 = vadd.f32 %v2345, %v2496
        %v2502 = vadd.f32 %v2346, %v2498
        %s2503 = sld [smem:[#allocation8 + $0xc4]]
        %v2504 = vstv %s2503
        %v2505 = vmul.f32 %v2504, %v1515
        %v2506 = vmul.f32 %v2504, %v1516
        %v2507 = vmul.f32 %v2504, %v1517
        %v2511 = vrot.slane %v2505, 2
        %v2512 = vrot.slane %v2506, 2
        %v2513 = vsel %vm1049, %v2511, %v2512
        %v2514 = vrot.slane %v2507, 2
        %v2515 = vsel %vm1049, %v2512, %v2514
        %2516 = vrot.lane.b32.xlu0 %v2513, 127
        %v2517 = vpop.permute.xlu0 %2516
        %2518 = vrot.lane.b32.xlu0 %v2515, 127
        %v2519 = vpop.permute.xlu0 %2518
        %v2522 = vadd.f32 %v2362, %v2517
        %v2523 = vadd.f32 %v2363, %v2519
        %s2524 = sld [smem:[#allocation8 + $0xe8]]
        %v2525 = vstv %s2524
        %v2526 = vmul.f32 %v2525, %v1515
        %v2527 = vmul.f32 %v2525, %v1516
        %v2528 = vmul.f32 %v2525, %v1517
        %v2532 = vrot.slane %v2526, 2
        %v2533 = vrot.slane %v2527, 2
        %v2534 = vsel %vm1049, %v2532, %v2533
        %v2535 = vrot.slane %v2528, 2
        %v2536 = vsel %vm1049, %v2533, %v2535
        %2537 = vrot.lane.b32.xlu0 %v2534, 127
        %v2538 = vpop.permute.xlu0 %2537
        %2539 = vrot.lane.b32.xlu0 %v2536, 127
        %v2540 = vpop.permute.xlu0 %2539
        %v2543 = vadd.f32 %v2379, %v2538
        %v2544 = vadd.f32 %v2380, %v2540
        %s2545 = sld [smem:[#allocation8 + $0x10c]]
        %v2546 = vstv %s2545
        %v2547 = vmul.f32 %v2546, %v1515
        %v2548 = vmul.f32 %v2546, %v1516
        %v2549 = vmul.f32 %v2546, %v1517
        %v2553 = vrot.slane %v2547, 2
        %v2554 = vrot.slane %v2548, 2
        %v2555 = vsel %vm1049, %v2553, %v2554
        %v2556 = vrot.slane %v2549, 2
        %v2557 = vsel %vm1049, %v2554, %v2556
        %2558 = vrot.lane.b32.xlu0 %v2555, 127
        %v2559 = vpop.permute.xlu0 %2558
        %2560 = vrot.lane.b32.xlu0 %v2557, 127
        %v2561 = vpop.permute.xlu0 %2560
        %v2564 = vadd.f32 %v2396, %v2559
        %v2565 = vadd.f32 %v2397, %v2561
        %s2566 = sld [smem:[#allocation8 + $0x11]]
        %v2567 = vstv %s2566
        %v2568 = vmul.f32 %v2567, %v1515
        %v2569 = vmul.f32 %v2567, %v1516
        %v2570 = vmul.f32 %v2567, %v1517
        %v2574 = vrot.slane %v2568, 2
        %v2575 = vrot.slane %v2569, 2
        %v2576 = vsel %vm1049, %v2574, %v2575
        %v2577 = vrot.slane %v2570, 2
        %v2578 = vsel %vm1049, %v2575, %v2577
        %2579 = vrot.lane.b32.xlu0 %v2576, 126
        %v2580 = vpop.permute.xlu0 %2579
        %2581 = vrot.lane.b32.xlu0 %v2578, 126
        %v2582 = vpop.permute.xlu0 %2581
        %v2585 = vadd.f32 %v2417, %v2580
        %v2586 = vadd.f32 %v2418, %v2582
        %s2587 = sld [smem:[#allocation8 + $0x35]]
        %v2588 = vstv %s2587
        %v2589 = vmul.f32 %v2588, %v1515
        %v2590 = vmul.f32 %v2588, %v1516
        %v2591 = vmul.f32 %v2588, %v1517
        %v2595 = vrot.slane %v2589, 2
        %v2596 = vrot.slane %v2590, 2
        %v2597 = vsel %vm1049, %v2595, %v2596
        %v2598 = vrot.slane %v2591, 2
        %v2599 = vsel %vm1049, %v2596, %v2598
        %2600 = vrot.lane.b32.xlu0 %v2597, 126
        %v2601 = vpop.permute.xlu0 %2600
        %2602 = vrot.lane.b32.xlu0 %v2599, 126
        %v2603 = vpop.permute.xlu0 %2602
        %v2606 = vadd.f32 %v2438, %v2601
        %v2607 = vadd.f32 %v2439, %v2603
        %s2608 = sld [smem:[#allocation8 + $0x59]]
        %v2609 = vstv %s2608
        %v2610 = vmul.f32 %v2609, %v1515
        %v2611 = vmul.f32 %v2609, %v1516
        %v2612 = vmul.f32 %v2609, %v1517
        %v2616 = vrot.slane %v2610, 2
        %v2617 = vrot.slane %v2611, 2
        %v2618 = vsel %vm1049, %v2616, %v2617
        %v2619 = vrot.slane %v2612, 2
        %v2620 = vsel %vm1049, %v2617, %v2619
        %2621 = vrot.lane.b32.xlu0 %v2618, 126
        %v2622 = vpop.permute.xlu0 %2621
        %2623 = vrot.lane.b32.xlu0 %v2620, 126
        %v2624 = vpop.permute.xlu0 %2623
        %v2627 = vadd.f32 %v2459, %v2622
        %v2628 = vadd.f32 %v2460, %v2624
        %s2629 = sld [smem:[#allocation8 + $0x7d]]
        %v2630 = vstv %s2629
        %v2631 = vmul.f32 %v2630, %v1515
        %v2632 = vmul.f32 %v2630, %v1516
        %v2633 = vmul.f32 %v2630, %v1517
        %v2637 = vrot.slane %v2631, 2
        %v2638 = vrot.slane %v2632, 2
        %v2639 = vsel %vm1049, %v2637, %v2638
        %v2640 = vrot.slane %v2633, 2
        %v2641 = vsel %vm1049, %v2638, %v2640
        %2642 = vrot.lane.b32.xlu0 %v2639, 126
        %v2643 = vpop.permute.xlu0 %2642
        %2644 = vrot.lane.b32.xlu0 %v2641, 126
        %v2645 = vpop.permute.xlu0 %2644
        %v2648 = vadd.f32 %v2480, %v2643
        %v2649 = vadd.f32 %v2481, %v2645
        %s2650 = sld [smem:[#allocation8 + $0xa1]]
        %v2651 = vstv %s2650
        %v2652 = vmul.f32 %v2651, %v1515
        %v2653 = vmul.f32 %v2651, %v1516
        %v2654 = vmul.f32 %v2651, %v1517
        %v2658 = vrot.slane %v2652, 2
        %v2659 = vrot.slane %v2653, 2
        %v2660 = vsel %vm1049, %v2658, %v2659
        %v2661 = vrot.slane %v2654, 2
        %v2662 = vsel %vm1049, %v2659, %v2661
        %2663 = vrot.lane.b32.xlu0 %v2660, 126
        %v2664 = vpop.permute.xlu0 %2663
        %2665 = vrot.lane.b32.xlu0 %v2662, 126
        %v2666 = vpop.permute.xlu0 %2665
        %v2669 = vadd.f32 %v2501, %v2664
        %v2670 = vadd.f32 %v2502, %v2666
        %s2671 = sld [smem:[#allocation8 + $0xc5]]
        %v2672 = vstv %s2671
        %v2673 = vmul.f32 %v2672, %v1515
        %v2674 = vmul.f32 %v2672, %v1516
        %v2675 = vmul.f32 %v2672, %v1517
        %v2679 = vrot.slane %v2673, 2
        %v2680 = vrot.slane %v2674, 2
        %v2681 = vsel %vm1049, %v2679, %v2680
        %v2682 = vrot.slane %v2675, 2
        %v2683 = vsel %vm1049, %v2680, %v2682
        %2684 = vrot.lane.b32.xlu0 %v2681, 126
        %v2685 = vpop.permute.xlu0 %2684
        %2686 = vrot.lane.b32.xlu0 %v2683, 126
        %v2687 = vpop.permute.xlu0 %2686
        %v2690 = vadd.f32 %v2522, %v2685
        %v2691 = vadd.f32 %v2523, %v2687
        %s2692 = sld [smem:[#allocation8 + $0xe9]]
        %v2693 = vstv %s2692
        %v2694 = vmul.f32 %v2693, %v1515
        %v2695 = vmul.f32 %v2693, %v1516
        %v2696 = vmul.f32 %v2693, %v1517
        %v2700 = vrot.slane %v2694, 2
        %v2701 = vrot.slane %v2695, 2
        %v2702 = vsel %vm1049, %v2700, %v2701
        %v2703 = vrot.slane %v2696, 2
        %v2704 = vsel %vm1049, %v2701, %v2703
        %2705 = vrot.lane.b32.xlu0 %v2702, 126
        %v2706 = vpop.permute.xlu0 %2705
        %2707 = vrot.lane.b32.xlu0 %v2704, 126
        %v2708 = vpop.permute.xlu0 %2707
        %v2711 = vadd.f32 %v2543, %v2706
        %v2712 = vadd.f32 %v2544, %v2708
        %s2713 = sld [smem:[#allocation8 + $0x10d]]
        %v2714 = vstv %s2713
        %v2715 = vmul.f32 %v2714, %v1515
        %v2716 = vmul.f32 %v2714, %v1516
        %v2717 = vmul.f32 %v2714, %v1517
        %v2721 = vrot.slane %v2715, 2
        %v2722 = vrot.slane %v2716, 2
        %v2723 = vsel %vm1049, %v2721, %v2722
        %v2724 = vrot.slane %v2717, 2
        %v2725 = vsel %vm1049, %v2722, %v2724
        %2726 = vrot.lane.b32.xlu0 %v2723, 126
        %v2727 = vpop.permute.xlu0 %2726
        %2728 = vrot.lane.b32.xlu0 %v2725, 126
        %v2729 = vpop.permute.xlu0 %2728
        %v2732 = vadd.f32 %v2564, %v2727
        %v2733 = vadd.f32 %v2565, %v2729
        %s2734 = scalar_lea.vmem [#allocation2], 48
        %v2735 = vld [vmem:[%s2734] sm:$0xff]
        %v2736 = vld [vmem:[%s2734 + $0x8] sm:$0xff]
        %v2737 = vld [vmem:[%s2734 + $0x10] sm:$0x3]
        %s2738 = sld [smem:[#allocation8 + $0x12]]
        %v2739 = vstv %s2738
        %v2740 = vmul.f32 %v2739, %v2735
        %v2741 = vmul.f32 %v2739, %v2736
        %v2742 = vadd.f32 %v2585, %v2740
        %v2743 = vadd.f32 %v2586, %v2741
        %s2744 = sld [smem:[#allocation8 + $0x36]]
        %v2745 = vstv %s2744
        %v2746 = vmul.f32 %v2745, %v2735
        %v2747 = vmul.f32 %v2745, %v2736
        %v2748 = vadd.f32 %v2606, %v2746
        %v2749 = vadd.f32 %v2607, %v2747
        %s2750 = sld [smem:[#allocation8 + $0x5a]]
        %v2751 = vstv %s2750
        %v2752 = vmul.f32 %v2751, %v2735
        %v2753 = vmul.f32 %v2751, %v2736
        %v2754 = vadd.f32 %v2627, %v2752
        %v2755 = vadd.f32 %v2628, %v2753
        %s2756 = sld [smem:[#allocation8 + $0x7e]]
        %v2757 = vstv %s2756
        %v2758 = vmul.f32 %v2757, %v2735
        %v2759 = vmul.f32 %v2757, %v2736
        %v2760 = vadd.f32 %v2648, %v2758
        %v2761 = vadd.f32 %v2649, %v2759
        %s2762 = sld [smem:[#allocation8 + $0xa2]]
        %v2763 = vstv %s2762
        %v2764 = vmul.f32 %v2763, %v2735
        %v2765 = vmul.f32 %v2763, %v2736
        %v2766 = vadd.f32 %v2669, %v2764
        %v2767 = vadd.f32 %v2670, %v2765
        %s2768 = sld [smem:[#allocation8 + $0xc6]]
        %v2769 = vstv %s2768
        %v2770 = vmul.f32 %v2769, %v2735
        %v2771 = vmul.f32 %v2769, %v2736
        %v2772 = vadd.f32 %v2690, %v2770
        %v2773 = vadd.f32 %v2691, %v2771
        %s2774 = sld [smem:[#allocation8 + $0xea]]
        %v2775 = vstv %s2774
        %v2776 = vmul.f32 %v2775, %v2735
        %v2777 = vmul.f32 %v2775, %v2736
        %v2778 = vadd.f32 %v2711, %v2776
        %v2779 = vadd.f32 %v2712, %v2777
        %s2780 = sld [smem:[#allocation8 + $0x10e]]
        %v2781 = vstv %s2780
        %v2782 = vmul.f32 %v2781, %v2735
        %v2783 = vmul.f32 %v2781, %v2736
        %v2784 = vadd.f32 %v2732, %v2782
        %v2785 = vadd.f32 %v2733, %v2783
        %s2786 = sld [smem:[#allocation8 + $0x13]]
        %v2787 = vstv %s2786
        %v2788 = vmul.f32 %v2787, %v2735
        %v2789 = vmul.f32 %v2787, %v2736
        %2792 = vrot.lane.b32.xlu0 %v2788, 127
        %v2793 = vpop.permute.xlu0 %2792
        %2794 = vrot.lane.b32.xlu0 %v2789, 127
        %v2795 = vpop.permute.xlu0 %2794
        %v2798 = vadd.f32 %v2742, %v2793
        %v2799 = vadd.f32 %v2743, %v2795
        %s2800 = sld [smem:[#allocation8 + $0x37]]
        %v2801 = vstv %s2800
        %v2802 = vmul.f32 %v2801, %v2735
        %v2803 = vmul.f32 %v2801, %v2736
        %2806 = vrot.lane.b32.xlu0 %v2802, 127
        %v2807 = vpop.permute.xlu0 %2806
        %2808 = vrot.lane.b32.xlu0 %v2803, 127
        %v2809 = vpop.permute.xlu0 %2808
        %v2812 = vadd.f32 %v2748, %v2807
        %v2813 = vadd.f32 %v2749, %v2809
        %s2814 = sld [smem:[#allocation8 + $0x5b]]
        %v2815 = vstv %s2814
        %v2816 = vmul.f32 %v2815, %v2735
        %v2817 = vmul.f32 %v2815, %v2736
        %2820 = vrot.lane.b32.xlu0 %v2816, 127
        %v2821 = vpop.permute.xlu0 %2820
        %2822 = vrot.lane.b32.xlu0 %v2817, 127
        %v2823 = vpop.permute.xlu0 %2822
        %v2826 = vadd.f32 %v2754, %v2821
        %v2827 = vadd.f32 %v2755, %v2823
        %s2828 = sld [smem:[#allocation8 + $0x7f]]
        %v2829 = vstv %s2828
        %v2830 = vmul.f32 %v2829, %v2735
        %v2831 = vmul.f32 %v2829, %v2736
        %2834 = vrot.lane.b32.xlu0 %v2830, 127
        %v2835 = vpop.permute.xlu0 %2834
        %2836 = vrot.lane.b32.xlu0 %v2831, 127
        %v2837 = vpop.permute.xlu0 %2836
        %v2840 = vadd.f32 %v2760, %v2835
        %v2841 = vadd.f32 %v2761, %v2837
        %s2842 = sld [smem:[#allocation8 + $0xa3]]
        %v2843 = vstv %s2842
        %v2844 = vmul.f32 %v2843, %v2735
        %v2845 = vmul.f32 %v2843, %v2736
        %2848 = vrot.lane.b32.xlu0 %v2844, 127
        %v2849 = vpop.permute.xlu0 %2848
        %2850 = vrot.lane.b32.xlu0 %v2845, 127
        %v2851 = vpop.permute.xlu0 %2850
        %v2854 = vadd.f32 %v2766, %v2849
        %v2855 = vadd.f32 %v2767, %v2851
        %s2856 = sld [smem:[#allocation8 + $0xc7]]
        %v2857 = vstv %s2856
        %v2858 = vmul.f32 %v2857, %v2735
        %v2859 = vmul.f32 %v2857, %v2736
        %2862 = vrot.lane.b32.xlu0 %v2858, 127
        %v2863 = vpop.permute.xlu0 %2862
        %2864 = vrot.lane.b32.xlu0 %v2859, 127
        %v2865 = vpop.permute.xlu0 %2864
        %v2868 = vadd.f32 %v2772, %v2863
        %v2869 = vadd.f32 %v2773, %v2865
        %s2870 = sld [smem:[#allocation8 + $0xeb]]
        %v2871 = vstv %s2870
        %v2872 = vmul.f32 %v2871, %v2735
        %v2873 = vmul.f32 %v2871, %v2736
        %2876 = vrot.lane.b32.xlu0 %v2872, 127
        %v2877 = vpop.permute.xlu0 %2876
        %2878 = vrot.lane.b32.xlu0 %v2873, 127
        %v2879 = vpop.permute.xlu0 %2878
        %v2882 = vadd.f32 %v2778, %v2877
        %v2883 = vadd.f32 %v2779, %v2879
        %s2884 = sld [smem:[#allocation8 + $0x10f]]
        %v2885 = vstv %s2884
        %v2886 = vmul.f32 %v2885, %v2735
        %v2887 = vmul.f32 %v2885, %v2736
        %2890 = vrot.lane.b32.xlu0 %v2886, 127
        %v2891 = vpop.permute.xlu0 %2890
        %2892 = vrot.lane.b32.xlu0 %v2887, 127
        %v2893 = vpop.permute.xlu0 %2892
        %v2896 = vadd.f32 %v2784, %v2891
        %v2897 = vadd.f32 %v2785, %v2893
        %s2898 = sld [smem:[#allocation8 + $0x14]]
        %v2899 = vstv %s2898
        %v2900 = vmul.f32 %v2899, %v2735
        %v2901 = vmul.f32 %v2899, %v2736
        %2904 = vrot.lane.b32.xlu0 %v2900, 126
        %v2905 = vpop.permute.xlu0 %2904
        %2906 = vrot.lane.b32.xlu0 %v2901, 126
        %v2907 = vpop.permute.xlu0 %2906
        %v2910 = vadd.f32 %v2798, %v2905
        %v2911 = vadd.f32 %v2799, %v2907
        %s2912 = sld [smem:[#allocation8 + $0x38]]
        %v2913 = vstv %s2912
        %v2914 = vmul.f32 %v2913, %v2735
        %v2915 = vmul.f32 %v2913, %v2736
        %2918 = vrot.lane.b32.xlu0 %v2914, 126
        %v2919 = vpop.permute.xlu0 %2918
        %2920 = vrot.lane.b32.xlu0 %v2915, 126
        %v2921 = vpop.permute.xlu0 %2920
        %v2924 = vadd.f32 %v2812, %v2919
        %v2925 = vadd.f32 %v2813, %v2921
        %s2926 = sld [smem:[#allocation8 + $0x5c]]
        %v2927 = vstv %s2926
        %v2928 = vmul.f32 %v2927, %v2735
        %v2929 = vmul.f32 %v2927, %v2736
        %2932 = vrot.lane.b32.xlu0 %v2928, 126
        %v2933 = vpop.permute.xlu0 %2932
        %2934 = vrot.lane.b32.xlu0 %v2929, 126
        %v2935 = vpop.permute.xlu0 %2934
        %v2938 = vadd.f32 %v2826, %v2933
        %v2939 = vadd.f32 %v2827, %v2935
        %s2940 = sld [smem:[#allocation8 + $0x80]]
        %v2941 = vstv %s2940
        %v2942 = vmul.f32 %v2941, %v2735
        %v2943 = vmul.f32 %v2941, %v2736
        %2946 = vrot.lane.b32.xlu0 %v2942, 126
        %v2947 = vpop.permute.xlu0 %2946
        %2948 = vrot.lane.b32.xlu0 %v2943, 126
        %v2949 = vpop.permute.xlu0 %2948
        %v2952 = vadd.f32 %v2840, %v2947
        %v2953 = vadd.f32 %v2841, %v2949
        %s2954 = sld [smem:[#allocation8 + $0xa4]]
        %v2955 = vstv %s2954
        %v2956 = vmul.f32 %v2955, %v2735
        %v2957 = vmul.f32 %v2955, %v2736
        %2960 = vrot.lane.b32.xlu0 %v2956, 126
        %v2961 = vpop.permute.xlu0 %2960
        %2962 = vrot.lane.b32.xlu0 %v2957, 126
        %v2963 = vpop.permute.xlu0 %2962
        %v2966 = vadd.f32 %v2854, %v2961
        %v2967 = vadd.f32 %v2855, %v2963
        %s2968 = sld [smem:[#allocation8 + $0xc8]]
        %v2969 = vstv %s2968
        %v2970 = vmul.f32 %v2969, %v2735
        %v2971 = vmul.f32 %v2969, %v2736
        %2974 = vrot.lane.b32.xlu0 %v2970, 126
        %v2975 = vpop.permute.xlu0 %2974
        %2976 = vrot.lane.b32.xlu0 %v2971, 126
        %v2977 = vpop.permute.xlu0 %2976
        %v2980 = vadd.f32 %v2868, %v2975
        %v2981 = vadd.f32 %v2869, %v2977
        %s2982 = sld [smem:[#allocation8 + $0xec]]
        %v2983 = vstv %s2982
        %v2984 = vmul.f32 %v2983, %v2735
        %v2985 = vmul.f32 %v2983, %v2736
        %2988 = vrot.lane.b32.xlu0 %v2984, 126
        %v2989 = vpop.permute.xlu0 %2988
        %2990 = vrot.lane.b32.xlu0 %v2985, 126
        %v2991 = vpop.permute.xlu0 %2990
        %v2994 = vadd.f32 %v2882, %v2989
        %v2995 = vadd.f32 %v2883, %v2991
        %s2996 = sld [smem:[#allocation8 + $0x110]]
        %v2997 = vstv %s2996
        %v2998 = vmul.f32 %v2997, %v2735
        %v2999 = vmul.f32 %v2997, %v2736
        %3002 = vrot.lane.b32.xlu0 %v2998, 126
        %v3003 = vpop.permute.xlu0 %3002
        %3004 = vrot.lane.b32.xlu0 %v2999, 126
        %v3005 = vpop.permute.xlu0 %3004
        %v3008 = vadd.f32 %v2896, %v3003
        %v3009 = vadd.f32 %v2897, %v3005
        %s3010 = sld [smem:[#allocation8 + $0x15]]
        %v3011 = vstv %s3010
        %v3012 = vmul.f32 %v3011, %v2735
        %v3013 = vmul.f32 %v3011, %v2736
        %v3014 = vmul.f32 %v3011, %v2737
        %v3018 = vrot.slane %v3012, 1
        %v3019 = vrot.slane %v3013, 1
        %v3020 = vsel %vm576, %v3018, %v3019
        %v3021 = vrot.slane %v3014, 1
        %v3022 = vsel %vm576, %v3019, %v3021
        %v3025 = vadd.f32 %v2910, %v3020
        %v3026 = vadd.f32 %v2911, %v3022
        %s3027 = sld [smem:[#allocation8 + $0x39]]
        %v3028 = vstv %s3027
        %v3029 = vmul.f32 %v3028, %v2735
        %v3030 = vmul.f32 %v3028, %v2736
        %v3031 = vmul.f32 %v3028, %v2737
        %v3035 = vrot.slane %v3029, 1
        %v3036 = vrot.slane %v3030, 1
        %v3037 = vsel %vm576, %v3035, %v3036
        %v3038 = vrot.slane %v3031, 1
        %v3039 = vsel %vm576, %v3036, %v3038
        %v3042 = vadd.f32 %v2924, %v3037
        %v3043 = vadd.f32 %v2925, %v3039
        %s3044 = sld [smem:[#allocation8 + $0x5d]]
        %v3045 = vstv %s3044
        %v3046 = vmul.f32 %v3045, %v2735
        %v3047 = vmul.f32 %v3045, %v2736
        %v3048 = vmul.f32 %v3045, %v2737
        %v3052 = vrot.slane %v3046, 1
        %v3053 = vrot.slane %v3047, 1
        %v3054 = vsel %vm576, %v3052, %v3053
        %v3055 = vrot.slane %v3048, 1
        %v3056 = vsel %vm576, %v3053, %v3055
        %v3059 = vadd.f32 %v2938, %v3054
        %v3060 = vadd.f32 %v2939, %v3056
        %s3061 = sld [smem:[#allocation8 + $0x81]]
        %v3062 = vstv %s3061
        %v3063 = vmul.f32 %v3062, %v2735
        %v3064 = vmul.f32 %v3062, %v2736
        %v3065 = vmul.f32 %v3062, %v2737
        %v3069 = vrot.slane %v3063, 1
        %v3070 = vrot.slane %v3064, 1
        %v3071 = vsel %vm576, %v3069, %v3070
        %v3072 = vrot.slane %v3065, 1
        %v3073 = vsel %vm576, %v3070, %v3072
        %v3076 = vadd.f32 %v2952, %v3071
        %v3077 = vadd.f32 %v2953, %v3073
        %s3078 = sld [smem:[#allocation8 + $0xa5]]
        %v3079 = vstv %s3078
        %v3080 = vmul.f32 %v3079, %v2735
        %v3081 = vmul.f32 %v3079, %v2736
        %v3082 = vmul.f32 %v3079, %v2737
        %v3086 = vrot.slane %v3080, 1
        %v3087 = vrot.slane %v3081, 1
        %v3088 = vsel %vm576, %v3086, %v3087
        %v3089 = vrot.slane %v3082, 1
        %v3090 = vsel %vm576, %v3087, %v3089
        %v3093 = vadd.f32 %v2966, %v3088
        %v3094 = vadd.f32 %v2967, %v3090
        %s3095 = sld [smem:[#allocation8 + $0xc9]]
        %v3096 = vstv %s3095
        %v3097 = vmul.f32 %v3096, %v2735
        %v3098 = vmul.f32 %v3096, %v2736
        %v3099 = vmul.f32 %v3096, %v2737
        %v3103 = vrot.slane %v3097, 1
        %v3104 = vrot.slane %v3098, 1
        %v3105 = vsel %vm576, %v3103, %v3104
        %v3106 = vrot.slane %v3099, 1
        %v3107 = vsel %vm576, %v3104, %v3106
        %v3110 = vadd.f32 %v2980, %v3105
        %v3111 = vadd.f32 %v2981, %v3107
        %s3112 = sld [smem:[#allocation8 + $0xed]]
        %v3113 = vstv %s3112
        %v3114 = vmul.f32 %v3113, %v2735
        %v3115 = vmul.f32 %v3113, %v2736
        %v3116 = vmul.f32 %v3113, %v2737
        %v3120 = vrot.slane %v3114, 1
        %v3121 = vrot.slane %v3115, 1
        %v3122 = vsel %vm576, %v3120, %v3121
        %v3123 = vrot.slane %v3116, 1
        %v3124 = vsel %vm576, %v3121, %v3123
        %v3127 = vadd.f32 %v2994, %v3122
        %v3128 = vadd.f32 %v2995, %v3124
        %s3129 = sld [smem:[#allocation8 + $0x111]]
        %v3130 = vstv %s3129
        %v3131 = vmul.f32 %v3130, %v2735
        %v3132 = vmul.f32 %v3130, %v2736
        %v3133 = vmul.f32 %v3130, %v2737
        %v3137 = vrot.slane %v3131, 1
        %v3138 = vrot.slane %v3132, 1
        %v3139 = vsel %vm576, %v3137, %v3138
        %v3140 = vrot.slane %v3133, 1
        %v3141 = vsel %vm576, %v3138, %v3140
        %v3144 = vadd.f32 %v3008, %v3139
        %v3145 = vadd.f32 %v3009, %v3141
        %s3146 = sld [smem:[#allocation8 + $0x16]]
        %v3147 = vstv %s3146
        %v3148 = vmul.f32 %v3147, %v2735
        %v3149 = vmul.f32 %v3147, %v2736
        %v3150 = vmul.f32 %v3147, %v2737
        %v3154 = vrot.slane %v3148, 1
        %v3155 = vrot.slane %v3149, 1
        %v3156 = vsel %vm576, %v3154, %v3155
        %v3157 = vrot.slane %v3150, 1
        %v3158 = vsel %vm576, %v3155, %v3157
        %3159 = vrot.lane.b32.xlu0 %v3156, 127
        %v3160 = vpop.permute.xlu0 %3159
        %3161 = vrot.lane.b32.xlu0 %v3158, 127
        %v3162 = vpop.permute.xlu0 %3161
        %v3165 = vadd.f32 %v3025, %v3160
        %v3166 = vadd.f32 %v3026, %v3162
        %s3167 = sld [smem:[#allocation8 + $0x3a]]
        %v3168 = vstv %s3167
        %v3169 = vmul.f32 %v3168, %v2735
        %v3170 = vmul.f32 %v3168, %v2736
        %v3171 = vmul.f32 %v3168, %v2737
        %v3175 = vrot.slane %v3169, 1
        %v3176 = vrot.slane %v3170, 1
        %v3177 = vsel %vm576, %v3175, %v3176
        %v3178 = vrot.slane %v3171, 1
        %v3179 = vsel %vm576, %v3176, %v3178
        %3180 = vrot.lane.b32.xlu0 %v3177, 127
        %v3181 = vpop.permute.xlu0 %3180
        %3182 = vrot.lane.b32.xlu0 %v3179, 127
        %v3183 = vpop.permute.xlu0 %3182
        %v3186 = vadd.f32 %v3042, %v3181
        %v3187 = vadd.f32 %v3043, %v3183
        %s3188 = sld [smem:[#allocation8 + $0x5e]]
        %v3189 = vstv %s3188
        %v3190 = vmul.f32 %v3189, %v2735
        %v3191 = vmul.f32 %v3189, %v2736
        %v3192 = vmul.f32 %v3189, %v2737
        %v3196 = vrot.slane %v3190, 1
        %v3197 = vrot.slane %v3191, 1
        %v3198 = vsel %vm576, %v3196, %v3197
        %v3199 = vrot.slane %v3192, 1
        %v3200 = vsel %vm576, %v3197, %v3199
        %3201 = vrot.lane.b32.xlu0 %v3198, 127
        %v3202 = vpop.permute.xlu0 %3201
        %3203 = vrot.lane.b32.xlu0 %v3200, 127
        %v3204 = vpop.permute.xlu0 %3203
        %v3207 = vadd.f32 %v3059, %v3202
        %v3208 = vadd.f32 %v3060, %v3204
        %s3209 = sld [smem:[#allocation8 + $0x82]]
        %v3210 = vstv %s3209
        %v3211 = vmul.f32 %v3210, %v2735
        %v3212 = vmul.f32 %v3210, %v2736
        %v3213 = vmul.f32 %v3210, %v2737
        %v3217 = vrot.slane %v3211, 1
        %v3218 = vrot.slane %v3212, 1
        %v3219 = vsel %vm576, %v3217, %v3218
        %v3220 = vrot.slane %v3213, 1
        %v3221 = vsel %vm576, %v3218, %v3220
        %3222 = vrot.lane.b32.xlu0 %v3219, 127
        %v3223 = vpop.permute.xlu0 %3222
        %3224 = vrot.lane.b32.xlu0 %v3221, 127
        %v3225 = vpop.permute.xlu0 %3224
        %v3228 = vadd.f32 %v3076, %v3223
        %v3229 = vadd.f32 %v3077, %v3225
        %s3230 = sld [smem:[#allocation8 + $0xa6]]
        %v3231 = vstv %s3230
        %v3232 = vmul.f32 %v3231, %v2735
        %v3233 = vmul.f32 %v3231, %v2736
        %v3234 = vmul.f32 %v3231, %v2737
        %v3238 = vrot.slane %v3232, 1
        %v3239 = vrot.slane %v3233, 1
        %v3240 = vsel %vm576, %v3238, %v3239
        %v3241 = vrot.slane %v3234, 1
        %v3242 = vsel %vm576, %v3239, %v3241
        %3243 = vrot.lane.b32.xlu0 %v3240, 127
        %v3244 = vpop.permute.xlu0 %3243
        %3245 = vrot.lane.b32.xlu0 %v3242, 127
        %v3246 = vpop.permute.xlu0 %3245
        %v3249 = vadd.f32 %v3093, %v3244
        %v3250 = vadd.f32 %v3094, %v3246
        %s3251 = sld [smem:[#allocation8 + $0xca]]
        %v3252 = vstv %s3251
        %v3253 = vmul.f32 %v3252, %v2735
        %v3254 = vmul.f32 %v3252, %v2736
        %v3255 = vmul.f32 %v3252, %v2737
        %v3259 = vrot.slane %v3253, 1
        %v3260 = vrot.slane %v3254, 1
        %v3261 = vsel %vm576, %v3259, %v3260
        %v3262 = vrot.slane %v3255, 1
        %v3263 = vsel %vm576, %v3260, %v3262
        %3264 = vrot.lane.b32.xlu0 %v3261, 127
        %v3265 = vpop.permute.xlu0 %3264
        %3266 = vrot.lane.b32.xlu0 %v3263, 127
        %v3267 = vpop.permute.xlu0 %3266
        %v3270 = vadd.f32 %v3110, %v3265
        %v3271 = vadd.f32 %v3111, %v3267
        %s3272 = sld [smem:[#allocation8 + $0xee]]
        %v3273 = vstv %s3272
        %v3274 = vmul.f32 %v3273, %v2735
        %v3275 = vmul.f32 %v3273, %v2736
        %v3276 = vmul.f32 %v3273, %v2737
        %v3280 = vrot.slane %v3274, 1
        %v3281 = vrot.slane %v3275, 1
        %v3282 = vsel %vm576, %v3280, %v3281
        %v3283 = vrot.slane %v3276, 1
        %v3284 = vsel %vm576, %v3281, %v3283
        %3285 = vrot.lane.b32.xlu0 %v3282, 127
        %v3286 = vpop.permute.xlu0 %3285
        %3287 = vrot.lane.b32.xlu0 %v3284, 127
        %v3288 = vpop.permute.xlu0 %3287
        %v3291 = vadd.f32 %v3127, %v3286
        %v3292 = vadd.f32 %v3128, %v3288
        %s3293 = sld [smem:[#allocation8 + $0x112]]
        %v3294 = vstv %s3293
        %v3295 = vmul.f32 %v3294, %v2735
        %v3296 = vmul.f32 %v3294, %v2736
        %v3297 = vmul.f32 %v3294, %v2737
        %v3301 = vrot.slane %v3295, 1
        %v3302 = vrot.slane %v3296, 1
        %v3303 = vsel %vm576, %v3301, %v3302
        %v3304 = vrot.slane %v3297, 1
        %v3305 = vsel %vm576, %v3302, %v3304
        %3306 = vrot.lane.b32.xlu0 %v3303, 127
        %v3307 = vpop.permute.xlu0 %3306
        %3308 = vrot.lane.b32.xlu0 %v3305, 127
        %v3309 = vpop.permute.xlu0 %3308
        %v3312 = vadd.f32 %v3144, %v3307
        %v3313 = vadd.f32 %v3145, %v3309
        %s3314 = sld [smem:[#allocation8 + $0x17]]
        %v3315 = vstv %s3314
        %v3316 = vmul.f32 %v3315, %v2735
        %v3317 = vmul.f32 %v3315, %v2736
        %v3318 = vmul.f32 %v3315, %v2737
        %v3322 = vrot.slane %v3316, 1
        %v3323 = vrot.slane %v3317, 1
        %v3324 = vsel %vm576, %v3322, %v3323
        %v3325 = vrot.slane %v3318, 1
        %v3326 = vsel %vm576, %v3323, %v3325
        %3327 = vrot.lane.b32.xlu0 %v3324, 126
        %v3328 = vpop.permute.xlu0 %3327
        %3329 = vrot.lane.b32.xlu0 %v3326, 126
        %v3330 = vpop.permute.xlu0 %3329
        %v3333 = vadd.f32 %v3165, %v3328
        %v3334 = vadd.f32 %v3166, %v3330
        %s3335 = sld [smem:[#allocation8 + $0x3b]]
        %v3336 = vstv %s3335
        %v3337 = vmul.f32 %v3336, %v2735
        %v3338 = vmul.f32 %v3336, %v2736
        %v3339 = vmul.f32 %v3336, %v2737
        %v3343 = vrot.slane %v3337, 1
        %v3344 = vrot.slane %v3338, 1
        %v3345 = vsel %vm576, %v3343, %v3344
        %v3346 = vrot.slane %v3339, 1
        %v3347 = vsel %vm576, %v3344, %v3346
        %3348 = vrot.lane.b32.xlu0 %v3345, 126
        %v3349 = vpop.permute.xlu0 %3348
        %3350 = vrot.lane.b32.xlu0 %v3347, 126
        %v3351 = vpop.permute.xlu0 %3350
        %v3354 = vadd.f32 %v3186, %v3349
        %v3355 = vadd.f32 %v3187, %v3351
        %s3356 = sld [smem:[#allocation8 + $0x5f]]
        %v3357 = vstv %s3356
        %v3358 = vmul.f32 %v3357, %v2735
        %v3359 = vmul.f32 %v3357, %v2736
        %v3360 = vmul.f32 %v3357, %v2737
        %v3364 = vrot.slane %v3358, 1
        %v3365 = vrot.slane %v3359, 1
        %v3366 = vsel %vm576, %v3364, %v3365
        %v3367 = vrot.slane %v3360, 1
        %v3368 = vsel %vm576, %v3365, %v3367
        %3369 = vrot.lane.b32.xlu0 %v3366, 126
        %v3370 = vpop.permute.xlu0 %3369
        %3371 = vrot.lane.b32.xlu0 %v3368, 126
        %v3372 = vpop.permute.xlu0 %3371
        %v3375 = vadd.f32 %v3207, %v3370
        %v3376 = vadd.f32 %v3208, %v3372
        %s3377 = sld [smem:[#allocation8 + $0x83]]
        %v3378 = vstv %s3377
        %v3379 = vmul.f32 %v3378, %v2735
        %v3380 = vmul.f32 %v3378, %v2736
        %v3381 = vmul.f32 %v3378, %v2737
        %v3385 = vrot.slane %v3379, 1
        %v3386 = vrot.slane %v3380, 1
        %v3387 = vsel %vm576, %v3385, %v3386
        %v3388 = vrot.slane %v3381, 1
        %v3389 = vsel %vm576, %v3386, %v3388
        %3390 = vrot.lane.b32.xlu0 %v3387, 126
        %v3391 = vpop.permute.xlu0 %3390
        %3392 = vrot.lane.b32.xlu0 %v3389, 126
        %v3393 = vpop.permute.xlu0 %3392
        %v3396 = vadd.f32 %v3228, %v3391
        %v3397 = vadd.f32 %v3229, %v3393
        %s3398 = sld [smem:[#allocation8 + $0xa7]]
        %v3399 = vstv %s3398
        %v3400 = vmul.f32 %v3399, %v2735
        %v3401 = vmul.f32 %v3399, %v2736
        %v3402 = vmul.f32 %v3399, %v2737
        %v3406 = vrot.slane %v3400, 1
        %v3407 = vrot.slane %v3401, 1
        %v3408 = vsel %vm576, %v3406, %v3407
        %v3409 = vrot.slane %v3402, 1
        %v3410 = vsel %vm576, %v3407, %v3409
        %3411 = vrot.lane.b32.xlu0 %v3408, 126
        %v3412 = vpop.permute.xlu0 %3411
        %3413 = vrot.lane.b32.xlu0 %v3410, 126
        %v3414 = vpop.permute.xlu0 %3413
        %v3417 = vadd.f32 %v3249, %v3412
        %v3418 = vadd.f32 %v3250, %v3414
        %s3419 = sld [smem:[#allocation8 + $0xcb]]
        %v3420 = vstv %s3419
        %v3421 = vmul.f32 %v3420, %v2735
        %v3422 = vmul.f32 %v3420, %v2736
        %v3423 = vmul.f32 %v3420, %v2737
        %v3427 = vrot.slane %v3421, 1
        %v3428 = vrot.slane %v3422, 1
        %v3429 = vsel %vm576, %v3427, %v3428
        %v3430 = vrot.slane %v3423, 1
        %v3431 = vsel %vm576, %v3428, %v3430
        %3432 = vrot.lane.b32.xlu0 %v3429, 126
        %v3433 = vpop.permute.xlu0 %3432
        %3434 = vrot.lane.b32.xlu0 %v3431, 126
        %v3435 = vpop.permute.xlu0 %3434
        %v3438 = vadd.f32 %v3270, %v3433
        %v3439 = vadd.f32 %v3271, %v3435
        %s3440 = sld [smem:[#allocation8 + $0xef]]
        %v3441 = vstv %s3440
        %v3442 = vmul.f32 %v3441, %v2735
        %v3443 = vmul.f32 %v3441, %v2736
        %v3444 = vmul.f32 %v3441, %v2737
        %v3448 = vrot.slane %v3442, 1
        %v3449 = vrot.slane %v3443, 1
        %v3450 = vsel %vm576, %v3448, %v3449
        %v3451 = vrot.slane %v3444, 1
        %v3452 = vsel %vm576, %v3449, %v3451
        %3453 = vrot.lane.b32.xlu0 %v3450, 126
        %v3454 = vpop.permute.xlu0 %3453
        %3455 = vrot.lane.b32.xlu0 %v3452, 126
        %v3456 = vpop.permute.xlu0 %3455
        %v3459 = vadd.f32 %v3291, %v3454
        %v3460 = vadd.f32 %v3292, %v3456
        %s3461 = sld [smem:[#allocation8 + $0x113]]
        %v3462 = vstv %s3461
        %v3463 = vmul.f32 %v3462, %v2735
        %v3464 = vmul.f32 %v3462, %v2736
        %v3465 = vmul.f32 %v3462, %v2737
        %v3469 = vrot.slane %v3463, 1
        %v3470 = vrot.slane %v3464, 1
        %v3471 = vsel %vm576, %v3469, %v3470
        %v3472 = vrot.slane %v3465, 1
        %v3473 = vsel %vm576, %v3470, %v3472
        %3474 = vrot.lane.b32.xlu0 %v3471, 126
        %v3475 = vpop.permute.xlu0 %3474
        %3476 = vrot.lane.b32.xlu0 %v3473, 126
        %v3477 = vpop.permute.xlu0 %3476
        %v3480 = vadd.f32 %v3312, %v3475
        %v3481 = vadd.f32 %v3313, %v3477
        %s3482 = sld [smem:[#allocation8 + $0x18]]
        %v3483 = vstv %s3482
        %v3484 = vmul.f32 %v3483, %v2735
        %v3485 = vmul.f32 %v3483, %v2736
        %v3486 = vmul.f32 %v3483, %v2737
        %v3490 = vrot.slane %v3484, 2
        %v3491 = vrot.slane %v3485, 2
        %v3492 = vsel %vm1049, %v3490, %v3491
        %v3493 = vrot.slane %v3486, 2
        %v3494 = vsel %vm1049, %v3491, %v3493
        %v3497 = vadd.f32 %v3333, %v3492
        %v3498 = vadd.f32 %v3334, %v3494
        %s3499 = sld [smem:[#allocation8 + $0x3c]]
        %v3500 = vstv %s3499
        %v3501 = vmul.f32 %v3500, %v2735
        %v3502 = vmul.f32 %v3500, %v2736
        %v3503 = vmul.f32 %v3500, %v2737
        %v3507 = vrot.slane %v3501, 2
        %v3508 = vrot.slane %v3502, 2
        %v3509 = vsel %vm1049, %v3507, %v3508
        %v3510 = vrot.slane %v3503, 2
        %v3511 = vsel %vm1049, %v3508, %v3510
        %v3514 = vadd.f32 %v3354, %v3509
        %v3515 = vadd.f32 %v3355, %v3511
        %s3516 = sld [smem:[#allocation8 + $0x60]]
        %v3517 = vstv %s3516
        %v3518 = vmul.f32 %v3517, %v2735
        %v3519 = vmul.f32 %v3517, %v2736
        %v3520 = vmul.f32 %v3517, %v2737
        %v3524 = vrot.slane %v3518, 2
        %v3525 = vrot.slane %v3519, 2
        %v3526 = vsel %vm1049, %v3524, %v3525
        %v3527 = vrot.slane %v3520, 2
        %v3528 = vsel %vm1049, %v3525, %v3527
        %v3531 = vadd.f32 %v3375, %v3526
        %v3532 = vadd.f32 %v3376, %v3528
        %s3533 = sld [smem:[#allocation8 + $0x84]]
        %v3534 = vstv %s3533
        %v3535 = vmul.f32 %v3534, %v2735
        %v3536 = vmul.f32 %v3534, %v2736
        %v3537 = vmul.f32 %v3534, %v2737
        %v3541 = vrot.slane %v3535, 2
        %v3542 = vrot.slane %v3536, 2
        %v3543 = vsel %vm1049, %v3541, %v3542
        %v3544 = vrot.slane %v3537, 2
        %v3545 = vsel %vm1049, %v3542, %v3544
        %v3548 = vadd.f32 %v3396, %v3543
        %v3549 = vadd.f32 %v3397, %v3545
        %s3550 = sld [smem:[#allocation8 + $0xa8]]
        %v3551 = vstv %s3550
        %v3552 = vmul.f32 %v3551, %v2735
        %v3553 = vmul.f32 %v3551, %v2736
        %v3554 = vmul.f32 %v3551, %v2737
        %v3558 = vrot.slane %v3552, 2
        %v3559 = vrot.slane %v3553, 2
        %v3560 = vsel %vm1049, %v3558, %v3559
        %v3561 = vrot.slane %v3554, 2
        %v3562 = vsel %vm1049, %v3559, %v3561
        %v3565 = vadd.f32 %v3417, %v3560
        %v3566 = vadd.f32 %v3418, %v3562
        %s3567 = sld [smem:[#allocation8 + $0xcc]]
        %v3568 = vstv %s3567
        %v3569 = vmul.f32 %v3568, %v2735
        %v3570 = vmul.f32 %v3568, %v2736
        %v3571 = vmul.f32 %v3568, %v2737
        %v3575 = vrot.slane %v3569, 2
        %v3576 = vrot.slane %v3570, 2
        %v3577 = vsel %vm1049, %v3575, %v3576
        %v3578 = vrot.slane %v3571, 2
        %v3579 = vsel %vm1049, %v3576, %v3578
        %v3582 = vadd.f32 %v3438, %v3577
        %v3583 = vadd.f32 %v3439, %v3579
        %s3584 = sld [smem:[#allocation8 + $0xf0]]
        %v3585 = vstv %s3584
        %v3586 = vmul.f32 %v3585, %v2735
        %v3587 = vmul.f32 %v3585, %v2736
        %v3588 = vmul.f32 %v3585, %v2737
        %v3592 = vrot.slane %v3586, 2
        %v3593 = vrot.slane %v3587, 2
        %v3594 = vsel %vm1049, %v3592, %v3593
        %v3595 = vrot.slane %v3588, 2
        %v3596 = vsel %vm1049, %v3593, %v3595
        %v3599 = vadd.f32 %v3459, %v3594
        %v3600 = vadd.f32 %v3460, %v3596
        %s3601 = sld [smem:[#allocation8 + $0x114]]
        %v3602 = vstv %s3601
        %v3603 = vmul.f32 %v3602, %v2735
        %v3604 = vmul.f32 %v3602, %v2736
        %v3605 = vmul.f32 %v3602, %v2737
        %v3609 = vrot.slane %v3603, 2
        %v3610 = vrot.slane %v3604, 2
        %v3611 = vsel %vm1049, %v3609, %v3610
        %v3612 = vrot.slane %v3605, 2
        %v3613 = vsel %vm1049, %v3610, %v3612
        %v3616 = vadd.f32 %v3480, %v3611
        %v3617 = vadd.f32 %v3481, %v3613
        %s3618 = sld [smem:[#allocation8 + $0x19]]
        %v3619 = vstv %s3618
        %v3620 = vmul.f32 %v3619, %v2735
        %v3621 = vmul.f32 %v3619, %v2736
        %v3622 = vmul.f32 %v3619, %v2737
        %v3626 = vrot.slane %v3620, 2
        %v3627 = vrot.slane %v3621, 2
        %v3628 = vsel %vm1049, %v3626, %v3627
        %v3629 = vrot.slane %v3622, 2
        %v3630 = vsel %vm1049, %v3627, %v3629
        %3631 = vrot.lane.b32.xlu0 %v3628, 127
        %v3632 = vpop.permute.xlu0 %3631
        %3633 = vrot.lane.b32.xlu0 %v3630, 127
        %v3634 = vpop.permute.xlu0 %3633
        %v3637 = vadd.f32 %v3497, %v3632
        %v3638 = vadd.f32 %v3498, %v3634
        %s3639 = sld [smem:[#allocation8 + $0x3d]]
        %v3640 = vstv %s3639
        %v3641 = vmul.f32 %v3640, %v2735
        %v3642 = vmul.f32 %v3640, %v2736
        %v3643 = vmul.f32 %v3640, %v2737
        %v3647 = vrot.slane %v3641, 2
        %v3648 = vrot.slane %v3642, 2
        %v3649 = vsel %vm1049, %v3647, %v3648
        %v3650 = vrot.slane %v3643, 2
        %v3651 = vsel %vm1049, %v3648, %v3650
        %3652 = vrot.lane.b32.xlu0 %v3649, 127
        %v3653 = vpop.permute.xlu0 %3652
        %3654 = vrot.lane.b32.xlu0 %v3651, 127
        %v3655 = vpop.permute.xlu0 %3654
        %v3658 = vadd.f32 %v3514, %v3653
        %v3659 = vadd.f32 %v3515, %v3655
        %s3660 = sld [smem:[#allocation8 + $0x61]]
        %v3661 = vstv %s3660
        %v3662 = vmul.f32 %v3661, %v2735
        %v3663 = vmul.f32 %v3661, %v2736
        %v3664 = vmul.f32 %v3661, %v2737
        %v3668 = vrot.slane %v3662, 2
        %v3669 = vrot.slane %v3663, 2
        %v3670 = vsel %vm1049, %v3668, %v3669
        %v3671 = vrot.slane %v3664, 2
        %v3672 = vsel %vm1049, %v3669, %v3671
        %3673 = vrot.lane.b32.xlu0 %v3670, 127
        %v3674 = vpop.permute.xlu0 %3673
        %3675 = vrot.lane.b32.xlu0 %v3672, 127
        %v3676 = vpop.permute.xlu0 %3675
        %v3679 = vadd.f32 %v3531, %v3674
        %v3680 = vadd.f32 %v3532, %v3676
        %s3681 = sld [smem:[#allocation8 + $0x85]]
        %v3682 = vstv %s3681
        %v3683 = vmul.f32 %v3682, %v2735
        %v3684 = vmul.f32 %v3682, %v2736
        %v3685 = vmul.f32 %v3682, %v2737
        %v3689 = vrot.slane %v3683, 2
        %v3690 = vrot.slane %v3684, 2
        %v3691 = vsel %vm1049, %v3689, %v3690
        %v3692 = vrot.slane %v3685, 2
        %v3693 = vsel %vm1049, %v3690, %v3692
        %3694 = vrot.lane.b32.xlu0 %v3691, 127
        %v3695 = vpop.permute.xlu0 %3694
        %3696 = vrot.lane.b32.xlu0 %v3693, 127
        %v3697 = vpop.permute.xlu0 %3696
        %v3700 = vadd.f32 %v3548, %v3695
        %v3701 = vadd.f32 %v3549, %v3697
        %s3702 = sld [smem:[#allocation8 + $0xa9]]
        %v3703 = vstv %s3702
        %v3704 = vmul.f32 %v3703, %v2735
        %v3705 = vmul.f32 %v3703, %v2736
        %v3706 = vmul.f32 %v3703, %v2737
        %v3710 = vrot.slane %v3704, 2
        %v3711 = vrot.slane %v3705, 2
        %v3712 = vsel %vm1049, %v3710, %v3711
        %v3713 = vrot.slane %v3706, 2
        %v3714 = vsel %vm1049, %v3711, %v3713
        %3715 = vrot.lane.b32.xlu0 %v3712, 127
        %v3716 = vpop.permute.xlu0 %3715
        %3717 = vrot.lane.b32.xlu0 %v3714, 127
        %v3718 = vpop.permute.xlu0 %3717
        %v3721 = vadd.f32 %v3565, %v3716
        %v3722 = vadd.f32 %v3566, %v3718
        %s3723 = sld [smem:[#allocation8 + $0xcd]]
        %v3724 = vstv %s3723
        %v3725 = vmul.f32 %v3724, %v2735
        %v3726 = vmul.f32 %v3724, %v2736
        %v3727 = vmul.f32 %v3724, %v2737
        %v3731 = vrot.slane %v3725, 2
        %v3732 = vrot.slane %v3726, 2
        %v3733 = vsel %vm1049, %v3731, %v3732
        %v3734 = vrot.slane %v3727, 2
        %v3735 = vsel %vm1049, %v3732, %v3734
        %3736 = vrot.lane.b32.xlu0 %v3733, 127
        %v3737 = vpop.permute.xlu0 %3736
        %3738 = vrot.lane.b32.xlu0 %v3735, 127
        %v3739 = vpop.permute.xlu0 %3738
        %v3742 = vadd.f32 %v3582, %v3737
        %v3743 = vadd.f32 %v3583, %v3739
        %s3744 = sld [smem:[#allocation8 + $0xf1]]
        %v3745 = vstv %s3744
        %v3746 = vmul.f32 %v3745, %v2735
        %v3747 = vmul.f32 %v3745, %v2736
        %v3748 = vmul.f32 %v3745, %v2737
        %v3752 = vrot.slane %v3746, 2
        %v3753 = vrot.slane %v3747, 2
        %v3754 = vsel %vm1049, %v3752, %v3753
        %v3755 = vrot.slane %v3748, 2
        %v3756 = vsel %vm1049, %v3753, %v3755
        %3757 = vrot.lane.b32.xlu0 %v3754, 127
        %v3758 = vpop.permute.xlu0 %3757
        %3759 = vrot.lane.b32.xlu0 %v3756, 127
        %v3760 = vpop.permute.xlu0 %3759
        %v3763 = vadd.f32 %v3599, %v3758
        %v3764 = vadd.f32 %v3600, %v3760
        %s3765 = sld [smem:[#allocation8 + $0x115]]
        %v3766 = vstv %s3765
        %v3767 = vmul.f32 %v3766, %v2735
        %v3768 = vmul.f32 %v3766, %v2736
        %v3769 = vmul.f32 %v3766, %v2737
        %v3773 = vrot.slane %v3767, 2
        %v3774 = vrot.slane %v3768, 2
        %v3775 = vsel %vm1049, %v3773, %v3774
        %v3776 = vrot.slane %v3769, 2
        %v3777 = vsel %vm1049, %v3774, %v3776
        %3778 = vrot.lane.b32.xlu0 %v3775, 127
        %v3779 = vpop.permute.xlu0 %3778
        %3780 = vrot.lane.b32.xlu0 %v3777, 127
        %v3781 = vpop.permute.xlu0 %3780
        %v3784 = vadd.f32 %v3616, %v3779
        %v3785 = vadd.f32 %v3617, %v3781
        %s3786 = sld [smem:[#allocation8 + $0x1a]]
        %v3787 = vstv %s3786
        %v3788 = vmul.f32 %v3787, %v2735
        %v3789 = vmul.f32 %v3787, %v2736
        %v3790 = vmul.f32 %v3787, %v2737
        %v3794 = vrot.slane %v3788, 2
        %v3795 = vrot.slane %v3789, 2
        %v3796 = vsel %vm1049, %v3794, %v3795
        %v3797 = vrot.slane %v3790, 2
        %v3798 = vsel %vm1049, %v3795, %v3797
        %3799 = vrot.lane.b32.xlu0 %v3796, 126
        %v3800 = vpop.permute.xlu0 %3799
        %3801 = vrot.lane.b32.xlu0 %v3798, 126
        %v3802 = vpop.permute.xlu0 %3801
        %v3805 = vadd.f32 %v3637, %v3800
        %v3806 = vadd.f32 %v3638, %v3802
        %s3807 = sld [smem:[#allocation8 + $0x3e]]
        %v3808 = vstv %s3807
        %v3809 = vmul.f32 %v3808, %v2735
        %v3810 = vmul.f32 %v3808, %v2736
        %v3811 = vmul.f32 %v3808, %v2737
        %v3815 = vrot.slane %v3809, 2
        %v3816 = vrot.slane %v3810, 2
        %v3817 = vsel %vm1049, %v3815, %v3816
        %v3818 = vrot.slane %v3811, 2
        %v3819 = vsel %vm1049, %v3816, %v3818
        %3820 = vrot.lane.b32.xlu0 %v3817, 126
        %v3821 = vpop.permute.xlu0 %3820
        %3822 = vrot.lane.b32.xlu0 %v3819, 126
        %v3823 = vpop.permute.xlu0 %3822
        %v3826 = vadd.f32 %v3658, %v3821
        %v3827 = vadd.f32 %v3659, %v3823
        %s3828 = sld [smem:[#allocation8 + $0x62]]
        %v3829 = vstv %s3828
        %v3830 = vmul.f32 %v3829, %v2735
        %v3831 = vmul.f32 %v3829, %v2736
        %v3832 = vmul.f32 %v3829, %v2737
        %v3836 = vrot.slane %v3830, 2
        %v3837 = vrot.slane %v3831, 2
        %v3838 = vsel %vm1049, %v3836, %v3837
        %v3839 = vrot.slane %v3832, 2
        %v3840 = vsel %vm1049, %v3837, %v3839
        %3841 = vrot.lane.b32.xlu0 %v3838, 126
        %v3842 = vpop.permute.xlu0 %3841
        %3843 = vrot.lane.b32.xlu0 %v3840, 126
        %v3844 = vpop.permute.xlu0 %3843
        %v3847 = vadd.f32 %v3679, %v3842
        %v3848 = vadd.f32 %v3680, %v3844
        %s3849 = sld [smem:[#allocation8 + $0x86]]
        %v3850 = vstv %s3849
        %v3851 = vmul.f32 %v3850, %v2735
        %v3852 = vmul.f32 %v3850, %v2736
        %v3853 = vmul.f32 %v3850, %v2737
        %v3857 = vrot.slane %v3851, 2
        %v3858 = vrot.slane %v3852, 2
        %v3859 = vsel %vm1049, %v3857, %v3858
        %v3860 = vrot.slane %v3853, 2
        %v3861 = vsel %vm1049, %v3858, %v3860
        %3862 = vrot.lane.b32.xlu0 %v3859, 126
        %v3863 = vpop.permute.xlu0 %3862
        %3864 = vrot.lane.b32.xlu0 %v3861, 126
        %v3865 = vpop.permute.xlu0 %3864
        %v3868 = vadd.f32 %v3700, %v3863
        %v3869 = vadd.f32 %v3701, %v3865
        %s3870 = sld [smem:[#allocation8 + $0xaa]]
        %v3871 = vstv %s3870
        %v3872 = vmul.f32 %v3871, %v2735
        %v3873 = vmul.f32 %v3871, %v2736
        %v3874 = vmul.f32 %v3871, %v2737
        %v3878 = vrot.slane %v3872, 2
        %v3879 = vrot.slane %v3873, 2
        %v3880 = vsel %vm1049, %v3878, %v3879
        %v3881 = vrot.slane %v3874, 2
        %v3882 = vsel %vm1049, %v3879, %v3881
        %3883 = vrot.lane.b32.xlu0 %v3880, 126
        %v3884 = vpop.permute.xlu0 %3883
        %3885 = vrot.lane.b32.xlu0 %v3882, 126
        %v3886 = vpop.permute.xlu0 %3885
        %v3889 = vadd.f32 %v3721, %v3884
        %v3890 = vadd.f32 %v3722, %v3886
        %s3891 = sld [smem:[#allocation8 + $0xce]]
        %v3892 = vstv %s3891
        %v3893 = vmul.f32 %v3892, %v2735
        %v3894 = vmul.f32 %v3892, %v2736
        %v3895 = vmul.f32 %v3892, %v2737
        %v3899 = vrot.slane %v3893, 2
        %v3900 = vrot.slane %v3894, 2
        %v3901 = vsel %vm1049, %v3899, %v3900
        %v3902 = vrot.slane %v3895, 2
        %v3903 = vsel %vm1049, %v3900, %v3902
        %3904 = vrot.lane.b32.xlu0 %v3901, 126
        %v3905 = vpop.permute.xlu0 %3904
        %3906 = vrot.lane.b32.xlu0 %v3903, 126
        %v3907 = vpop.permute.xlu0 %3906
        %v3910 = vadd.f32 %v3742, %v3905
        %v3911 = vadd.f32 %v3743, %v3907
        %s3912 = sld [smem:[#allocation8 + $0xf2]]
        %v3913 = vstv %s3912
        %v3914 = vmul.f32 %v3913, %v2735
        %v3915 = vmul.f32 %v3913, %v2736
        %v3916 = vmul.f32 %v3913, %v2737
        %v3920 = vrot.slane %v3914, 2
        %v3921 = vrot.slane %v3915, 2
        %v3922 = vsel %vm1049, %v3920, %v3921
        %v3923 = vrot.slane %v3916, 2
        %v3924 = vsel %vm1049, %v3921, %v3923
        %3925 = vrot.lane.b32.xlu0 %v3922, 126
        %v3926 = vpop.permute.xlu0 %3925
        %3927 = vrot.lane.b32.xlu0 %v3924, 126
        %v3928 = vpop.permute.xlu0 %3927
        %v3931 = vadd.f32 %v3763, %v3926
        %v3932 = vadd.f32 %v3764, %v3928
        %s3933 = sld [smem:[#allocation8 + $0x116]]
        %v3934 = vstv %s3933
        %v3935 = vmul.f32 %v3934, %v2735
        %v3936 = vmul.f32 %v3934, %v2736
        %v3937 = vmul.f32 %v3934, %v2737
        %v3941 = vrot.slane %v3935, 2
        %v3942 = vrot.slane %v3936, 2
        %v3943 = vsel %vm1049, %v3941, %v3942
        %v3944 = vrot.slane %v3937, 2
        %v3945 = vsel %vm1049, %v3942, %v3944
        %3946 = vrot.lane.b32.xlu0 %v3943, 126
        %v3947 = vpop.permute.xlu0 %3946
        %3948 = vrot.lane.b32.xlu0 %v3945, 126
        %v3949 = vpop.permute.xlu0 %3948
        %v3952 = vadd.f32 %v3784, %v3947
        %v3953 = vadd.f32 %v3785, %v3949
        %s3954 = scalar_lea.vmem [#allocation2], 72
        %v3955 = vld [vmem:[%s3954] sm:$0xff]
        %v3956 = vld [vmem:[%s3954 + $0x8] sm:$0xff]
        %v3957 = vld [vmem:[%s3954 + $0x10] sm:$0x3]
        %s3958 = sld [smem:[#allocation8 + $0x1b]]
        %v3959 = vstv %s3958
        %v3960 = vmul.f32 %v3959, %v3955
        %v3961 = vmul.f32 %v3959, %v3956
        %v3962 = vadd.f32 %v3805, %v3960
        %v3963 = vadd.f32 %v3806, %v3961
        %s3964 = sld [smem:[#allocation8 + $0x3f]]
        %v3965 = vstv %s3964
        %v3966 = vmul.f32 %v3965, %v3955
        %v3967 = vmul.f32 %v3965, %v3956
        %v3968 = vadd.f32 %v3826, %v3966
        %v3969 = vadd.f32 %v3827, %v3967
        %s3970 = sld [smem:[#allocation8 + $0x63]]
        %v3971 = vstv %s3970
        %v3972 = vmul.f32 %v3971, %v3955
        %v3973 = vmul.f32 %v3971, %v3956
        %v3974 = vadd.f32 %v3847, %v3972
        %v3975 = vadd.f32 %v3848, %v3973
        %s3976 = sld [smem:[#allocation8 + $0x87]]
        %v3977 = vstv %s3976
        %v3978 = vmul.f32 %v3977, %v3955
        %v3979 = vmul.f32 %v3977, %v3956
        %v3980 = vadd.f32 %v3868, %v3978
        %v3981 = vadd.f32 %v3869, %v3979
        %s3982 = sld [smem:[#allocation8 + $0xab]]
        %v3983 = vstv %s3982
        %v3984 = vmul.f32 %v3983, %v3955
        %v3985 = vmul.f32 %v3983, %v3956
        %v3986 = vadd.f32 %v3889, %v3984
        %v3987 = vadd.f32 %v3890, %v3985
        %s3988 = sld [smem:[#allocation8 + $0xcf]]
        %v3989 = vstv %s3988
        %v3990 = vmul.f32 %v3989, %v3955
        %v3991 = vmul.f32 %v3989, %v3956
        %v3992 = vadd.f32 %v3910, %v3990
        %v3993 = vadd.f32 %v3911, %v3991
        %s3994 = sld [smem:[#allocation8 + $0xf3]]
        %v3995 = vstv %s3994
        %v3996 = vmul.f32 %v3995, %v3955
        %v3997 = vmul.f32 %v3995, %v3956
        %v3998 = vadd.f32 %v3931, %v3996
        %v3999 = vadd.f32 %v3932, %v3997
        %s4000 = sld [smem:[#allocation8 + $0x117]]
        %v4001 = vstv %s4000
        %v4002 = vmul.f32 %v4001, %v3955
        %v4003 = vmul.f32 %v4001, %v3956
        %v4004 = vadd.f32 %v3952, %v4002
        %v4005 = vadd.f32 %v3953, %v4003
        %s4006 = sld [smem:[#allocation8 + $0x1c]]
        %v4007 = vstv %s4006
        %v4008 = vmul.f32 %v4007, %v3955
        %v4009 = vmul.f32 %v4007, %v3956
        %4012 = vrot.lane.b32.xlu0 %v4008, 127
        %v4013 = vpop.permute.xlu0 %4012
        %4014 = vrot.lane.b32.xlu0 %v4009, 127
        %v4015 = vpop.permute.xlu0 %4014
        %v4018 = vadd.f32 %v3962, %v4013
        %v4019 = vadd.f32 %v3963, %v4015
        %s4020 = sld [smem:[#allocation8 + $0x40]]
        %v4021 = vstv %s4020
        %v4022 = vmul.f32 %v4021, %v3955
        %v4023 = vmul.f32 %v4021, %v3956
        %4026 = vrot.lane.b32.xlu0 %v4022, 127
        %v4027 = vpop.permute.xlu0 %4026
        %4028 = vrot.lane.b32.xlu0 %v4023, 127
        %v4029 = vpop.permute.xlu0 %4028
        %v4032 = vadd.f32 %v3968, %v4027
        %v4033 = vadd.f32 %v3969, %v4029
        %s4034 = sld [smem:[#allocation8 + $0x64]]
        %v4035 = vstv %s4034
        %v4036 = vmul.f32 %v4035, %v3955
        %v4037 = vmul.f32 %v4035, %v3956
        %4040 = vrot.lane.b32.xlu0 %v4036, 127
        %v4041 = vpop.permute.xlu0 %4040
        %4042 = vrot.lane.b32.xlu0 %v4037, 127
        %v4043 = vpop.permute.xlu0 %4042
        %v4046 = vadd.f32 %v3974, %v4041
        %v4047 = vadd.f32 %v3975, %v4043
        %s4048 = sld [smem:[#allocation8 + $0x88]]
        %v4049 = vstv %s4048
        %v4050 = vmul.f32 %v4049, %v3955
        %v4051 = vmul.f32 %v4049, %v3956
        %4054 = vrot.lane.b32.xlu0 %v4050, 127
        %v4055 = vpop.permute.xlu0 %4054
        %4056 = vrot.lane.b32.xlu0 %v4051, 127
        %v4057 = vpop.permute.xlu0 %4056
        %v4060 = vadd.f32 %v3980, %v4055
        %v4061 = vadd.f32 %v3981, %v4057
        %s4062 = sld [smem:[#allocation8 + $0xac]]
        %v4063 = vstv %s4062
        %v4064 = vmul.f32 %v4063, %v3955
        %v4065 = vmul.f32 %v4063, %v3956
        %4068 = vrot.lane.b32.xlu0 %v4064, 127
        %v4069 = vpop.permute.xlu0 %4068
        %4070 = vrot.lane.b32.xlu0 %v4065, 127
        %v4071 = vpop.permute.xlu0 %4070
        %v4074 = vadd.f32 %v3986, %v4069
        %v4075 = vadd.f32 %v3987, %v4071
        %s4076 = sld [smem:[#allocation8 + $0xd0]]
        %v4077 = vstv %s4076
        %v4078 = vmul.f32 %v4077, %v3955
        %v4079 = vmul.f32 %v4077, %v3956
        %4082 = vrot.lane.b32.xlu0 %v4078, 127
        %v4083 = vpop.permute.xlu0 %4082
        %4084 = vrot.lane.b32.xlu0 %v4079, 127
        %v4085 = vpop.permute.xlu0 %4084
        %v4088 = vadd.f32 %v3992, %v4083
        %v4089 = vadd.f32 %v3993, %v4085
        %s4090 = sld [smem:[#allocation8 + $0xf4]]
        %v4091 = vstv %s4090
        %v4092 = vmul.f32 %v4091, %v3955
        %v4093 = vmul.f32 %v4091, %v3956
        %4096 = vrot.lane.b32.xlu0 %v4092, 127
        %v4097 = vpop.permute.xlu0 %4096
        %4098 = vrot.lane.b32.xlu0 %v4093, 127
        %v4099 = vpop.permute.xlu0 %4098
        %v4102 = vadd.f32 %v3998, %v4097
        %v4103 = vadd.f32 %v3999, %v4099
        %s4104 = sld [smem:[#allocation8 + $0x118]]
        %v4105 = vstv %s4104
        %v4106 = vmul.f32 %v4105, %v3955
        %v4107 = vmul.f32 %v4105, %v3956
        %4110 = vrot.lane.b32.xlu0 %v4106, 127
        %v4111 = vpop.permute.xlu0 %4110
        %4112 = vrot.lane.b32.xlu0 %v4107, 127
        %v4113 = vpop.permute.xlu0 %4112
        %v4116 = vadd.f32 %v4004, %v4111
        %v4117 = vadd.f32 %v4005, %v4113
        %s4118 = sld [smem:[#allocation8 + $0x1d]]
        %v4119 = vstv %s4118
        %v4120 = vmul.f32 %v4119, %v3955
        %v4121 = vmul.f32 %v4119, %v3956
        %4124 = vrot.lane.b32.xlu0 %v4120, 126
        %v4125 = vpop.permute.xlu0 %4124
        %4126 = vrot.lane.b32.xlu0 %v4121, 126
        %v4127 = vpop.permute.xlu0 %4126
        %v4130 = vadd.f32 %v4018, %v4125
        %v4131 = vadd.f32 %v4019, %v4127
        %s4132 = sld [smem:[#allocation8 + $0x41]]
        %v4133 = vstv %s4132
        %v4134 = vmul.f32 %v4133, %v3955
        %v4135 = vmul.f32 %v4133, %v3956
        %4138 = vrot.lane.b32.xlu0 %v4134, 126
        %v4139 = vpop.permute.xlu0 %4138
        %4140 = vrot.lane.b32.xlu0 %v4135, 126
        %v4141 = vpop.permute.xlu0 %4140
        %v4144 = vadd.f32 %v4032, %v4139
        %v4145 = vadd.f32 %v4033, %v4141
        %s4146 = sld [smem:[#allocation8 + $0x65]]
        %v4147 = vstv %s4146
        %v4148 = vmul.f32 %v4147, %v3955
        %v4149 = vmul.f32 %v4147, %v3956
        %4152 = vrot.lane.b32.xlu0 %v4148, 126
        %v4153 = vpop.permute.xlu0 %4152
        %4154 = vrot.lane.b32.xlu0 %v4149, 126
        %v4155 = vpop.permute.xlu0 %4154
        %v4158 = vadd.f32 %v4046, %v4153
        %v4159 = vadd.f32 %v4047, %v4155
        %s4160 = sld [smem:[#allocation8 + $0x89]]
        %v4161 = vstv %s4160
        %v4162 = vmul.f32 %v4161, %v3955
        %v4163 = vmul.f32 %v4161, %v3956
        %4166 = vrot.lane.b32.xlu0 %v4162, 126
        %v4167 = vpop.permute.xlu0 %4166
        %4168 = vrot.lane.b32.xlu0 %v4163, 126
        %v4169 = vpop.permute.xlu0 %4168
        %v4172 = vadd.f32 %v4060, %v4167
        %v4173 = vadd.f32 %v4061, %v4169
        %s4174 = sld [smem:[#allocation8 + $0xad]]
        %v4175 = vstv %s4174
        %v4176 = vmul.f32 %v4175, %v3955
        %v4177 = vmul.f32 %v4175, %v3956
        %4180 = vrot.lane.b32.xlu0 %v4176, 126
        %v4181 = vpop.permute.xlu0 %4180
        %4182 = vrot.lane.b32.xlu0 %v4177, 126
        %v4183 = vpop.permute.xlu0 %4182
        %v4186 = vadd.f32 %v4074, %v4181
        %v4187 = vadd.f32 %v4075, %v4183
        %s4188 = sld [smem:[#allocation8 + $0xd1]]
        %v4189 = vstv %s4188
        %v4190 = vmul.f32 %v4189, %v3955
        %v4191 = vmul.f32 %v4189, %v3956
        %4194 = vrot.lane.b32.xlu0 %v4190, 126
        %v4195 = vpop.permute.xlu0 %4194
        %4196 = vrot.lane.b32.xlu0 %v4191, 126
        %v4197 = vpop.permute.xlu0 %4196
        %v4200 = vadd.f32 %v4088, %v4195
        %v4201 = vadd.f32 %v4089, %v4197
        %s4202 = sld [smem:[#allocation8 + $0xf5]]
        %v4203 = vstv %s4202
        %v4204 = vmul.f32 %v4203, %v3955
        %v4205 = vmul.f32 %v4203, %v3956
        %4208 = vrot.lane.b32.xlu0 %v4204, 126
        %v4209 = vpop.permute.xlu0 %4208
        %4210 = vrot.lane.b32.xlu0 %v4205, 126
        %v4211 = vpop.permute.xlu0 %4210
        %v4214 = vadd.f32 %v4102, %v4209
        %v4215 = vadd.f32 %v4103, %v4211
        %s4216 = sld [smem:[#allocation8 + $0x119]]
        %v4217 = vstv %s4216
        %v4218 = vmul.f32 %v4217, %v3955
        %v4219 = vmul.f32 %v4217, %v3956
        %4222 = vrot.lane.b32.xlu0 %v4218, 126
        %v4223 = vpop.permute.xlu0 %4222
        %4224 = vrot.lane.b32.xlu0 %v4219, 126
        %v4225 = vpop.permute.xlu0 %4224
        %v4228 = vadd.f32 %v4116, %v4223
        %v4229 = vadd.f32 %v4117, %v4225
        %s4230 = sld [smem:[#allocation8 + $0x1e]]
        %v4231 = vstv %s4230
        %v4232 = vmul.f32 %v4231, %v3955
        %v4233 = vmul.f32 %v4231, %v3956
        %v4234 = vmul.f32 %v4231, %v3957
        %v4238 = vrot.slane %v4232, 1
        %v4239 = vrot.slane %v4233, 1
        %v4240 = vsel %vm576, %v4238, %v4239
        %v4241 = vrot.slane %v4234, 1
        %v4242 = vsel %vm576, %v4239, %v4241
        %v4245 = vadd.f32 %v4130, %v4240
        %v4246 = vadd.f32 %v4131, %v4242
        %s4247 = sld [smem:[#allocation8 + $0x42]]
        %v4248 = vstv %s4247
        %v4249 = vmul.f32 %v4248, %v3955
        %v4250 = vmul.f32 %v4248, %v3956
        %v4251 = vmul.f32 %v4248, %v3957
        %v4255 = vrot.slane %v4249, 1
        %v4256 = vrot.slane %v4250, 1
        %v4257 = vsel %vm576, %v4255, %v4256
        %v4258 = vrot.slane %v4251, 1
        %v4259 = vsel %vm576, %v4256, %v4258
        %v4262 = vadd.f32 %v4144, %v4257
        %v4263 = vadd.f32 %v4145, %v4259
        %s4264 = sld [smem:[#allocation8 + $0x66]]
        %v4265 = vstv %s4264
        %v4266 = vmul.f32 %v4265, %v3955
        %v4267 = vmul.f32 %v4265, %v3956
        %v4268 = vmul.f32 %v4265, %v3957
        %v4272 = vrot.slane %v4266, 1
        %v4273 = vrot.slane %v4267, 1
        %v4274 = vsel %vm576, %v4272, %v4273
        %v4275 = vrot.slane %v4268, 1
        %v4276 = vsel %vm576, %v4273, %v4275
        %v4279 = vadd.f32 %v4158, %v4274
        %v4280 = vadd.f32 %v4159, %v4276
        %s4281 = sld [smem:[#allocation8 + $0x8a]]
        %v4282 = vstv %s4281
        %v4283 = vmul.f32 %v4282, %v3955
        %v4284 = vmul.f32 %v4282, %v3956
        %v4285 = vmul.f32 %v4282, %v3957
        %v4289 = vrot.slane %v4283, 1
        %v4290 = vrot.slane %v4284, 1
        %v4291 = vsel %vm576, %v4289, %v4290
        %v4292 = vrot.slane %v4285, 1
        %v4293 = vsel %vm576, %v4290, %v4292
        %v4296 = vadd.f32 %v4172, %v4291
        %v4297 = vadd.f32 %v4173, %v4293
        %s4298 = sld [smem:[#allocation8 + $0xae]]
        %v4299 = vstv %s4298
        %v4300 = vmul.f32 %v4299, %v3955
        %v4301 = vmul.f32 %v4299, %v3956
        %v4302 = vmul.f32 %v4299, %v3957
        %v4306 = vrot.slane %v4300, 1
        %v4307 = vrot.slane %v4301, 1
        %v4308 = vsel %vm576, %v4306, %v4307
        %v4309 = vrot.slane %v4302, 1
        %v4310 = vsel %vm576, %v4307, %v4309
        %v4313 = vadd.f32 %v4186, %v4308
        %v4314 = vadd.f32 %v4187, %v4310
        %s4315 = sld [smem:[#allocation8 + $0xd2]]
        %v4316 = vstv %s4315
        %v4317 = vmul.f32 %v4316, %v3955
        %v4318 = vmul.f32 %v4316, %v3956
        %v4319 = vmul.f32 %v4316, %v3957
        %v4323 = vrot.slane %v4317, 1
        %v4324 = vrot.slane %v4318, 1
        %v4325 = vsel %vm576, %v4323, %v4324
        %v4326 = vrot.slane %v4319, 1
        %v4327 = vsel %vm576, %v4324, %v4326
        %v4330 = vadd.f32 %v4200, %v4325
        %v4331 = vadd.f32 %v4201, %v4327
        %s4332 = sld [smem:[#allocation8 + $0xf6]]
        %v4333 = vstv %s4332
        %v4334 = vmul.f32 %v4333, %v3955
        %v4335 = vmul.f32 %v4333, %v3956
        %v4336 = vmul.f32 %v4333, %v3957
        %v4340 = vrot.slane %v4334, 1
        %v4341 = vrot.slane %v4335, 1
        %v4342 = vsel %vm576, %v4340, %v4341
        %v4343 = vrot.slane %v4336, 1
        %v4344 = vsel %vm576, %v4341, %v4343
        %v4347 = vadd.f32 %v4214, %v4342
        %v4348 = vadd.f32 %v4215, %v4344
        %s4349 = sld [smem:[#allocation8 + $0x11a]]
        %v4350 = vstv %s4349
        %v4351 = vmul.f32 %v4350, %v3955
        %v4352 = vmul.f32 %v4350, %v3956
        %v4353 = vmul.f32 %v4350, %v3957
        %v4357 = vrot.slane %v4351, 1
        %v4358 = vrot.slane %v4352, 1
        %v4359 = vsel %vm576, %v4357, %v4358
        %v4360 = vrot.slane %v4353, 1
        %v4361 = vsel %vm576, %v4358, %v4360
        %v4364 = vadd.f32 %v4228, %v4359
        %v4365 = vadd.f32 %v4229, %v4361
        %s4366 = sld [smem:[#allocation8 + $0x1f]]
        %v4367 = vstv %s4366
        %v4368 = vmul.f32 %v4367, %v3955
        %v4369 = vmul.f32 %v4367, %v3956
        %v4370 = vmul.f32 %v4367, %v3957
        %v4374 = vrot.slane %v4368, 1
        %v4375 = vrot.slane %v4369, 1
        %v4376 = vsel %vm576, %v4374, %v4375
        %v4377 = vrot.slane %v4370, 1
        %v4378 = vsel %vm576, %v4375, %v4377
        %4379 = vrot.lane.b32.xlu0 %v4376, 127
        %v4380 = vpop.permute.xlu0 %4379
        %4381 = vrot.lane.b32.xlu0 %v4378, 127
        %v4382 = vpop.permute.xlu0 %4381
        %v4385 = vadd.f32 %v4245, %v4380
        %v4386 = vadd.f32 %v4246, %v4382
        %s4387 = sld [smem:[#allocation8 + $0x43]]
        %v4388 = vstv %s4387
        %v4389 = vmul.f32 %v4388, %v3955
        %v4390 = vmul.f32 %v4388, %v3956
        %v4391 = vmul.f32 %v4388, %v3957
        %v4395 = vrot.slane %v4389, 1
        %v4396 = vrot.slane %v4390, 1
        %v4397 = vsel %vm576, %v4395, %v4396
        %v4398 = vrot.slane %v4391, 1
        %v4399 = vsel %vm576, %v4396, %v4398
        %4400 = vrot.lane.b32.xlu0 %v4397, 127
        %v4401 = vpop.permute.xlu0 %4400
        %4402 = vrot.lane.b32.xlu0 %v4399, 127
        %v4403 = vpop.permute.xlu0 %4402
        %v4406 = vadd.f32 %v4262, %v4401
        %v4407 = vadd.f32 %v4263, %v4403
        %s4408 = sld [smem:[#allocation8 + $0x67]]
        %v4409 = vstv %s4408
        %v4410 = vmul.f32 %v4409, %v3955
        %v4411 = vmul.f32 %v4409, %v3956
        %v4412 = vmul.f32 %v4409, %v3957
        %v4416 = vrot.slane %v4410, 1
        %v4417 = vrot.slane %v4411, 1
        %v4418 = vsel %vm576, %v4416, %v4417
        %v4419 = vrot.slane %v4412, 1
        %v4420 = vsel %vm576, %v4417, %v4419
        %4421 = vrot.lane.b32.xlu0 %v4418, 127
        %v4422 = vpop.permute.xlu0 %4421
        %4423 = vrot.lane.b32.xlu0 %v4420, 127
        %v4424 = vpop.permute.xlu0 %4423
        %v4427 = vadd.f32 %v4279, %v4422
        %v4428 = vadd.f32 %v4280, %v4424
        %s4429 = sld [smem:[#allocation8 + $0x8b]]
        %v4430 = vstv %s4429
        %v4431 = vmul.f32 %v4430, %v3955
        %v4432 = vmul.f32 %v4430, %v3956
        %v4433 = vmul.f32 %v4430, %v3957
        %v4437 = vrot.slane %v4431, 1
        %v4438 = vrot.slane %v4432, 1
        %v4439 = vsel %vm576, %v4437, %v4438
        %v4440 = vrot.slane %v4433, 1
        %v4441 = vsel %vm576, %v4438, %v4440
        %4442 = vrot.lane.b32.xlu0 %v4439, 127
        %v4443 = vpop.permute.xlu0 %4442
        %4444 = vrot.lane.b32.xlu0 %v4441, 127
        %v4445 = vpop.permute.xlu0 %4444
        %v4448 = vadd.f32 %v4296, %v4443
        %v4449 = vadd.f32 %v4297, %v4445
        %s4450 = sld [smem:[#allocation8 + $0xaf]]
        %v4451 = vstv %s4450
        %v4452 = vmul.f32 %v4451, %v3955
        %v4453 = vmul.f32 %v4451, %v3956
        %v4454 = vmul.f32 %v4451, %v3957
        %v4458 = vrot.slane %v4452, 1
        %v4459 = vrot.slane %v4453, 1
        %v4460 = vsel %vm576, %v4458, %v4459
        %v4461 = vrot.slane %v4454, 1
        %v4462 = vsel %vm576, %v4459, %v4461
        %4463 = vrot.lane.b32.xlu0 %v4460, 127
        %v4464 = vpop.permute.xlu0 %4463
        %4465 = vrot.lane.b32.xlu0 %v4462, 127
        %v4466 = vpop.permute.xlu0 %4465
        %v4469 = vadd.f32 %v4313, %v4464
        %v4470 = vadd.f32 %v4314, %v4466
        %s4471 = sld [smem:[#allocation8 + $0xd3]]
        %v4472 = vstv %s4471
        %v4473 = vmul.f32 %v4472, %v3955
        %v4474 = vmul.f32 %v4472, %v3956
        %v4475 = vmul.f32 %v4472, %v3957
        %v4479 = vrot.slane %v4473, 1
        %v4480 = vrot.slane %v4474, 1
        %v4481 = vsel %vm576, %v4479, %v4480
        %v4482 = vrot.slane %v4475, 1
        %v4483 = vsel %vm576, %v4480, %v4482
        %4484 = vrot.lane.b32.xlu0 %v4481, 127
        %v4485 = vpop.permute.xlu0 %4484
        %4486 = vrot.lane.b32.xlu0 %v4483, 127
        %v4487 = vpop.permute.xlu0 %4486
        %v4490 = vadd.f32 %v4330, %v4485
        %v4491 = vadd.f32 %v4331, %v4487
        %s4492 = sld [smem:[#allocation8 + $0xf7]]
        %v4493 = vstv %s4492
        %v4494 = vmul.f32 %v4493, %v3955
        %v4495 = vmul.f32 %v4493, %v3956
        %v4496 = vmul.f32 %v4493, %v3957
        %v4500 = vrot.slane %v4494, 1
        %v4501 = vrot.slane %v4495, 1
        %v4502 = vsel %vm576, %v4500, %v4501
        %v4503 = vrot.slane %v4496, 1
        %v4504 = vsel %vm576, %v4501, %v4503
        %4505 = vrot.lane.b32.xlu0 %v4502, 127
        %v4506 = vpop.permute.xlu0 %4505
        %4507 = vrot.lane.b32.xlu0 %v4504, 127
        %v4508 = vpop.permute.xlu0 %4507
        %v4511 = vadd.f32 %v4347, %v4506
        %v4512 = vadd.f32 %v4348, %v4508
        %s4513 = sld [smem:[#allocation8 + $0x11b]]
        %v4514 = vstv %s4513
        %v4515 = vmul.f32 %v4514, %v3955
        %v4516 = vmul.f32 %v4514, %v3956
        %v4517 = vmul.f32 %v4514, %v3957
        %v4521 = vrot.slane %v4515, 1
        %v4522 = vrot.slane %v4516, 1
        %v4523 = vsel %vm576, %v4521, %v4522
        %v4524 = vrot.slane %v4517, 1
        %v4525 = vsel %vm576, %v4522, %v4524
        %4526 = vrot.lane.b32.xlu0 %v4523, 127
        %v4527 = vpop.permute.xlu0 %4526
        %4528 = vrot.lane.b32.xlu0 %v4525, 127
        %v4529 = vpop.permute.xlu0 %4528
        %v4532 = vadd.f32 %v4364, %v4527
        %v4533 = vadd.f32 %v4365, %v4529
        %s4534 = sld [smem:[#allocation8 + $0x20]]
        %v4535 = vstv %s4534
        %v4536 = vmul.f32 %v4535, %v3955
        %v4537 = vmul.f32 %v4535, %v3956
        %v4538 = vmul.f32 %v4535, %v3957
        %v4542 = vrot.slane %v4536, 1
        %v4543 = vrot.slane %v4537, 1
        %v4544 = vsel %vm576, %v4542, %v4543
        %v4545 = vrot.slane %v4538, 1
        %v4546 = vsel %vm576, %v4543, %v4545
        %4547 = vrot.lane.b32.xlu0 %v4544, 126
        %v4548 = vpop.permute.xlu0 %4547
        %4549 = vrot.lane.b32.xlu0 %v4546, 126
        %v4550 = vpop.permute.xlu0 %4549
        %v4553 = vadd.f32 %v4385, %v4548
        %v4554 = vadd.f32 %v4386, %v4550
        %s4555 = sld [smem:[#allocation8 + $0x44]]
        %v4556 = vstv %s4555
        %v4557 = vmul.f32 %v4556, %v3955
        %v4558 = vmul.f32 %v4556, %v3956
        %v4559 = vmul.f32 %v4556, %v3957
        %v4563 = vrot.slane %v4557, 1
        %v4564 = vrot.slane %v4558, 1
        %v4565 = vsel %vm576, %v4563, %v4564
        %v4566 = vrot.slane %v4559, 1
        %v4567 = vsel %vm576, %v4564, %v4566
        %4568 = vrot.lane.b32.xlu0 %v4565, 126
        %v4569 = vpop.permute.xlu0 %4568
        %4570 = vrot.lane.b32.xlu0 %v4567, 126
        %v4571 = vpop.permute.xlu0 %4570
        %v4574 = vadd.f32 %v4406, %v4569
        %v4575 = vadd.f32 %v4407, %v4571
        %s4576 = sld [smem:[#allocation8 + $0x68]]
        %v4577 = vstv %s4576
        %v4578 = vmul.f32 %v4577, %v3955
        %v4579 = vmul.f32 %v4577, %v3956
        %v4580 = vmul.f32 %v4577, %v3957
        %v4584 = vrot.slane %v4578, 1
        %v4585 = vrot.slane %v4579, 1
        %v4586 = vsel %vm576, %v4584, %v4585
        %v4587 = vrot.slane %v4580, 1
        %v4588 = vsel %vm576, %v4585, %v4587
        %4589 = vrot.lane.b32.xlu0 %v4586, 126
        %v4590 = vpop.permute.xlu0 %4589
        %4591 = vrot.lane.b32.xlu0 %v4588, 126
        %v4592 = vpop.permute.xlu0 %4591
        %v4595 = vadd.f32 %v4427, %v4590
        %v4596 = vadd.f32 %v4428, %v4592
        %s4597 = sld [smem:[#allocation8 + $0x8c]]
        %v4598 = vstv %s4597
        %v4599 = vmul.f32 %v4598, %v3955
        %v4600 = vmul.f32 %v4598, %v3956
        %v4601 = vmul.f32 %v4598, %v3957
        %v4605 = vrot.slane %v4599, 1
        %v4606 = vrot.slane %v4600, 1
        %v4607 = vsel %vm576, %v4605, %v4606
        %v4608 = vrot.slane %v4601, 1
        %v4609 = vsel %vm576, %v4606, %v4608
        %4610 = vrot.lane.b32.xlu0 %v4607, 126
        %v4611 = vpop.permute.xlu0 %4610
        %4612 = vrot.lane.b32.xlu0 %v4609, 126
        %v4613 = vpop.permute.xlu0 %4612
        %v4616 = vadd.f32 %v4448, %v4611
        %v4617 = vadd.f32 %v4449, %v4613
        %s4618 = sld [smem:[#allocation8 + $0xb0]]
        %v4619 = vstv %s4618
        %v4620 = vmul.f32 %v4619, %v3955
        %v4621 = vmul.f32 %v4619, %v3956
        %v4622 = vmul.f32 %v4619, %v3957
        %v4626 = vrot.slane %v4620, 1
        %v4627 = vrot.slane %v4621, 1
        %v4628 = vsel %vm576, %v4626, %v4627
        %v4629 = vrot.slane %v4622, 1
        %v4630 = vsel %vm576, %v4627, %v4629
        %4631 = vrot.lane.b32.xlu0 %v4628, 126
        %v4632 = vpop.permute.xlu0 %4631
        %4633 = vrot.lane.b32.xlu0 %v4630, 126
        %v4634 = vpop.permute.xlu0 %4633
        %v4637 = vadd.f32 %v4469, %v4632
        %v4638 = vadd.f32 %v4470, %v4634
        %s4639 = sld [smem:[#allocation8 + $0xd4]]
        %v4640 = vstv %s4639
        %v4641 = vmul.f32 %v4640, %v3955
        %v4642 = vmul.f32 %v4640, %v3956
        %v4643 = vmul.f32 %v4640, %v3957
        %v4647 = vrot.slane %v4641, 1
        %v4648 = vrot.slane %v4642, 1
        %v4649 = vsel %vm576, %v4647, %v4648
        %v4650 = vrot.slane %v4643, 1
        %v4651 = vsel %vm576, %v4648, %v4650
        %4652 = vrot.lane.b32.xlu0 %v4649, 126
        %v4653 = vpop.permute.xlu0 %4652
        %4654 = vrot.lane.b32.xlu0 %v4651, 126
        %v4655 = vpop.permute.xlu0 %4654
        %v4658 = vadd.f32 %v4490, %v4653
        %v4659 = vadd.f32 %v4491, %v4655
        %s4660 = sld [smem:[#allocation8 + $0xf8]]
        %v4661 = vstv %s4660
        %v4662 = vmul.f32 %v4661, %v3955
        %v4663 = vmul.f32 %v4661, %v3956
        %v4664 = vmul.f32 %v4661, %v3957
        %v4668 = vrot.slane %v4662, 1
        %v4669 = vrot.slane %v4663, 1
        %v4670 = vsel %vm576, %v4668, %v4669
        %v4671 = vrot.slane %v4664, 1
        %v4672 = vsel %vm576, %v4669, %v4671
        %4673 = vrot.lane.b32.xlu0 %v4670, 126
        %v4674 = vpop.permute.xlu0 %4673
        %4675 = vrot.lane.b32.xlu0 %v4672, 126
        %v4676 = vpop.permute.xlu0 %4675
        %v4679 = vadd.f32 %v4511, %v4674
        %v4680 = vadd.f32 %v4512, %v4676
        %s4681 = sld [smem:[#allocation8 + $0x11c]]
        %v4682 = vstv %s4681
        %v4683 = vmul.f32 %v4682, %v3955
        %v4684 = vmul.f32 %v4682, %v3956
        %v4685 = vmul.f32 %v4682, %v3957
        %v4689 = vrot.slane %v4683, 1
        %v4690 = vrot.slane %v4684, 1
        %v4691 = vsel %vm576, %v4689, %v4690
        %v4692 = vrot.slane %v4685, 1
        %v4693 = vsel %vm576, %v4690, %v4692
        %4694 = vrot.lane.b32.xlu0 %v4691, 126
        %v4695 = vpop.permute.xlu0 %4694
        %4696 = vrot.lane.b32.xlu0 %v4693, 126
        %v4697 = vpop.permute.xlu0 %4696
        %v4700 = vadd.f32 %v4532, %v4695
        %v4701 = vadd.f32 %v4533, %v4697
        %s4702 = sld [smem:[#allocation8 + $0x21]]
        %v4703 = vstv %s4702
        %v4704 = vmul.f32 %v4703, %v3955
        %v4705 = vmul.f32 %v4703, %v3956
        %v4706 = vmul.f32 %v4703, %v3957
        %v4710 = vrot.slane %v4704, 2
        %v4711 = vrot.slane %v4705, 2
        %v4712 = vsel %vm1049, %v4710, %v4711
        %v4713 = vrot.slane %v4706, 2
        %v4714 = vsel %vm1049, %v4711, %v4713
        %v4717 = vadd.f32 %v4553, %v4712
        %v4718 = vadd.f32 %v4554, %v4714
        %s4719 = sld [smem:[#allocation8 + $0x45]]
        %v4720 = vstv %s4719
        %v4721 = vmul.f32 %v4720, %v3955
        %v4722 = vmul.f32 %v4720, %v3956
        %v4723 = vmul.f32 %v4720, %v3957
        %v4727 = vrot.slane %v4721, 2
        %v4728 = vrot.slane %v4722, 2
        %v4729 = vsel %vm1049, %v4727, %v4728
        %v4730 = vrot.slane %v4723, 2
        %v4731 = vsel %vm1049, %v4728, %v4730
        %v4734 = vadd.f32 %v4574, %v4729
        %v4735 = vadd.f32 %v4575, %v4731
        %s4736 = sld [smem:[#allocation8 + $0x69]]
        %v4737 = vstv %s4736
        %v4738 = vmul.f32 %v4737, %v3955
        %v4739 = vmul.f32 %v4737, %v3956
        %v4740 = vmul.f32 %v4737, %v3957
        %v4744 = vrot.slane %v4738, 2
        %v4745 = vrot.slane %v4739, 2
        %v4746 = vsel %vm1049, %v4744, %v4745
        %v4747 = vrot.slane %v4740, 2
        %v4748 = vsel %vm1049, %v4745, %v4747
        %v4751 = vadd.f32 %v4595, %v4746
        %v4752 = vadd.f32 %v4596, %v4748
        %s4753 = sld [smem:[#allocation8 + $0x8d]]
        %v4754 = vstv %s4753
        %v4755 = vmul.f32 %v4754, %v3955
        %v4756 = vmul.f32 %v4754, %v3956
        %v4757 = vmul.f32 %v4754, %v3957
        %v4761 = vrot.slane %v4755, 2
        %v4762 = vrot.slane %v4756, 2
        %v4763 = vsel %vm1049, %v4761, %v4762
        %v4764 = vrot.slane %v4757, 2
        %v4765 = vsel %vm1049, %v4762, %v4764
        %v4768 = vadd.f32 %v4616, %v4763
        %v4769 = vadd.f32 %v4617, %v4765
        %s4770 = sld [smem:[#allocation8 + $0xb1]]
        %v4771 = vstv %s4770
        %v4772 = vmul.f32 %v4771, %v3955
        %v4773 = vmul.f32 %v4771, %v3956
        %v4774 = vmul.f32 %v4771, %v3957
        %v4778 = vrot.slane %v4772, 2
        %v4779 = vrot.slane %v4773, 2
        %v4780 = vsel %vm1049, %v4778, %v4779
        %v4781 = vrot.slane %v4774, 2
        %v4782 = vsel %vm1049, %v4779, %v4781
        %v4785 = vadd.f32 %v4637, %v4780
        %v4786 = vadd.f32 %v4638, %v4782
        %s4787 = sld [smem:[#allocation8 + $0xd5]]
        %v4788 = vstv %s4787
        %v4789 = vmul.f32 %v4788, %v3955
        %v4790 = vmul.f32 %v4788, %v3956
        %v4791 = vmul.f32 %v4788, %v3957
        %v4795 = vrot.slane %v4789, 2
        %v4796 = vrot.slane %v4790, 2
        %v4797 = vsel %vm1049, %v4795, %v4796
        %v4798 = vrot.slane %v4791, 2
        %v4799 = vsel %vm1049, %v4796, %v4798
        %v4802 = vadd.f32 %v4658, %v4797
        %v4803 = vadd.f32 %v4659, %v4799
        %s4804 = sld [smem:[#allocation8 + $0xf9]]
        %v4805 = vstv %s4804
        %v4806 = vmul.f32 %v4805, %v3955
        %v4807 = vmul.f32 %v4805, %v3956
        %v4808 = vmul.f32 %v4805, %v3957
        %v4812 = vrot.slane %v4806, 2
        %v4813 = vrot.slane %v4807, 2
        %v4814 = vsel %vm1049, %v4812, %v4813
        %v4815 = vrot.slane %v4808, 2
        %v4816 = vsel %vm1049, %v4813, %v4815
        %v4819 = vadd.f32 %v4679, %v4814
        %v4820 = vadd.f32 %v4680, %v4816
        %s4821 = sld [smem:[#allocation8 + $0x11d]]
        %v4822 = vstv %s4821
        %v4823 = vmul.f32 %v4822, %v3955
        %v4824 = vmul.f32 %v4822, %v3956
        %v4825 = vmul.f32 %v4822, %v3957
        %v4829 = vrot.slane %v4823, 2
        %v4830 = vrot.slane %v4824, 2
        %v4831 = vsel %vm1049, %v4829, %v4830
        %v4832 = vrot.slane %v4825, 2
        %v4833 = vsel %vm1049, %v4830, %v4832
        %v4836 = vadd.f32 %v4700, %v4831
        %v4837 = vadd.f32 %v4701, %v4833
        %s4838 = sld [smem:[#allocation8 + $0x22]]
        %v4839 = vstv %s4838
        %v4840 = vmul.f32 %v4839, %v3955
        %v4841 = vmul.f32 %v4839, %v3956
        %v4842 = vmul.f32 %v4839, %v3957
        %v4846 = vrot.slane %v4840, 2
        %v4847 = vrot.slane %v4841, 2
        %v4848 = vsel %vm1049, %v4846, %v4847
        %v4849 = vrot.slane %v4842, 2
        %v4850 = vsel %vm1049, %v4847, %v4849
        %4851 = vrot.lane.b32.xlu0 %v4848, 127
        %v4852 = vpop.permute.xlu0 %4851
        %4853 = vrot.lane.b32.xlu0 %v4850, 127
        %v4854 = vpop.permute.xlu0 %4853
        %v4857 = vadd.f32 %v4717, %v4852
        %v4858 = vadd.f32 %v4718, %v4854
        %s4859 = sld [smem:[#allocation8 + $0x46]]
        %v4860 = vstv %s4859
        %v4861 = vmul.f32 %v4860, %v3955
        %v4862 = vmul.f32 %v4860, %v3956
        %v4863 = vmul.f32 %v4860, %v3957
        %v4867 = vrot.slane %v4861, 2
        %v4868 = vrot.slane %v4862, 2
        %v4869 = vsel %vm1049, %v4867, %v4868
        %v4870 = vrot.slane %v4863, 2
        %v4871 = vsel %vm1049, %v4868, %v4870
        %4872 = vrot.lane.b32.xlu0 %v4869, 127
        %v4873 = vpop.permute.xlu0 %4872
        %4874 = vrot.lane.b32.xlu0 %v4871, 127
        %v4875 = vpop.permute.xlu0 %4874
        %v4878 = vadd.f32 %v4734, %v4873
        %v4879 = vadd.f32 %v4735, %v4875
        %s4880 = sld [smem:[#allocation8 + $0x6a]]
        %v4881 = vstv %s4880
        %v4882 = vmul.f32 %v4881, %v3955
        %v4883 = vmul.f32 %v4881, %v3956
        %v4884 = vmul.f32 %v4881, %v3957
        %v4888 = vrot.slane %v4882, 2
        %v4889 = vrot.slane %v4883, 2
        %v4890 = vsel %vm1049, %v4888, %v4889
        %v4891 = vrot.slane %v4884, 2
        %v4892 = vsel %vm1049, %v4889, %v4891
        %4893 = vrot.lane.b32.xlu0 %v4890, 127
        %v4894 = vpop.permute.xlu0 %4893
        %4895 = vrot.lane.b32.xlu0 %v4892, 127
        %v4896 = vpop.permute.xlu0 %4895
        %v4899 = vadd.f32 %v4751, %v4894
        %v4900 = vadd.f32 %v4752, %v4896
        %s4901 = sld [smem:[#allocation8 + $0x8e]]
        %v4902 = vstv %s4901
        %v4903 = vmul.f32 %v4902, %v3955
        %v4904 = vmul.f32 %v4902, %v3956
        %v4905 = vmul.f32 %v4902, %v3957
        %v4909 = vrot.slane %v4903, 2
        %v4910 = vrot.slane %v4904, 2
        %v4911 = vsel %vm1049, %v4909, %v4910
        %v4912 = vrot.slane %v4905, 2
        %v4913 = vsel %vm1049, %v4910, %v4912
        %4914 = vrot.lane.b32.xlu0 %v4911, 127
        %v4915 = vpop.permute.xlu0 %4914
        %4916 = vrot.lane.b32.xlu0 %v4913, 127
        %v4917 = vpop.permute.xlu0 %4916
        %v4920 = vadd.f32 %v4768, %v4915
        %v4921 = vadd.f32 %v4769, %v4917
        %s4922 = sld [smem:[#allocation8 + $0xb2]]
        %v4923 = vstv %s4922
        %v4924 = vmul.f32 %v4923, %v3955
        %v4925 = vmul.f32 %v4923, %v3956
        %v4926 = vmul.f32 %v4923, %v3957
        %v4930 = vrot.slane %v4924, 2
        %v4931 = vrot.slane %v4925, 2
        %v4932 = vsel %vm1049, %v4930, %v4931
        %v4933 = vrot.slane %v4926, 2
        %v4934 = vsel %vm1049, %v4931, %v4933
        %4935 = vrot.lane.b32.xlu0 %v4932, 127
        %v4936 = vpop.permute.xlu0 %4935
        %4937 = vrot.lane.b32.xlu0 %v4934, 127
        %v4938 = vpop.permute.xlu0 %4937
        %v4941 = vadd.f32 %v4785, %v4936
        %v4942 = vadd.f32 %v4786, %v4938
        %s4943 = sld [smem:[#allocation8 + $0xd6]]
        %v4944 = vstv %s4943
        %v4945 = vmul.f32 %v4944, %v3955
        %v4946 = vmul.f32 %v4944, %v3956
        %v4947 = vmul.f32 %v4944, %v3957
        %v4951 = vrot.slane %v4945, 2
        %v4952 = vrot.slane %v4946, 2
        %v4953 = vsel %vm1049, %v4951, %v4952
        %v4954 = vrot.slane %v4947, 2
        %v4955 = vsel %vm1049, %v4952, %v4954
        %4956 = vrot.lane.b32.xlu0 %v4953, 127
        %v4957 = vpop.permute.xlu0 %4956
        %4958 = vrot.lane.b32.xlu0 %v4955, 127
        %v4959 = vpop.permute.xlu0 %4958
        %v4962 = vadd.f32 %v4802, %v4957
        %v4963 = vadd.f32 %v4803, %v4959
        %s4964 = sld [smem:[#allocation8 + $0xfa]]
        %v4965 = vstv %s4964
        %v4966 = vmul.f32 %v4965, %v3955
        %v4967 = vmul.f32 %v4965, %v3956
        %v4968 = vmul.f32 %v4965, %v3957
        %v4972 = vrot.slane %v4966, 2
        %v4973 = vrot.slane %v4967, 2
        %v4974 = vsel %vm1049, %v4972, %v4973
        %v4975 = vrot.slane %v4968, 2
        %v4976 = vsel %vm1049, %v4973, %v4975
        %4977 = vrot.lane.b32.xlu0 %v4974, 127
        %v4978 = vpop.permute.xlu0 %4977
        %4979 = vrot.lane.b32.xlu0 %v4976, 127
        %v4980 = vpop.permute.xlu0 %4979
        %v4983 = vadd.f32 %v4819, %v4978
        %v4984 = vadd.f32 %v4820, %v4980
        %s4985 = sld [smem:[#allocation8 + $0x11e]]
        %v4986 = vstv %s4985
        %v4987 = vmul.f32 %v4986, %v3955
        %v4988 = vmul.f32 %v4986, %v3956
        %v4989 = vmul.f32 %v4986, %v3957
        %v4993 = vrot.slane %v4987, 2
        %v4994 = vrot.slane %v4988, 2
        %v4995 = vsel %vm1049, %v4993, %v4994
        %v4996 = vrot.slane %v4989, 2
        %v4997 = vsel %vm1049, %v4994, %v4996
        %4998 = vrot.lane.b32.xlu0 %v4995, 127
        %v4999 = vpop.permute.xlu0 %4998
        %5000 = vrot.lane.b32.xlu0 %v4997, 127
        %v5001 = vpop.permute.xlu0 %5000
        %v5004 = vadd.f32 %v4836, %v4999
        %v5005 = vadd.f32 %v4837, %v5001
        %s5006 = sld [smem:[#allocation8 + $0x23]]
        %v5007 = vstv %s5006
        %v5008 = vmul.f32 %v5007, %v3955
        %v5009 = vmul.f32 %v5007, %v3956
        %v5010 = vmul.f32 %v5007, %v3957
        %v5014 = vrot.slane %v5008, 2
        %v5015 = vrot.slane %v5009, 2
        %v5016 = vsel %vm1049, %v5014, %v5015
        %v5017 = vrot.slane %v5010, 2
        %v5018 = vsel %vm1049, %v5015, %v5017
        %5019 = vrot.lane.b32.xlu0 %v5016, 126
        %v5020 = vpop.permute.xlu0 %5019
        %5021 = vrot.lane.b32.xlu0 %v5018, 126
        %v5022 = vpop.permute.xlu0 %5021
        %v5025 = vadd.f32 %v4857, %v5020
        %v5026 = vadd.f32 %v4858, %v5022
        %s5027 = sld [smem:[#allocation8 + $0x47]]
        %v5028 = vstv %s5027
        %v5029 = vmul.f32 %v5028, %v3955
        %v5030 = vmul.f32 %v5028, %v3956
        %v5031 = vmul.f32 %v5028, %v3957
        %v5035 = vrot.slane %v5029, 2
        %v5036 = vrot.slane %v5030, 2
        %v5037 = vsel %vm1049, %v5035, %v5036
        %v5038 = vrot.slane %v5031, 2
        %v5039 = vsel %vm1049, %v5036, %v5038
        %5040 = vrot.lane.b32.xlu0 %v5037, 126
        %v5041 = vpop.permute.xlu0 %5040
        %5042 = vrot.lane.b32.xlu0 %v5039, 126
        %v5043 = vpop.permute.xlu0 %5042
        %v5046 = vadd.f32 %v4878, %v5041
        %v5047 = vadd.f32 %v4879, %v5043
        %s5048 = sld [smem:[#allocation8 + $0x6b]]
        %v5049 = vstv %s5048
        %v5050 = vmul.f32 %v5049, %v3955
        %v5051 = vmul.f32 %v5049, %v3956
        %v5052 = vmul.f32 %v5049, %v3957
        %v5056 = vrot.slane %v5050, 2
        %v5057 = vrot.slane %v5051, 2
        %v5058 = vsel %vm1049, %v5056, %v5057
        %v5059 = vrot.slane %v5052, 2
        %v5060 = vsel %vm1049, %v5057, %v5059
        %5061 = vrot.lane.b32.xlu0 %v5058, 126
        %v5062 = vpop.permute.xlu0 %5061
        %5063 = vrot.lane.b32.xlu0 %v5060, 126
        %v5064 = vpop.permute.xlu0 %5063
        %v5067 = vadd.f32 %v4899, %v5062
        %v5068 = vadd.f32 %v4900, %v5064
        %s5069 = sld [smem:[#allocation8 + $0x8f]]
        %v5070 = vstv %s5069
        %v5071 = vmul.f32 %v5070, %v3955
        %v5072 = vmul.f32 %v5070, %v3956
        %v5073 = vmul.f32 %v5070, %v3957
        %v5077 = vrot.slane %v5071, 2
        %v5078 = vrot.slane %v5072, 2
        %v5079 = vsel %vm1049, %v5077, %v5078
        %v5080 = vrot.slane %v5073, 2
        %v5081 = vsel %vm1049, %v5078, %v5080
        %5082 = vrot.lane.b32.xlu0 %v5079, 126
        %v5083 = vpop.permute.xlu0 %5082
        %5084 = vrot.lane.b32.xlu0 %v5081, 126
        %v5085 = vpop.permute.xlu0 %5084
        %v5088 = vadd.f32 %v4920, %v5083
        %v5089 = vadd.f32 %v4921, %v5085
        %s5090 = sld [smem:[#allocation8 + $0xb3]]
        %v5091 = vstv %s5090
        %v5092 = vmul.f32 %v5091, %v3955
        %v5093 = vmul.f32 %v5091, %v3956
        %v5094 = vmul.f32 %v5091, %v3957
        %v5098 = vrot.slane %v5092, 2
        %v5099 = vrot.slane %v5093, 2
        %v5100 = vsel %vm1049, %v5098, %v5099
        %v5101 = vrot.slane %v5094, 2
        %v5102 = vsel %vm1049, %v5099, %v5101
        %5103 = vrot.lane.b32.xlu0 %v5100, 126
        %v5104 = vpop.permute.xlu0 %5103
        %5105 = vrot.lane.b32.xlu0 %v5102, 126
        %v5106 = vpop.permute.xlu0 %5105
        %v5109 = vadd.f32 %v4941, %v5104
        %v5110 = vadd.f32 %v4942, %v5106
        %s5111 = sld [smem:[#allocation8 + $0xd7]]
        %v5112 = vstv %s5111
        %v5113 = vmul.f32 %v5112, %v3955
        %v5114 = vmul.f32 %v5112, %v3956
        %v5115 = vmul.f32 %v5112, %v3957
        %v5119 = vrot.slane %v5113, 2
        %v5120 = vrot.slane %v5114, 2
        %v5121 = vsel %vm1049, %v5119, %v5120
        %v5122 = vrot.slane %v5115, 2
        %v5123 = vsel %vm1049, %v5120, %v5122
        %5124 = vrot.lane.b32.xlu0 %v5121, 126
        %v5125 = vpop.permute.xlu0 %5124
        %5126 = vrot.lane.b32.xlu0 %v5123, 126
        %v5127 = vpop.permute.xlu0 %5126
        %v5130 = vadd.f32 %v4962, %v5125
        %v5131 = vadd.f32 %v4963, %v5127
        %s5132 = sld [smem:[#allocation8 + $0xfb]]
        %v5133 = vstv %s5132
        %v5134 = vmul.f32 %v5133, %v3955
        %v5135 = vmul.f32 %v5133, %v3956
        %v5136 = vmul.f32 %v5133, %v3957
        %v5140 = vrot.slane %v5134, 2
        %v5141 = vrot.slane %v5135, 2
        %v5142 = vsel %vm1049, %v5140, %v5141
        %v5143 = vrot.slane %v5136, 2
        %v5144 = vsel %vm1049, %v5141, %v5143
        %5145 = vrot.lane.b32.xlu0 %v5142, 126
        %v5146 = vpop.permute.xlu0 %5145
        %5147 = vrot.lane.b32.xlu0 %v5144, 126
        %v5148 = vpop.permute.xlu0 %5147
        %v5151 = vadd.f32 %v4983, %v5146
        %v5152 = vadd.f32 %v4984, %v5148
        %s5153 = sld [smem:[#allocation8 + $0x11f]]
        %v5154 = vstv %s5153
        %v5155 = vmul.f32 %v5154, %v3955
        %v5156 = vmul.f32 %v5154, %v3956
        %v5157 = vmul.f32 %v5154, %v3957
        %v5161 = vrot.slane %v5155, 2
        %v5162 = vrot.slane %v5156, 2
        %v5163 = vsel %vm1049, %v5161, %v5162
        %v5164 = vrot.slane %v5157, 2
        %v5165 = vsel %vm1049, %v5162, %v5164
        %5166 = vrot.lane.b32.xlu0 %v5163, 126
        %v5167 = vpop.permute.xlu0 %5166
        %5168 = vrot.lane.b32.xlu0 %v5165, 126
        %v5169 = vpop.permute.xlu0 %5168
        %v5172 = vadd.f32 %v5004, %v5167
        %v5173 = vadd.f32 %v5005, %v5169
        %vm5174 = vcmask 130048
        %5175 = vst.msk [vmem:[%s213] sm:$0xff] %vm5174, %v5025
        %5176 = vst.msk [vmem:[%s213 + $0x8] sm:$0xff] %vm5174, %v5026
        %s5177 = scalar_lea.vmem %s213, 16 [#allocation10]
        %5178 = vst.msk [vmem:[%s5177] sm:$0xff] %vm5174, %v5046
        %5179 = vst.msk [vmem:[%s5177 + $0x8] sm:$0xff] %vm5174, %v5047
        %s5180 = scalar_lea.vmem %s213, 32 [#allocation10]
        %5181 = vst.msk [vmem:[%s5180] sm:$0xff] %vm5174, %v5067
        %5182 = vst.msk [vmem:[%s5180 + $0x8] sm:$0xff] %vm5174, %v5068
        %s5183 = scalar_lea.vmem %s213, 48 [#allocation10]
        %5184 = vst.msk [vmem:[%s5183] sm:$0xff] %vm5174, %v5088
        %5185 = vst.msk [vmem:[%s5183 + $0x8] sm:$0xff] %vm5174, %v5089
        %s5186 = scalar_lea.vmem %s213, 64 [#allocation10]
        %5187 = vst.msk [vmem:[%s5186] sm:$0xff] %vm5174, %v5109
        %5188 = vst.msk [vmem:[%s5186 + $0x8] sm:$0xff] %vm5174, %v5110
        %s5189 = scalar_lea.vmem %s213, 80 [#allocation10]
        %5190 = vst.msk [vmem:[%s5189] sm:$0xff] %vm5174, %v5130
        %5191 = vst.msk [vmem:[%s5189 + $0x8] sm:$0xff] %vm5174, %v5131
        %s5192 = scalar_lea.vmem %s213, 96 [#allocation10]
        %5193 = vst.msk [vmem:[%s5192] sm:$0xff] %vm5174, %v5151
        %5194 = vst.msk [vmem:[%s5192 + $0x8] sm:$0xff] %vm5174, %v5152
        %s5195 = scalar_lea.vmem %s213, 112 [#allocation10]
        %5196 = vst.msk [vmem:[%s5195] sm:$0xff] %vm5174, %v5172
        %5197 = vst.msk [vmem:[%s5195 + $0x8] sm:$0xff] %vm5174, %v5173
        %s5198 = sand.u32 %s98, 1
        %s5199 = scalar_lea.sflag [#allocation5], %s5198
        %s5200 = sand.u32 %s98, 1
        %s5201 = smul.addr %s5200, 128
        %s5202 = scalar_lea.vmem [#allocation10], %s5201
        // Predicated region
        $region45: #{tpu_custom_call.1} parent=31 // pred_check
          %p5203 = pneg %p108
        $region46: #{tpu_custom_call.1} parent=31 // pred_check_branch
          %5205 = sbr.rel (%p5203) target = $region48
        $region47: #{tpu_custom_call.1} parent=31 // pred_region
          %s5207 = ssub.s32 2048, 2048
          %5208 = vsyncadd %s5199, %s5207
          %s5209 = smul.addr %s22, 16
          %s5210 = smul.addr %s5209, 128
          %s5211 = scalar_lea.hbm %s3, %s5210
          %s5212 = sshll.u32 %s5202, 4
          %s5213 = int_to_ptr.vmem [resolvable:$true] %s5212
          %5218 = dma.vmem_to_hbm [thread:$0]  %s5213, 2048, %s5211, %s5199, 128, 128, 8
        $region48: #{tpu_custom_call.1} parent=31 // pred_fallthru
          _
      $region32: #{tpu_custom_call.1} parent=5 // pred_fallthru
        _
      %p5219 = scmp.le.s32.totalorder 2, %s17
      // Predicated region
      $region49: #{tpu_custom_call.1} parent=5 // pred_check
        %p5220 = pneg %p5219
      $region50: #{tpu_custom_call.1} parent=5 // pred_check_branch
        %5222 = sbr.rel (%p5220) target = $region52
      $region51: #{tpu_custom_call.1} parent=5 // pred_region
        %s5223 = ssub.s32 %s17, 2
        // Predicated region
        $region53: #{tpu_custom_call.1} parent=51 // pred_check
          %p5224 = pneg %p114
        $region54: #{tpu_custom_call.1} parent=51 // pred_check_branch
          %5226 = sbr.rel (%p5224) target = $region56
        $region55: #{tpu_custom_call.1} parent=51 // pred_region
          %s5227 = sand.u32 %s99, 1
          %s5228 = scalar_lea.sflag [#allocation5], %s5227
          %s5229 = sand.u32 %s99, 1
          %s5230 = smul.addr %s5229, 128
          %s5231 = scalar_lea.vmem [#allocation10], %s5230
          %5232 = dma.done %s5228, 2048
        $region56: #{tpu_custom_call.1} parent=51 // pred_fallthru
          _
      $region52: #{tpu_custom_call.1} parent=5 // pred_fallthru
        _
    $region6: #{tpu_custom_call.1} parent=1 // loop_footer
      %s21 = sadd.s32 1, %s17
    $region7: #{tpu_custom_call.1} parent=1 // loop_footer_branch
      %16 = sbr.rel target = $region3
    $region8: #{tpu_custom_call.1} parent=1 // loop_exit
      _
    %5233 = vsyncpa [#allocation4], 1
    %s5234 = scalar_lea.sflag [#allocation4], 1
    %5235 = vsyncpa %s5234, 1
    %5236 = vsyncpa [#allocation5], 1
    %s5237 = scalar_lea.sflag [#allocation5], 1
    %5238 = vsyncpa %s5237, 1
    %5239 = vsyncpa [#allocation6], 1
    %s5240 = scalar_lea.sflag [#allocation6], 1
    %5241 = vsyncpa %s5240, 1
    %5242 = vsyncpa [#allocation7], 1
    %s5243 = scalar_lea.sflag [#allocation7], 1
    %5244 = vsyncpa %s5243, 1

</llo_original>
